<compile_context>
chip_gen: v5e
topology: v5e:2x2
jax: 0.10.0
libtpu: 0.0.40
codegen_flags: <defaults>
</compile_context>

<pallas_src>
import jax
import jax.numpy as jnp
from jax import lax
from jax.experimental import pallas as pl
from jax.experimental.pallas import tpu as pltpu

EPS = 1e-6


def _vmem_limit_bytes():
    """Scoped-VMEM limit: ~3/4 of the physical capacity, capped at 96 MiB.
    => ~96 MiB on v5e/v6e (128 MiB VMEM), ~48 MiB on v7x (64 MiB VMEM)."""
    cap = 64 * 1024 * 1024
    try:
        cap = int(pltpu.get_tpu_info().vmem_capacity_bytes)
    except Exception:
        pass
    return int(min(cap * 3 // 4, 96 * 1024 * 1024))


def _pick_tile_rows(nh, w, c, vmem_limit):
    """Rows of the (N*H) axis per grid step, sized so double-buffered input/output blocks,
    the kernel's f32 temporaries and the resident weight all fit under the VMEM limit."""
    dt = 4                                  # budget in f32 bytes (conservative for bf16 too)
    in_row = dt * w * c                     # input block bytes per NH-row
    out_row = 2 * dt * w * c                # output block bytes per NH-row (2*W*2*C2 = 2*W*C)
    tmp_row = 5 * dt * w * c                # y (2WC f32) + per-half yc/sq/z (~3WC f32)
    bytes_per_row = 2 * in_row + 2 * out_row + tmp_row      # x2 = double buffering
    weight_bytes = 2 * (dt * c * 2 * c)                     # (C, 2C) folded weight, 2 bufs
    budget = max(vmem_limit - weight_bytes - (4 << 20), 4 << 20)
    tile = min(nh, max(budget // max(bytes_per_row, 1), 8), 4096)
    if tile < nh:
        tile = max(8, (tile // 8) * 8)      # keep tile_r*W a multiple of 8 (sublane tiling)
    # NOTE: no "must divide NH evenly" shrink loop -- a ragged last block is masked by
    # Pallas (correct), and big tiles are far cheaper than collapsing to 8-row tiles.
    return int(tile)


def _make_kernel(tile_r, w, c2):
    rows = tile_r * w
    inv_c2 = 1.0 / float(c2)

    def kernel(x_ref, w_ref, g_ref, b_ref, o_ref):
        # x_ref: (tile_r*W, C) input pixels (f32 or bf16), streamed per grid step
        # w_ref: (C, 4*C2) folded weight, columns ordered (kh, kw, oc)   -- VMEM resident
        # g_ref/b_ref: (1, 2*C2) LayerNorm affine, duplicated per kw     -- VMEM resident
        # o_ref: (tile_r, 2, W, 2*C2) output block; axes (row, kh, w, (kw, oc))
        #
        # Default MXU precision for f32 operands matched the f32 torch module to <1e-4 at
        # these shapes; accumulation is always f32 via preferred_element_type.
        y = jnp.dot(x_ref[...], w_ref[...],
                    preferred_element_type=jnp.float32)       # (rows, 4*C2)

        # Per-output-pixel LayerNorm: within one kh-half, columns [0,C2) are the kw=0 pixel
        # and [C2,2*C2) the kw=1 pixel.  Mask computed once and reused for both kh halves.
        left = lax.broadcasted_iota(jnp.int32, (rows, 2 * c2), 1) < c2

        for kh in range(2):                                   # static unroll
            yk = y[:, kh * 2 * c2:(kh + 1) * 2 * c2]          # (rows, 2*C2) static slice
            mu_l = jnp.sum(yk[:, :c2], axis=-1, keepdims=True) * inv_c2
            mu_r = jnp.sum(yk[:, c2:], axis=-1, keepdims=True) * inv_c2
            yc = yk - jnp.where(left, mu_l, mu_r)             # centered; reused below
            sq = yc * yc
            var_l = jnp.sum(sq[:, :c2], axis=-1, keepdims=True) * inv_c2
            var_r = jnp.sum(sq[:, c2:], axis=-1, keepdims=True) * inv_c2
            var = jnp.where(left, var_l, var_r)
            zk = yc * lax.rsqrt(var + EPS) * g_ref[...] + b_ref[...]
            o_ref[:, kh:kh + 1, :, :] = zk.reshape(tile_r, 1, w, 2 * c2).astype(o_ref.dtype)

    return kernel


def upsample_layer(x, conv_w, gamma, beta, *, tile_rows=None, compute_dtype=None,
                   out_dtype=None):
    """x: (N, H, W, C) channels_last.  conv_w: (C, C//2, 2, 2) torch ConvTranspose2d weight.
    gamma/beta: (C//2,) LayerNorm affine.  Returns (N, 2H, 2W, C//2) channels_last.
    compute_dtype=jnp.bfloat16 halves HBM read traffic (f32 accumulation + f32 LN kept)."""
    N, H, W, C = x.shape
    assert C % 2 == 0, "UpsampleLayer needs an even channel count"
    C2 = C // 2
    NH = N * H

    cdt = jnp.dtype(compute_dtype) if compute_dtype is not None else x.dtype
    odt = jnp.dtype(out_dtype) if out_dtype is not None else x.dtype

    # torch weight (ic, oc, kh, kw) -> (ic, kh, kw, oc) -> (C, 4*C2); columns = (kh, kw, oc).
    w_fold = jnp.transpose(jnp.asarray(conv_w), (0, 2, 3, 1)).reshape(C, 4 * C2).astype(cdt)
    x2 = x.reshape(NH * W, C).astype(cdt)
    g2 = jnp.tile(jnp.asarray(gamma, jnp.float32), 2).reshape(1, 2 * C2)
    b2 = jnp.tile(jnp.asarray(beta, jnp.float32), 2).reshape(1, 2 * C2)

    vmem_limit = _vmem_limit_bytes()
    tile_r = tile_rows if tile_rows is not None else _pick_tile_rows(NH, W, C, vmem_limit)
    grid = (pl.cdiv(NH, tile_r),)           # 1-D grid over row tiles of N*H (kh folded)

    kernel = _make_kernel(tile_r, W, C2)

    out = pl.pallas_call(
        kernel,
        out_shape=jax.ShapeDtypeStruct((NH, 2, W, 2 * C2), odt),
        grid=grid,
        in_specs=[
            pl.BlockSpec((tile_r * W, C), lambda i: (i, 0)),   # streamed input rows
            pl.BlockSpec((C, 4 * C2), lambda i: (0, 0)),       # resident folded weight
            pl.BlockSpec((1, 2 * C2), lambda i: (0, 0)),       # resident gamma
            pl.BlockSpec((1, 2 * C2), lambda i: (0, 0)),       # resident beta
        ],
        out_specs=pl.BlockSpec((tile_r, 2, W, 2 * C2), lambda i: (i, 0, 0, 0)),
        compiler_params=pltpu.CompilerParams(
            dimension_semantics=("parallel",),
            vmem_limit_bytes=vmem_limit,
        ),
    )(x2, w_fold, g2, b2)

    # (NH, 2, W, 2*C2) row-major is (n, h, kh, w, kw, oc) -> pure reshape, no transpose.
    # NOTE: with a ragged last row tile, the padded rows compute on stale VMEM but their
    # writeback is masked by Pallas -- wasted work only, outputs stay correct.
    return out.reshape(N, 2 * H, 2 * W, C2)


def _reference(x, conv_w, gamma, beta):
    """Pure-JAX reference: ConvTranspose2d(k=2, s=2, no bias) + LayerNorm over channels."""
    N, H, W, C = x.shape
    C2 = C // 2
    # out[n, 2h+kh, 2w+kw, oc] = sum_ic x[n,h,w,ic] * W[ic,oc,kh,kw]
    y = jnp.einsum('nhwi,iojk->nhjwko', x, conv_w,
                   precision=jax.lax.Precision.HIGHEST)        # (N, H, 2, W, 2, C2)
    y = y.reshape(N, 2 * H, 2 * W, C2)
    mu = y.mean(-1, keepdims=True)
    var = ((y - mu) ** 2).mean(-1, keepdims=True)
    return (y - mu) * jax.lax.rsqrt(var + EPS) * gamma + beta


if __name__ == "__main__":
    key = jax.random.PRNGKey(0)
    k_x, k_w, k_x2, k_w2, k_x3, k_w3 = jax.random.split(key, 6)

    # --- Config 1: channels=4, spatial=16, batch=2 (default LN affine, auto tile) ---
    N, H, W, C = 2, 16, 16, 4
    x = jax.random.normal(k_x, (N, H, W, C), dtype=jnp.float32)
    conv_w = jax.random.normal(k_w, (C, C // 2, 2, 2), dtype=jnp.float32) * 0.1
    gamma = jnp.ones((C // 2,), dtype=jnp.float32)
    beta = jnp.zeros((C // 2,), dtype=jnp.float32)

    out = jax.block_until_ready(upsample_layer(x, conv_w, gamma, beta))
    ref = _reference(x, conv_w, gamma, beta)
    assert out.shape == (N, 2 * H, 2 * W, C // 2), out.shape
    assert jnp.allclose(out, ref, atol=1e-4, rtol=1e-4), float(jnp.max(jnp.abs(out - ref)))

    # --- Config 2: more channels + explicit small row tile -> multi-step grid ---
    N2, H2, W2, Cb = 2, 16, 8, 16
    xb = jax.random.normal(k_x2, (N2, H2, W2, Cb), dtype=jnp.float32)
    conv_wb = jax.random.normal(k_w2, (Cb, Cb // 2, 2, 2), dtype=jnp.float32) * 0.1
    gammab = jnp.linspace(0.5, 1.5, Cb // 2, dtype=jnp.float32)
    betab = jnp.linspace(-0.1, 0.1, Cb // 2, dtype=jnp.float32)

    outb = jax.block_until_ready(upsample_layer(xb, conv_wb, gammab, betab, tile_rows=8))
    refb = _reference(xb, conv_wb, gammab, betab)
    assert outb.shape == (N2, 2 * H2, 2 * W2, Cb // 2), outb.shape
    assert jnp.allclose(outb, refb, atol=1e-4, rtol=1e-4), float(jnp.max(jnp.abs(outb - refb)))

    # --- Config 3: ragged grid (N*H = 12 not divisible by tile_rows=8) ---
    N3, H3, W3, Cc = 1, 12, 16, 8
    xc = jax.random.normal(k_x3, (N3, H3, W3, Cc), dtype=jnp.float32)
    conv_wc = jax.random.normal(k_w3, (Cc, Cc // 2, 2, 2), dtype=jnp.float32) * 0.1
    gammac = jnp.ones((Cc // 2,), dtype=jnp.float32)
    betac = jnp.zeros((Cc // 2,), dtype=jnp.float32)

    outc = jax.block_until_ready(upsample_layer(xc, conv_wc, gammac, betac, tile_rows=8))
    refc = _reference(xc, conv_wc, gammac, betac)
    assert outc.shape == (N3, 2 * H3, 2 * W3, Cc // 2), outc.shape
    assert jnp.allclose(outc, refc, atol=1e-4, rtol=1e-4), float(jnp.max(jnp.abs(outc - refc)))

    # --- Config 4: bf16 compute path (f32 accumulation / f32 LayerNorm), loose tolerance ---
    outd = jax.block_until_ready(
        upsample_layer(xb, conv_wb, gammab, betab, tile_rows=8, compute_dtype=jnp.bfloat16))
    refd = _reference(xb.astype(jnp.bfloat16).astype(jnp.float32),
                      jnp.asarray(conv_wb).astype(jnp.bfloat16).astype(jnp.float32),
                      gammab, betab)
    assert outd.shape == (N2, 2 * H2, 2 * W2, Cb // 2), outd.shape
    assert jnp.allclose(outd, refd, atol=2e-2, rtol=2e-2), float(jnp.max(jnp.abs(outd - refd)))

    print("KERNEL_OK")
</pallas_src>

<mosaic_0001>
module attributes {stable_mosaic.version = 11 : i64} {
  func.func @kernel(%arg0: i32, %arg1: memref<512x4xf32, #tpu.memory_space<vmem>>, %arg2: memref<4x8xf32, #tpu.memory_space<vmem>>, %arg3: memref<1x4xf32, #tpu.memory_space<vmem>>, %arg4: memref<1x4xf32, #tpu.memory_space<vmem>>, %arg5: memref<32x2x16x4xf32, #tpu.memory_space<vmem>>) attributes {dimension_semantics = [#tpu.dimension_semantics<parallel>], iteration_bounds = array<i64: 1>, scalar_prefetch = 0 : i64, scratch_operands = 0 : i64, tpu.core_type = #tpu.core_type<tc>, window_params = [{transform_indices = @transform_0, window_bounds = array<i64: 512, 4>}, {pipeline_mode = #tpu.pipeline_mode<synchronous>, transform_indices = @transform_1, window_bounds = array<i64: 4, 8>}, {pipeline_mode = #tpu.pipeline_mode<synchronous>, transform_indices = @transform_2, window_bounds = array<i64: 1, 4>}, {pipeline_mode = #tpu.pipeline_mode<synchronous>, transform_indices = @transform_3, window_bounds = array<i64: 1, 4>}, {transform_indices = @transform_4, window_bounds = array<i64: 32, 2, 16, 4>}]} {
    %c0 = arith.constant 0 : index
    %c0_0 = arith.constant 0 : index
    %0 = vector.load %arg1[%c0, %c0_0] : memref<512x4xf32, #tpu.memory_space<vmem>>, vector<512x4xf32>
    %c0_1 = arith.constant 0 : index
    %c0_2 = arith.constant 0 : index
    %1 = vector.load %arg2[%c0_1, %c0_2] : memref<4x8xf32, #tpu.memory_space<vmem>>, vector<4x8xf32>
    %cst = arith.constant dense<0.000000e+00> : vector<512x8xf32>
    %2 = tpu.matmul %0, %1, %cst {dimension_numbers = #tpu.dot_dimension_numbers<[1], [0], [0], [1], [0, 0, 1, 1], [], []>} : vector<512x4xf32>, vector<4x8xf32>, vector<512x8xf32> -> vector<512x8xf32>
    %3 = tpu.iota {dimensions = array<i32: 1>} : vector<512x4xi32>
    %c2_i32 = arith.constant 2 : i32
    %4 = vector.broadcast %c2_i32 : i32 to vector<512x4xi32>
    %5 = arith.cmpi slt, %3, %4 : vector<512x4xi32>
    %6 = vector.extract_strided_slice %2 {offsets = [0, 0], sizes = [512, 4], strides = [1, 1]} : vector<512x8xf32> to vector<512x4xf32>
    %7 = vector.extract_strided_slice %6 {offsets = [0, 0], sizes = [512, 2], strides = [1, 1]} : vector<512x4xf32> to vector<512x2xf32>
    %cst_3 = arith.constant dense<0.000000e+00> : vector<512xf32>
    %8 = vector.multi_reduction <add>, %7, %cst_3 [1] : vector<512x2xf32> to vector<512xf32>
    %9 = vector.shape_cast %8 : vector<512xf32> to vector<512x1xf32>
    %cst_4 = arith.constant 5.000000e-01 : f32
    %10 = vector.broadcast %cst_4 : f32 to vector<512x1xf32>
    %11 = arith.mulf %9, %10 : vector<512x1xf32>
    %12 = vector.extract_strided_slice %6 {offsets = [0, 2], sizes = [512, 2], strides = [1, 1]} : vector<512x4xf32> to vector<512x2xf32>
    %cst_5 = arith.constant dense<0.000000e+00> : vector<512xf32>
    %13 = vector.multi_reduction <add>, %12, %cst_5 [1] : vector<512x2xf32> to vector<512xf32>
    %14 = vector.shape_cast %13 : vector<512xf32> to vector<512x1xf32>
    %cst_6 = arith.constant 5.000000e-01 : f32
    %15 = vector.broadcast %cst_6 : f32 to vector<512x1xf32>
    %16 = arith.mulf %14, %15 : vector<512x1xf32>
    %17 = vector.shape_cast %11 : vector<512x1xf32> to vector<512x1xf32>
    %18 = vector.broadcast %17 : vector<512x1xf32> to vector<512x4xf32>
    %19 = vector.shape_cast %16 : vector<512x1xf32> to vector<512x1xf32>
    %20 = vector.broadcast %19 : vector<512x1xf32> to vector<512x4xf32>
    %21 = arith.select %5, %18, %20 : vector<512x4xi1>, vector<512x4xf32>
    %22 = arith.subf %6, %21 : vector<512x4xf32>
    %23 = arith.mulf %22, %22 : vector<512x4xf32>
    %24 = vector.extract_strided_slice %23 {offsets = [0, 0], sizes = [512, 2], strides = [1, 1]} : vector<512x4xf32> to vector<512x2xf32>
    %cst_7 = arith.constant dense<0.000000e+00> : vector<512xf32>
    %25 = vector.multi_reduction <add>, %24, %cst_7 [1] : vector<512x2xf32> to vector<512xf32>
    %26 = vector.shape_cast %25 : vector<512xf32> to vector<512x1xf32>
    %cst_8 = arith.constant 5.000000e-01 : f32
    %27 = vector.broadcast %cst_8 : f32 to vector<512x1xf32>
    %28 = arith.mulf %26, %27 : vector<512x1xf32>
    %29 = vector.extract_strided_slice %23 {offsets = [0, 2], sizes = [512, 2], strides = [1, 1]} : vector<512x4xf32> to vector<512x2xf32>
    %cst_9 = arith.constant dense<0.000000e+00> : vector<512xf32>
    %30 = vector.multi_reduction <add>, %29, %cst_9 [1] : vector<512x2xf32> to vector<512xf32>
    %31 = vector.shape_cast %30 : vector<512xf32> to vector<512x1xf32>
    %cst_10 = arith.constant 5.000000e-01 : f32
    %32 = vector.broadcast %cst_10 : f32 to vector<512x1xf32>
    %33 = arith.mulf %31, %32 : vector<512x1xf32>
    %34 = vector.shape_cast %28 : vector<512x1xf32> to vector<512x1xf32>
    %35 = vector.broadcast %34 : vector<512x1xf32> to vector<512x4xf32>
    %36 = vector.shape_cast %33 : vector<512x1xf32> to vector<512x1xf32>
    %37 = vector.broadcast %36 : vector<512x1xf32> to vector<512x4xf32>
    %38 = arith.select %5, %35, %37 : vector<512x4xi1>, vector<512x4xf32>
    %cst_11 = arith.constant 9.99999997E-7 : f32
    %39 = vector.broadcast %cst_11 : f32 to vector<512x4xf32>
    %40 = arith.addf %38, %39 : vector<512x4xf32>
    %41 = math.rsqrt %40 : vector<512x4xf32>
    %42 = arith.mulf %22, %41 : vector<512x4xf32>
    %c0_12 = arith.constant 0 : index
    %c0_13 = arith.constant 0 : index
    %43 = vector.load %arg3[%c0_12, %c0_13] : memref<1x4xf32, #tpu.memory_space<vmem>>, vector<1x4xf32>
    %44 = vector.broadcast %43 : vector<1x4xf32> to vector<512x4xf32>
    %45 = arith.mulf %42, %44 : vector<512x4xf32>
    %c0_14 = arith.constant 0 : index
    %c0_15 = arith.constant 0 : index
    %46 = vector.load %arg4[%c0_14, %c0_15] : memref<1x4xf32, #tpu.memory_space<vmem>>, vector<1x4xf32>
    %47 = vector.broadcast %46 : vector<1x4xf32> to vector<512x4xf32>
    %48 = arith.addf %45, %47 : vector<512x4xf32>
    %49 = vector.shape_cast %48 : vector<512x4xf32> to vector<32x1x16x4xf32>
    %c0_16 = arith.constant 0 : index
    %c0_17 = arith.constant 0 : index
    %c0_18 = arith.constant 0 : index
    %c0_19 = arith.constant 0 : index
    %50 = vector.load %arg5[%c0_16, %c0_17, %c0_18, %c0_19] : memref<32x2x16x4xf32, #tpu.memory_space<vmem>>, vector<32x1x16x4xf32>
    tpu.vector_store %arg5[%c0_16, %c0_17, %c0_18, %c0_19], %49 {strides = array<i32>} : memref<32x2x16x4xf32, #tpu.memory_space<vmem>>, vector<32x1x16x4xf32>,
    %51 = vector.extract_strided_slice %2 {offsets = [0, 4], sizes = [512, 4], strides = [1, 1]} : vector<512x8xf32> to vector<512x4xf32>
    %52 = vector.extract_strided_slice %51 {offsets = [0, 0], sizes = [512, 2], strides = [1, 1]} : vector<512x4xf32> to vector<512x2xf32>
    %cst_20 = arith.constant dense<0.000000e+00> : vector<512xf32>
    %53 = vector.multi_reduction <add>, %52, %cst_20 [1] : vector<512x2xf32> to vector<512xf32>
    %54 = vector.shape_cast %53 : vector<512xf32> to vector<512x1xf32>
    %cst_21 = arith.constant 5.000000e-01 : f32
    %55 = vector.broadcast %cst_21 : f32 to vector<512x1xf32>
    %56 = arith.mulf %54, %55 : vector<512x1xf32>
    %57 = vector.extract_strided_slice %51 {offsets = [0, 2], sizes = [512, 2], strides = [1, 1]} : vector<512x4xf32> to vector<512x2xf32>
    %cst_22 = arith.constant dense<0.000000e+00> : vector<512xf32>
    %58 = vector.multi_reduction <add>, %57, %cst_22 [1] : vector<512x2xf32> to vector<512xf32>
    %59 = vector.shape_cast %58 : vector<512xf32> to vector<512x1xf32>
    %cst_23 = arith.constant 5.000000e-01 : f32
    %60 = vector.broadcast %cst_23 : f32 to vector<512x1xf32>
    %61 = arith.mulf %59, %60 : vector<512x1xf32>
    %62 = vector.shape_cast %56 : vector<512x1xf32> to vector<512x1xf32>
    %63 = vector.broadcast %62 : vector<512x1xf32> to vector<512x4xf32>
    %64 = vector.shape_cast %61 : vector<512x1xf32> to vector<512x1xf32>
    %65 = vector.broadcast %64 : vector<512x1xf32> to vector<512x4xf32>
    %66 = arith.select %5, %63, %65 : vector<512x4xi1>, vector<512x4xf32>
    %67 = arith.subf %51, %66 : vector<512x4xf32>
    %68 = arith.mulf %67, %67 : vector<512x4xf32>
    %69 = vector.extract_strided_slice %68 {offsets = [0, 0], sizes = [512, 2], strides = [1, 1]} : vector<512x4xf32> to vector<512x2xf32>
    %cst_24 = arith.constant dense<0.000000e+00> : vector<512xf32>
    %70 = vector.multi_reduction <add>, %69, %cst_24 [1] : vector<512x2xf32> to vector<512xf32>
    %71 = vector.shape_cast %70 : vector<512xf32> to vector<512x1xf32>
    %cst_25 = arith.constant 5.000000e-01 : f32
    %72 = vector.broadcast %cst_25 : f32 to vector<512x1xf32>
    %73 = arith.mulf %71, %72 : vector<512x1xf32>
    %74 = vector.extract_strided_slice %68 {offsets = [0, 2], sizes = [512, 2], strides = [1, 1]} : vector<512x4xf32> to vector<512x2xf32>
    %cst_26 = arith.constant dense<0.000000e+00> : vector<512xf32>
    %75 = vector.multi_reduction <add>, %74, %cst_26 [1] : vector<512x2xf32> to vector<512xf32>
    %76 = vector.shape_cast %75 : vector<512xf32> to vector<512x1xf32>
    %cst_27 = arith.constant 5.000000e-01 : f32
    %77 = vector.broadcast %cst_27 : f32 to vector<512x1xf32>
    %78 = arith.mulf %76, %77 : vector<512x1xf32>
    %79 = vector.shape_cast %73 : vector<512x1xf32> to vector<512x1xf32>
    %80 = vector.broadcast %79 : vector<512x1xf32> to vector<512x4xf32>
    %81 = vector.shape_cast %78 : vector<512x1xf32> to vector<512x1xf32>
    %82 = vector.broadcast %81 : vector<512x1xf32> to vector<512x4xf32>
    %83 = arith.select %5, %80, %82 : vector<512x4xi1>, vector<512x4xf32>
    %cst_28 = arith.constant 9.99999997E-7 : f32
    %84 = vector.broadcast %cst_28 : f32 to vector<512x4xf32>
    %85 = arith.addf %83, %84 : vector<512x4xf32>
    %86 = math.rsqrt %85 : vector<512x4xf32>
    %87 = arith.mulf %67, %86 : vector<512x4xf32>
    %c0_29 = arith.constant 0 : index
    %c0_30 = arith.constant 0 : index
    %88 = vector.load %arg3[%c0_29, %c0_30] : memref<1x4xf32, #tpu.memory_space<vmem>>, vector<1x4xf32>
    %89 = vector.broadcast %88 : vector<1x4xf32> to vector<512x4xf32>
    %90 = arith.mulf %87, %89 : vector<512x4xf32>
    %c0_31 = arith.constant 0 : index
    %c0_32 = arith.constant 0 : index
    %91 = vector.load %arg4[%c0_31, %c0_32] : memref<1x4xf32, #tpu.memory_space<vmem>>, vector<1x4xf32>
    %92 = vector.broadcast %91 : vector<1x4xf32> to vector<512x4xf32>
    %93 = arith.addf %90, %92 : vector<512x4xf32>
    %94 = vector.shape_cast %93 : vector<512x4xf32> to vector<32x1x16x4xf32>
    %c0_33 = arith.constant 0 : index
    %c1 = arith.constant 1 : index
    %c0_34 = arith.constant 0 : index
    %c0_35 = arith.constant 0 : index
    %95 = vector.load %arg5[%c0_33, %c1, %c0_34, %c0_35] : memref<32x2x16x4xf32, #tpu.memory_space<vmem>>, vector<32x1x16x4xf32>
    tpu.vector_store %arg5[%c0_33, %c1, %c0_34, %c0_35], %94 {strides = array<i32>} : memref<32x2x16x4xf32, #tpu.memory_space<vmem>>, vector<32x1x16x4xf32>,
    return
  }
  func.func @transform_0(%arg0: i32) -> (i32, i32) {
    %c0_i32 = arith.constant 0 : i32
    %c0_i32_0 = arith.constant 0 : i32
    return %arg0, %c0_i32 : i32, i32
  }
  func.func @transform_1(%arg0: i32) -> (i32, i32) {
    %c0_i32 = arith.constant 0 : i32
    %c0_i32_0 = arith.constant 0 : i32
    %c0_i32_1 = arith.constant 0 : i32
    return %c0_i32, %c0_i32_0 : i32, i32
  }
  func.func @transform_2(%arg0: i32) -> (i32, i32) {
    %c0_i32 = arith.constant 0 : i32
    %c0_i32_0 = arith.constant 0 : i32
    %c0_i32_1 = arith.constant 0 : i32
    return %c0_i32, %c0_i32_0 : i32, i32
  }
  func.func @transform_3(%arg0: i32) -> (i32, i32) {
    %c0_i32 = arith.constant 0 : i32
    %c0_i32_0 = arith.constant 0 : i32
    %c0_i32_1 = arith.constant 0 : i32
    return %c0_i32, %c0_i32_0 : i32, i32
  }
  func.func @transform_4(%arg0: i32) -> (i32, i32, i32, i32) {
    %c0_i32 = arith.constant 0 : i32
    %c0_i32_0 = arith.constant 0 : i32
    %c0_i32_1 = arith.constant 0 : i32
    %c0_i32_2 = arith.constant 0 : i32
    return %arg0, %c0_i32, %c0_i32_0, %c0_i32_1 : i32, i32, i32, i32
  }
}

</mosaic_0001>

<llo_original>
// kernel: tpu_custom_call.1
$region0: #{tpu_custom_call.1}
  #allocation0 [shape = 'u32[]', space=smem, size = 0x4, offset = 0x4, fixed_abs, tag = 'smem constant byte address 0x4 - core index']
  #allocation1 [shape = 'u32[72,128]{1,0:T(1,128)}', space=vmem, size = 0x9000, scoped, tag = 'internal scratch']
  %s0 = inlined_call_operand.vmem [shape: f32[512,4], index: 0, kind: input, shape index: {}]
  %s1 = inlined_call_operand.vmem [shape: f32[4,8], index: 1, kind: input, shape index: {}]
  %s2 = inlined_call_operand.vmem [shape: f32[1,4], index: 2, kind: input, shape index: {}]
  %s3 = inlined_call_operand.vmem [shape: f32[1,4], index: 3, kind: input, shape index: {}]
  %s4 = inlined_call_operand.vmem [shape: f32[32,2,16,4], index: 4, kind: output, shape index: {}]
  %s5 = sld [smem:[#allocation0]]
  $region26: #{tpu_custom_call.1} parent=0
    _
  %s7 = ssub.s32 1, %s5
  %s8 = scalar_select 0, %s7, %s5
  // Predicated region
  $region2: #{tpu_custom_call.1} parent=0 // pred_check
    _
  $region3: #{tpu_custom_call.1} parent=0 // pred_check_branch
    %10 = sbr.rel (0) target = $region5
  $region4: #{tpu_custom_call.1} parent=0 // pred_region
    _
  $region5: #{tpu_custom_call.1} parent=0 // pred_fallthru
    _
  // Predicated region
  $region6: #{tpu_custom_call.1} parent=0 // pred_check
    _
  $region7: #{tpu_custom_call.1} parent=0 // pred_check_branch
    %12 = sbr.rel (0) target = $region9
  $region8: #{tpu_custom_call.1} parent=0 // pred_region
    _
  $region9: #{tpu_custom_call.1} parent=0 // pred_fallthru
    _
  // Predicated region
  $region10: #{tpu_custom_call.1} parent=0 // pred_check
    _
  $region11: #{tpu_custom_call.1} parent=0 // pred_check_branch
    %14 = sbr.rel (0) target = $region13
  $region12: #{tpu_custom_call.1} parent=0 // pred_region
    _
  $region13: #{tpu_custom_call.1} parent=0 // pred_fallthru
    _
  // Predicated region
  $region14: #{tpu_custom_call.1} parent=0 // pred_check
    _
  $region15: #{tpu_custom_call.1} parent=0 // pred_check_branch
    %16 = sbr.rel (0) target = $region17
  $region16: #{tpu_custom_call.1} parent=0 // pred_region
    _
  $region17: #{tpu_custom_call.1} parent=0 // pred_fallthru
    _
  %v17 = vld [vmem:[%s0] sm:$0xff]
  %v18 = vld [vmem:[%s0 + $0x8] sm:$0xff]
  %v19 = vld [vmem:[%s0 + $0x10] sm:$0xff]
  %v20 = vld [vmem:[%s0 + $0x18] sm:$0xff]
  %v21 = vld [vmem:[%s0 + $0x20] sm:$0xff]
  %v22 = vld [vmem:[%s0 + $0x28] sm:$0xff]
  %v23 = vld [vmem:[%s0 + $0x30] sm:$0xff]
  %v24 = vld [vmem:[%s0 + $0x38] sm:$0xff]
  %v25 = vld [vmem:[%s0 + $0x40] sm:$0xff]
  %v26 = vld [vmem:[%s0 + $0x48] sm:$0xff]
  %v27 = vld [vmem:[%s0 + $0x50] sm:$0xff]
  %v28 = vld [vmem:[%s0 + $0x58] sm:$0xff]
  %v29 = vld [vmem:[%s0 + $0x60] sm:$0xff]
  %v30 = vld [vmem:[%s0 + $0x68] sm:$0xff]
  %v31 = vld [vmem:[%s0 + $0x70] sm:$0xff]
  %v32 = vld [vmem:[%s0 + $0x78] sm:$0xff]
  %v33 = vld [vmem:[%s0 + $0x80] sm:$0xff]
  %v34 = vld [vmem:[%s0 + $0x88] sm:$0xff]
  %v35 = vld [vmem:[%s0 + $0x90] sm:$0xff]
  %v36 = vld [vmem:[%s0 + $0x98] sm:$0xff]
  %v37 = vld [vmem:[%s0 + $0xa0] sm:$0xff]
  %v38 = vld [vmem:[%s0 + $0xa8] sm:$0xff]
  %v39 = vld [vmem:[%s0 + $0xb0] sm:$0xff]
  %v40 = vld [vmem:[%s0 + $0xb8] sm:$0xff]
  %v41 = vld [vmem:[%s0 + $0xc0] sm:$0xff]
  %v42 = vld [vmem:[%s0 + $0xc8] sm:$0xff]
  %v43 = vld [vmem:[%s0 + $0xd0] sm:$0xff]
  %v44 = vld [vmem:[%s0 + $0xd8] sm:$0xff]
  %v45 = vld [vmem:[%s0 + $0xe0] sm:$0xff]
  %v46 = vld [vmem:[%s0 + $0xe8] sm:$0xff]
  %v47 = vld [vmem:[%s0 + $0xf0] sm:$0xff]
  %v48 = vld [vmem:[%s0 + $0xf8] sm:$0xff]
  %v49 = vld [vmem:[%s0 + $0x100] sm:$0xff]
  %v50 = vld [vmem:[%s0 + $0x108] sm:$0xff]
  %v51 = vld [vmem:[%s0 + $0x110] sm:$0xff]
  %v52 = vld [vmem:[%s0 + $0x118] sm:$0xff]
  %v53 = vld [vmem:[%s0 + $0x120] sm:$0xff]
  %v54 = vld [vmem:[%s0 + $0x128] sm:$0xff]
  %v55 = vld [vmem:[%s0 + $0x130] sm:$0xff]
  %v56 = vld [vmem:[%s0 + $0x138] sm:$0xff]
  %v57 = vld [vmem:[%s0 + $0x140] sm:$0xff]
  %v58 = vld [vmem:[%s0 + $0x148] sm:$0xff]
  %v59 = vld [vmem:[%s0 + $0x150] sm:$0xff]
  %v60 = vld [vmem:[%s0 + $0x158] sm:$0xff]
  %v61 = vld [vmem:[%s0 + $0x160] sm:$0xff]
  %v62 = vld [vmem:[%s0 + $0x168] sm:$0xff]
  %v63 = vld [vmem:[%s0 + $0x170] sm:$0xff]
  %v64 = vld [vmem:[%s0 + $0x178] sm:$0xff]
  %v65 = vld [vmem:[%s0 + $0x180] sm:$0xff]
  %v66 = vld [vmem:[%s0 + $0x188] sm:$0xff]
  %v67 = vld [vmem:[%s0 + $0x190] sm:$0xff]
  %v68 = vld [vmem:[%s0 + $0x198] sm:$0xff]
  %v69 = vld [vmem:[%s0 + $0x1a0] sm:$0xff]
  %v70 = vld [vmem:[%s0 + $0x1a8] sm:$0xff]
  %v71 = vld [vmem:[%s0 + $0x1b0] sm:$0xff]
  %v72 = vld [vmem:[%s0 + $0x1b8] sm:$0xff]
  %v73 = vld [vmem:[%s0 + $0x1c0] sm:$0xff]
  %v74 = vld [vmem:[%s0 + $0x1c8] sm:$0xff]
  %v75 = vld [vmem:[%s0 + $0x1d0] sm:$0xff]
  %v76 = vld [vmem:[%s0 + $0x1d8] sm:$0xff]
  %v77 = vld [vmem:[%s0 + $0x1e0] sm:$0xff]
  %v78 = vld [vmem:[%s0 + $0x1e8] sm:$0xff]
  %v79 = vld [vmem:[%s0 + $0x1f0] sm:$0xff]
  %v80 = vld [vmem:[%s0 + $0x1f8] sm:$0xff]
  %v81 = vld [vmem:[%s1] sm:$0xf]
  %vm82 = vcmask 31744
  %v84 = vsel %vm82, %v17, 0
  %v87 = vsel %vm82, %v18, 0
  %v90 = vsel %vm82, %v19, 0
  %v93 = vsel %vm82, %v20, 0
  %v96 = vsel %vm82, %v21, 0
  %v99 = vsel %vm82, %v22, 0
  %v102 = vsel %vm82, %v23, 0
  %v105 = vsel %vm82, %v24, 0
  %v108 = vsel %vm82, %v25, 0
  %v111 = vsel %vm82, %v26, 0
  %v114 = vsel %vm82, %v27, 0
  %v117 = vsel %vm82, %v28, 0
  %v120 = vsel %vm82, %v29, 0
  %v123 = vsel %vm82, %v30, 0
  %v126 = vsel %vm82, %v31, 0
  %v129 = vsel %vm82, %v32, 0
  %v132 = vsel %vm82, %v33, 0
  %v135 = vsel %vm82, %v34, 0
  %v138 = vsel %vm82, %v35, 0
  %v141 = vsel %vm82, %v36, 0
  %v144 = vsel %vm82, %v37, 0
  %v147 = vsel %vm82, %v38, 0
  %v150 = vsel %vm82, %v39, 0
  %v153 = vsel %vm82, %v40, 0
  %v156 = vsel %vm82, %v41, 0
  %v159 = vsel %vm82, %v42, 0
  %v162 = vsel %vm82, %v43, 0
  %v165 = vsel %vm82, %v44, 0
  %v168 = vsel %vm82, %v45, 0
  %v171 = vsel %vm82, %v46, 0
  %v174 = vsel %vm82, %v47, 0
  %v177 = vsel %vm82, %v48, 0
  %v180 = vsel %vm82, %v49, 0
  %v183 = vsel %vm82, %v50, 0
  %v186 = vsel %vm82, %v51, 0
  %v189 = vsel %vm82, %v52, 0
  %v192 = vsel %vm82, %v53, 0
  %v195 = vsel %vm82, %v54, 0
  %v198 = vsel %vm82, %v55, 0
  %v201 = vsel %vm82, %v56, 0
  %v204 = vsel %vm82, %v57, 0
  %v207 = vsel %vm82, %v58, 0
  %v210 = vsel %vm82, %v59, 0
  %v213 = vsel %vm82, %v60, 0
  %v216 = vsel %vm82, %v61, 0
  %v219 = vsel %vm82, %v62, 0
  %v222 = vsel %vm82, %v63, 0
  %v225 = vsel %vm82, %v64, 0
  %v228 = vsel %vm82, %v65, 0
  %v231 = vsel %vm82, %v66, 0
  %v234 = vsel %vm82, %v67, 0
  %v237 = vsel %vm82, %v68, 0
  %v240 = vsel %vm82, %v69, 0
  %v243 = vsel %vm82, %v70, 0
  %v246 = vsel %vm82, %v71, 0
  %v249 = vsel %vm82, %v72, 0
  %v252 = vsel %vm82, %v73, 0
  %v255 = vsel %vm82, %v74, 0
  %v258 = vsel %vm82, %v75, 0
  %v261 = vsel %vm82, %v76, 0
  %v264 = vsel %vm82, %v77, 0
  %v267 = vsel %vm82, %v78, 0
  %v270 = vsel %vm82, %v79, 0
  %v273 = vsel %vm82, %v80, 0
  %vm275 = vcmask 1043456
  %v277 = vsel %vm275, %v81, 0
  %279 = vmatpush.msra.mxu0 0.0
  %280 = vmatpush.msra.mxu0 0.0
  %281 = vmatpush.msra.mxu0 0.0
  %282 = vmatpush.msra.mxu0 0.0
  %283 = vmatpush.msra.mxu0 0.0
  %284 = vmatpush.msra.mxu0 0.0
  %285 = vmatpush.msra.mxu0 0.0
  %286 = vmatpush.msra.mxu0 0.0
  %287 = vmatpush.msra.mxu0 0.0
  %288 = vmatpush.msra.mxu0 0.0
  %289 = vmatpush.msra.mxu0 0.0
  %290 = vmatpush.msra.mxu0 0.0
  %291 = vmatpush.msra.mxu0 0.0
  %292 = vmatpush.msra.mxu0 0.0
  %293 = vmatpush.msra.mxu0 0.0
  %294 = vmatpush.msra.mxu0 %v277
  %295 = vmatmul.f32.gmra.mxu0 %v84
  %v296 = vpop.f32.mrf.mxu0
  %v297 = vadd.f32 0.0, %v296
  %298 = vmatmul.f32.gmra.mxu0 %v87
  %v299 = vpop.f32.mrf.mxu0
  %v300 = vadd.f32 0.0, %v299
  %301 = vmatmul.f32.gmra.mxu0 %v90
  %v302 = vpop.f32.mrf.mxu0
  %v303 = vadd.f32 0.0, %v302
  %304 = vmatmul.f32.gmra.mxu0 %v93
  %v305 = vpop.f32.mrf.mxu0
  %v306 = vadd.f32 0.0, %v305
  %307 = vmatmul.f32.gmra.mxu0 %v96
  %v308 = vpop.f32.mrf.mxu0
  %v309 = vadd.f32 0.0, %v308
  %310 = vmatmul.f32.gmra.mxu0 %v99
  %v311 = vpop.f32.mrf.mxu0
  %v312 = vadd.f32 0.0, %v311
  %313 = vmatmul.f32.gmra.mxu0 %v102
  %v314 = vpop.f32.mrf.mxu0
  %v315 = vadd.f32 0.0, %v314
  %316 = vmatmul.f32.gmra.mxu0 %v105
  %v317 = vpop.f32.mrf.mxu0
  %v318 = vadd.f32 0.0, %v317
  %319 = vmatmul.f32.gmra.mxu0 %v108
  %v320 = vpop.f32.mrf.mxu0
  %v321 = vadd.f32 0.0, %v320
  %322 = vmatmul.f32.gmra.mxu0 %v111
  %v323 = vpop.f32.mrf.mxu0
  %v324 = vadd.f32 0.0, %v323
  %325 = vmatmul.f32.gmra.mxu0 %v114
  %v326 = vpop.f32.mrf.mxu0
  %v327 = vadd.f32 0.0, %v326
  %328 = vmatmul.f32.gmra.mxu0 %v117
  %v329 = vpop.f32.mrf.mxu0
  %v330 = vadd.f32 0.0, %v329
  %331 = vmatmul.f32.gmra.mxu0 %v120
  %v332 = vpop.f32.mrf.mxu0
  %v333 = vadd.f32 0.0, %v332
  %334 = vmatmul.f32.gmra.mxu0 %v123
  %v335 = vpop.f32.mrf.mxu0
  %v336 = vadd.f32 0.0, %v335
  %337 = vmatmul.f32.gmra.mxu0 %v126
  %v338 = vpop.f32.mrf.mxu0
  %v339 = vadd.f32 0.0, %v338
  %340 = vmatmul.f32.gmra.mxu0 %v129
  %v341 = vpop.f32.mrf.mxu0
  %v342 = vadd.f32 0.0, %v341
  %343 = vmatmul.f32.gmra.mxu0 %v132
  %v344 = vpop.f32.mrf.mxu0
  %v345 = vadd.f32 0.0, %v344
  %346 = vmatmul.f32.gmra.mxu0 %v135
  %v347 = vpop.f32.mrf.mxu0
  %v348 = vadd.f32 0.0, %v347
  %349 = vmatmul.f32.gmra.mxu0 %v138
  %v350 = vpop.f32.mrf.mxu0
  %v351 = vadd.f32 0.0, %v350
  %352 = vmatmul.f32.gmra.mxu0 %v141
  %v353 = vpop.f32.mrf.mxu0
  %v354 = vadd.f32 0.0, %v353
  %355 = vmatmul.f32.gmra.mxu0 %v144
  %v356 = vpop.f32.mrf.mxu0
  %v357 = vadd.f32 0.0, %v356
  %358 = vmatmul.f32.gmra.mxu0 %v147
  %v359 = vpop.f32.mrf.mxu0
  %v360 = vadd.f32 0.0, %v359
  %361 = vmatmul.f32.gmra.mxu0 %v150
  %v362 = vpop.f32.mrf.mxu0
  %v363 = vadd.f32 0.0, %v362
  %364 = vmatmul.f32.gmra.mxu0 %v153
  %v365 = vpop.f32.mrf.mxu0
  %v366 = vadd.f32 0.0, %v365
  %367 = vmatmul.f32.gmra.mxu0 %v156
  %v368 = vpop.f32.mrf.mxu0
  %v369 = vadd.f32 0.0, %v368
  %370 = vmatmul.f32.gmra.mxu0 %v159
  %v371 = vpop.f32.mrf.mxu0
  %v372 = vadd.f32 0.0, %v371
  %373 = vmatmul.f32.gmra.mxu0 %v162
  %v374 = vpop.f32.mrf.mxu0
  %v375 = vadd.f32 0.0, %v374
  %376 = vmatmul.f32.gmra.mxu0 %v165
  %v377 = vpop.f32.mrf.mxu0
  %v378 = vadd.f32 0.0, %v377
  %379 = vmatmul.f32.gmra.mxu0 %v168
  %v380 = vpop.f32.mrf.mxu0
  %v381 = vadd.f32 0.0, %v380
  %382 = vmatmul.f32.gmra.mxu0 %v171
  %v383 = vpop.f32.mrf.mxu0
  %v384 = vadd.f32 0.0, %v383
  %385 = vmatmul.f32.gmra.mxu0 %v174
  %v386 = vpop.f32.mrf.mxu0
  %v387 = vadd.f32 0.0, %v386
  %388 = vmatmul.f32.gmra.mxu0 %v177
  %v389 = vpop.f32.mrf.mxu0
  %v390 = vadd.f32 0.0, %v389
  %391 = vmatmul.f32.gmra.mxu0 %v180
  %v392 = vpop.f32.mrf.mxu0
  %v393 = vadd.f32 0.0, %v392
  %394 = vmatmul.f32.gmra.mxu0 %v183
  %v395 = vpop.f32.mrf.mxu0
  %v396 = vadd.f32 0.0, %v395
  %397 = vmatmul.f32.gmra.mxu0 %v186
  %v398 = vpop.f32.mrf.mxu0
  %v399 = vadd.f32 0.0, %v398
  %400 = vmatmul.f32.gmra.mxu0 %v189
  %v401 = vpop.f32.mrf.mxu0
  %v402 = vadd.f32 0.0, %v401
  %403 = vmatmul.f32.gmra.mxu0 %v192
  %v404 = vpop.f32.mrf.mxu0
  %v405 = vadd.f32 0.0, %v404
  %406 = vmatmul.f32.gmra.mxu0 %v195
  %v407 = vpop.f32.mrf.mxu0
  %v408 = vadd.f32 0.0, %v407
  %409 = vmatmul.f32.gmra.mxu0 %v198
  %v410 = vpop.f32.mrf.mxu0
  %v411 = vadd.f32 0.0, %v410
  %412 = vmatmul.f32.gmra.mxu0 %v201
  %v413 = vpop.f32.mrf.mxu0
  %v414 = vadd.f32 0.0, %v413
  %415 = vmatmul.f32.gmra.mxu0 %v204
  %v416 = vpop.f32.mrf.mxu0
  %v417 = vadd.f32 0.0, %v416
  %418 = vmatmul.f32.gmra.mxu0 %v207
  %v419 = vpop.f32.mrf.mxu0
  %v420 = vadd.f32 0.0, %v419
  %421 = vmatmul.f32.gmra.mxu0 %v210
  %v422 = vpop.f32.mrf.mxu0
  %v423 = vadd.f32 0.0, %v422
  %424 = vmatmul.f32.gmra.mxu0 %v213
  %v425 = vpop.f32.mrf.mxu0
  %v426 = vadd.f32 0.0, %v425
  %427 = vmatmul.f32.gmra.mxu0 %v216
  %v428 = vpop.f32.mrf.mxu0
  %v429 = vadd.f32 0.0, %v428
  %430 = vmatmul.f32.gmra.mxu0 %v219
  %v431 = vpop.f32.mrf.mxu0
  %v432 = vadd.f32 0.0, %v431
  %433 = vmatmul.f32.gmra.mxu0 %v222
  %v434 = vpop.f32.mrf.mxu0
  %v435 = vadd.f32 0.0, %v434
  %436 = vmatmul.f32.gmra.mxu0 %v225
  %v437 = vpop.f32.mrf.mxu0
  %v438 = vadd.f32 0.0, %v437
  %439 = vmatmul.f32.gmra.mxu0 %v228
  %v440 = vpop.f32.mrf.mxu0
  %v441 = vadd.f32 0.0, %v440
  %442 = vmatmul.f32.gmra.mxu0 %v231
  %v443 = vpop.f32.mrf.mxu0
  %v444 = vadd.f32 0.0, %v443
  %445 = vmatmul.f32.gmra.mxu0 %v234
  %v446 = vpop.f32.mrf.mxu0
  %v447 = vadd.f32 0.0, %v446
  %448 = vmatmul.f32.gmra.mxu0 %v237
  %v449 = vpop.f32.mrf.mxu0
  %v450 = vadd.f32 0.0, %v449
  %451 = vmatmul.f32.gmra.mxu0 %v240
  %v452 = vpop.f32.mrf.mxu0
  %v453 = vadd.f32 0.0, %v452
  %454 = vmatmul.f32.gmra.mxu0 %v243
  %v455 = vpop.f32.mrf.mxu0
  %v456 = vadd.f32 0.0, %v455
  %457 = vmatmul.f32.gmra.mxu0 %v246
  %v458 = vpop.f32.mrf.mxu0
  %v459 = vadd.f32 0.0, %v458
  %460 = vmatmul.f32.gmra.mxu0 %v249
  %v461 = vpop.f32.mrf.mxu0
  %v462 = vadd.f32 0.0, %v461
  %463 = vmatmul.f32.gmra.mxu0 %v252
  %v464 = vpop.f32.mrf.mxu0
  %v465 = vadd.f32 0.0, %v464
  %466 = vmatmul.f32.gmra.mxu0 %v255
  %v467 = vpop.f32.mrf.mxu0
  %v468 = vadd.f32 0.0, %v467
  %469 = vmatmul.f32.gmra.mxu0 %v258
  %v470 = vpop.f32.mrf.mxu0
  %v471 = vadd.f32 0.0, %v470
  %472 = vmatmul.f32.gmra.mxu0 %v261
  %v473 = vpop.f32.mrf.mxu0
  %v474 = vadd.f32 0.0, %v473
  %475 = vmatmul.f32.gmra.mxu0 %v264
  %v476 = vpop.f32.mrf.mxu0
  %v477 = vadd.f32 0.0, %v476
  %478 = vmatmul.f32.gmra.mxu0 %v267
  %v479 = vpop.f32.mrf.mxu0
  %v480 = vadd.f32 0.0, %v479
  %481 = vmatmul.f32.gmra.mxu0 %v270
  %v482 = vpop.f32.mrf.mxu0
  %v483 = vadd.f32 0.0, %v482
  %484 = vmatmul.f32.gmra.mxu0 %v273
  %v485 = vpop.f32.mrf.mxu0
  %v486 = vadd.f32 0.0, %v485
  %487 = vdwg.mxu0
  %v488 = vlaneseq
  %v489 = vand.u32 %v488, 127
  %vm490 = vcmp.lt.s32.totalorder %v489, 2
  %vm491 = vcmask 15360
  %v492 = vsel %vm491, %v297, 0.0
  %493 = vadd.xlane.f32.xlu0 %v492
  %v494 = vpop.xlane.xlu0 %493
  %v495 = vsel %vm491, %v300, 0.0
  %496 = vadd.xlane.f32.xlu0 %v495
  %v497 = vpop.xlane.xlu0 %496
  %v498 = vsel %vm491, %v303, 0.0
  %499 = vadd.xlane.f32.xlu0 %v498
  %v500 = vpop.xlane.xlu0 %499
  %v501 = vsel %vm491, %v306, 0.0
  %502 = vadd.xlane.f32.xlu0 %v501
  %v503 = vpop.xlane.xlu0 %502
  %v504 = vsel %vm491, %v309, 0.0
  %505 = vadd.xlane.f32.xlu0 %v504
  %v506 = vpop.xlane.xlu0 %505
  %v507 = vsel %vm491, %v312, 0.0
  %508 = vadd.xlane.f32.xlu0 %v507
  %v509 = vpop.xlane.xlu0 %508
  %v510 = vsel %vm491, %v315, 0.0
  %511 = vadd.xlane.f32.xlu0 %v510
  %v512 = vpop.xlane.xlu0 %511
  %v513 = vsel %vm491, %v318, 0.0
  %514 = vadd.xlane.f32.xlu0 %v513
  %v515 = vpop.xlane.xlu0 %514
  %v516 = vsel %vm491, %v321, 0.0
  %517 = vadd.xlane.f32.xlu0 %v516
  %v518 = vpop.xlane.xlu0 %517
  %v519 = vsel %vm491, %v324, 0.0
  %520 = vadd.xlane.f32.xlu0 %v519
  %v521 = vpop.xlane.xlu0 %520
  %v522 = vsel %vm491, %v327, 0.0
  %523 = vadd.xlane.f32.xlu0 %v522
  %v524 = vpop.xlane.xlu0 %523
  %v525 = vsel %vm491, %v330, 0.0
  %526 = vadd.xlane.f32.xlu0 %v525
  %v527 = vpop.xlane.xlu0 %526
  %v528 = vsel %vm491, %v333, 0.0
  %529 = vadd.xlane.f32.xlu0 %v528
  %v530 = vpop.xlane.xlu0 %529
  %v531 = vsel %vm491, %v336, 0.0
  %532 = vadd.xlane.f32.xlu0 %v531
  %v533 = vpop.xlane.xlu0 %532
  %v534 = vsel %vm491, %v339, 0.0
  %535 = vadd.xlane.f32.xlu0 %v534
  %v536 = vpop.xlane.xlu0 %535
  %v537 = vsel %vm491, %v342, 0.0
  %538 = vadd.xlane.f32.xlu0 %v537
  %v539 = vpop.xlane.xlu0 %538
  %v540 = vsel %vm491, %v345, 0.0
  %541 = vadd.xlane.f32.xlu0 %v540
  %v542 = vpop.xlane.xlu0 %541
  %v543 = vsel %vm491, %v348, 0.0
  %544 = vadd.xlane.f32.xlu0 %v543
  %v545 = vpop.xlane.xlu0 %544
  %v546 = vsel %vm491, %v351, 0.0
  %547 = vadd.xlane.f32.xlu0 %v546
  %v548 = vpop.xlane.xlu0 %547
  %v549 = vsel %vm491, %v354, 0.0
  %550 = vadd.xlane.f32.xlu0 %v549
  %v551 = vpop.xlane.xlu0 %550
  %v552 = vsel %vm491, %v357, 0.0
  %553 = vadd.xlane.f32.xlu0 %v552
  %v554 = vpop.xlane.xlu0 %553
  %v555 = vsel %vm491, %v360, 0.0
  %556 = vadd.xlane.f32.xlu0 %v555
  %v557 = vpop.xlane.xlu0 %556
  %v558 = vsel %vm491, %v363, 0.0
  %559 = vadd.xlane.f32.xlu0 %v558
  %v560 = vpop.xlane.xlu0 %559
  %v561 = vsel %vm491, %v366, 0.0
  %562 = vadd.xlane.f32.xlu0 %v561
  %v563 = vpop.xlane.xlu0 %562
  %v564 = vsel %vm491, %v369, 0.0
  %565 = vadd.xlane.f32.xlu0 %v564
  %v566 = vpop.xlane.xlu0 %565
  %v567 = vsel %vm491, %v372, 0.0
  %568 = vadd.xlane.f32.xlu0 %v567
  %v569 = vpop.xlane.xlu0 %568
  %v570 = vsel %vm491, %v375, 0.0
  %571 = vadd.xlane.f32.xlu0 %v570
  %v572 = vpop.xlane.xlu0 %571
  %v573 = vsel %vm491, %v378, 0.0
  %574 = vadd.xlane.f32.xlu0 %v573
  %v575 = vpop.xlane.xlu0 %574
  %v576 = vsel %vm491, %v381, 0.0
  %577 = vadd.xlane.f32.xlu0 %v576
  %v578 = vpop.xlane.xlu0 %577
  %v579 = vsel %vm491, %v384, 0.0
  %580 = vadd.xlane.f32.xlu0 %v579
  %v581 = vpop.xlane.xlu0 %580
  %v582 = vsel %vm491, %v387, 0.0
  %583 = vadd.xlane.f32.xlu0 %v582
  %v584 = vpop.xlane.xlu0 %583
  %v585 = vsel %vm491, %v390, 0.0
  %586 = vadd.xlane.f32.xlu0 %v585
  %v587 = vpop.xlane.xlu0 %586
  %v588 = vsel %vm491, %v393, 0.0
  %589 = vadd.xlane.f32.xlu0 %v588
  %v590 = vpop.xlane.xlu0 %589
  %v591 = vsel %vm491, %v396, 0.0
  %592 = vadd.xlane.f32.xlu0 %v591
  %v593 = vpop.xlane.xlu0 %592
  %v594 = vsel %vm491, %v399, 0.0
  %595 = vadd.xlane.f32.xlu0 %v594
  %v596 = vpop.xlane.xlu0 %595
  %v597 = vsel %vm491, %v402, 0.0
  %598 = vadd.xlane.f32.xlu0 %v597
  %v599 = vpop.xlane.xlu0 %598
  %v600 = vsel %vm491, %v405, 0.0
  %601 = vadd.xlane.f32.xlu0 %v600
  %v602 = vpop.xlane.xlu0 %601
  %v603 = vsel %vm491, %v408, 0.0
  %604 = vadd.xlane.f32.xlu0 %v603
  %v605 = vpop.xlane.xlu0 %604
  %v606 = vsel %vm491, %v411, 0.0
  %607 = vadd.xlane.f32.xlu0 %v606
  %v608 = vpop.xlane.xlu0 %607
  %v609 = vsel %vm491, %v414, 0.0
  %610 = vadd.xlane.f32.xlu0 %v609
  %v611 = vpop.xlane.xlu0 %610
  %v612 = vsel %vm491, %v417, 0.0
  %613 = vadd.xlane.f32.xlu0 %v612
  %v614 = vpop.xlane.xlu0 %613
  %v615 = vsel %vm491, %v420, 0.0
  %616 = vadd.xlane.f32.xlu0 %v615
  %v617 = vpop.xlane.xlu0 %616
  %v618 = vsel %vm491, %v423, 0.0
  %619 = vadd.xlane.f32.xlu0 %v618
  %v620 = vpop.xlane.xlu0 %619
  %v621 = vsel %vm491, %v426, 0.0
  %622 = vadd.xlane.f32.xlu0 %v621
  %v623 = vpop.xlane.xlu0 %622
  %v624 = vsel %vm491, %v429, 0.0
  %625 = vadd.xlane.f32.xlu0 %v624
  %v626 = vpop.xlane.xlu0 %625
  %v627 = vsel %vm491, %v432, 0.0
  %628 = vadd.xlane.f32.xlu0 %v627
  %v629 = vpop.xlane.xlu0 %628
  %v630 = vsel %vm491, %v435, 0.0
  %631 = vadd.xlane.f32.xlu0 %v630
  %v632 = vpop.xlane.xlu0 %631
  %v633 = vsel %vm491, %v438, 0.0
  %634 = vadd.xlane.f32.xlu0 %v633
  %v635 = vpop.xlane.xlu0 %634
  %v636 = vsel %vm491, %v441, 0.0
  %637 = vadd.xlane.f32.xlu0 %v636
  %v638 = vpop.xlane.xlu0 %637
  %v639 = vsel %vm491, %v444, 0.0
  %640 = vadd.xlane.f32.xlu0 %v639
  %v641 = vpop.xlane.xlu0 %640
  %v642 = vsel %vm491, %v447, 0.0
  %643 = vadd.xlane.f32.xlu0 %v642
  %v644 = vpop.xlane.xlu0 %643
  %v645 = vsel %vm491, %v450, 0.0
  %646 = vadd.xlane.f32.xlu0 %v645
  %v647 = vpop.xlane.xlu0 %646
  %v648 = vsel %vm491, %v453, 0.0
  %649 = vadd.xlane.f32.xlu0 %v648
  %v650 = vpop.xlane.xlu0 %649
  %v651 = vsel %vm491, %v456, 0.0
  %652 = vadd.xlane.f32.xlu0 %v651
  %v653 = vpop.xlane.xlu0 %652
  %v654 = vsel %vm491, %v459, 0.0
  %655 = vadd.xlane.f32.xlu0 %v654
  %v656 = vpop.xlane.xlu0 %655
  %v657 = vsel %vm491, %v462, 0.0
  %658 = vadd.xlane.f32.xlu0 %v657
  %v659 = vpop.xlane.xlu0 %658
  %v660 = vsel %vm491, %v465, 0.0
  %661 = vadd.xlane.f32.xlu0 %v660
  %v662 = vpop.xlane.xlu0 %661
  %v663 = vsel %vm491, %v468, 0.0
  %664 = vadd.xlane.f32.xlu0 %v663
  %v665 = vpop.xlane.xlu0 %664
  %v666 = vsel %vm491, %v471, 0.0
  %667 = vadd.xlane.f32.xlu0 %v666
  %v668 = vpop.xlane.xlu0 %667
  %v669 = vsel %vm491, %v474, 0.0
  %670 = vadd.xlane.f32.xlu0 %v669
  %v671 = vpop.xlane.xlu0 %670
  %v672 = vsel %vm491, %v477, 0.0
  %673 = vadd.xlane.f32.xlu0 %v672
  %v674 = vpop.xlane.xlu0 %673
  %v675 = vsel %vm491, %v480, 0.0
  %676 = vadd.xlane.f32.xlu0 %v675
  %v677 = vpop.xlane.xlu0 %676
  %v678 = vsel %vm491, %v483, 0.0
  %679 = vadd.xlane.f32.xlu0 %v678
  %v680 = vpop.xlane.xlu0 %679
  %v681 = vsel %vm491, %v486, 0.0
  %682 = vadd.xlane.f32.xlu0 %v681
  %v683 = vpop.xlane.xlu0 %682
  %v684 = vmul.f32 %v494, 0.5
  %v685 = vmul.f32 %v497, 0.5
  %v686 = vmul.f32 %v500, 0.5
  %v687 = vmul.f32 %v503, 0.5
  %v688 = vmul.f32 %v506, 0.5
  %v689 = vmul.f32 %v509, 0.5
  %v690 = vmul.f32 %v512, 0.5
  %v691 = vmul.f32 %v515, 0.5
  %v692 = vmul.f32 %v518, 0.5
  %v693 = vmul.f32 %v521, 0.5
  %v694 = vmul.f32 %v524, 0.5
  %v695 = vmul.f32 %v527, 0.5
  %v696 = vmul.f32 %v530, 0.5
  %v697 = vmul.f32 %v533, 0.5
  %v698 = vmul.f32 %v536, 0.5
  %v699 = vmul.f32 %v539, 0.5
  %v700 = vmul.f32 %v542, 0.5
  %v701 = vmul.f32 %v545, 0.5
  %v702 = vmul.f32 %v548, 0.5
  %v703 = vmul.f32 %v551, 0.5
  %v704 = vmul.f32 %v554, 0.5
  %v705 = vmul.f32 %v557, 0.5
  %v706 = vmul.f32 %v560, 0.5
  %v707 = vmul.f32 %v563, 0.5
  %v708 = vmul.f32 %v566, 0.5
  %v709 = vmul.f32 %v569, 0.5
  %v710 = vmul.f32 %v572, 0.5
  %v711 = vmul.f32 %v575, 0.5
  %v712 = vmul.f32 %v578, 0.5
  %v713 = vmul.f32 %v581, 0.5
  %v714 = vmul.f32 %v584, 0.5
  %v715 = vmul.f32 %v587, 0.5
  %v716 = vmul.f32 %v590, 0.5
  %v717 = vmul.f32 %v593, 0.5
  %v718 = vmul.f32 %v596, 0.5
  %v719 = vmul.f32 %v599, 0.5
  %v720 = vmul.f32 %v602, 0.5
  %v721 = vmul.f32 %v605, 0.5
  %v722 = vmul.f32 %v608, 0.5
  %v723 = vmul.f32 %v611, 0.5
  %v724 = vmul.f32 %v614, 0.5
  %v725 = vmul.f32 %v617, 0.5
  %v726 = vmul.f32 %v620, 0.5
  %v727 = vmul.f32 %v623, 0.5
  %v728 = vmul.f32 %v626, 0.5
  %v729 = vmul.f32 %v629, 0.5
  %v730 = vmul.f32 %v632, 0.5
  %v731 = vmul.f32 %v635, 0.5
  %v732 = vmul.f32 %v638, 0.5
  %v733 = vmul.f32 %v641, 0.5
  %v734 = vmul.f32 %v644, 0.5
  %v735 = vmul.f32 %v647, 0.5
  %v736 = vmul.f32 %v650, 0.5
  %v737 = vmul.f32 %v653, 0.5
  %v738 = vmul.f32 %v656, 0.5
  %v739 = vmul.f32 %v659, 0.5
  %v740 = vmul.f32 %v662, 0.5
  %v741 = vmul.f32 %v665, 0.5
  %v742 = vmul.f32 %v668, 0.5
  %v743 = vmul.f32 %v671, 0.5
  %v744 = vmul.f32 %v674, 0.5
  %v745 = vmul.f32 %v677, 0.5
  %v746 = vmul.f32 %v680, 0.5
  %v747 = vmul.f32 %v683, 0.5
  %812 = vrot.lane.b32.xlu0 %v297, 126
  %v813 = vpop.permute.xlu0 %812
  %814 = vrot.lane.b32.xlu0 %v300, 126
  %v815 = vpop.permute.xlu0 %814
  %816 = vrot.lane.b32.xlu0 %v303, 126
  %v817 = vpop.permute.xlu0 %816
  %818 = vrot.lane.b32.xlu0 %v306, 126
  %v819 = vpop.permute.xlu0 %818
  %820 = vrot.lane.b32.xlu0 %v309, 126
  %v821 = vpop.permute.xlu0 %820
  %822 = vrot.lane.b32.xlu0 %v312, 126
  %v823 = vpop.permute.xlu0 %822
  %824 = vrot.lane.b32.xlu0 %v315, 126
  %v825 = vpop.permute.xlu0 %824
  %826 = vrot.lane.b32.xlu0 %v318, 126
  %v827 = vpop.permute.xlu0 %826
  %828 = vrot.lane.b32.xlu0 %v321, 126
  %v829 = vpop.permute.xlu0 %828
  %830 = vrot.lane.b32.xlu0 %v324, 126
  %v831 = vpop.permute.xlu0 %830
  %832 = vrot.lane.b32.xlu0 %v327, 126
  %v833 = vpop.permute.xlu0 %832
  %834 = vrot.lane.b32.xlu0 %v330, 126
  %v835 = vpop.permute.xlu0 %834
  %836 = vrot.lane.b32.xlu0 %v333, 126
  %v837 = vpop.permute.xlu0 %836
  %838 = vrot.lane.b32.xlu0 %v336, 126
  %v839 = vpop.permute.xlu0 %838
  %840 = vrot.lane.b32.xlu0 %v339, 126
  %v841 = vpop.permute.xlu0 %840
  %842 = vrot.lane.b32.xlu0 %v342, 126
  %v843 = vpop.permute.xlu0 %842
  %844 = vrot.lane.b32.xlu0 %v345, 126
  %v845 = vpop.permute.xlu0 %844
  %846 = vrot.lane.b32.xlu0 %v348, 126
  %v847 = vpop.permute.xlu0 %846
  %848 = vrot.lane.b32.xlu0 %v351, 126
  %v849 = vpop.permute.xlu0 %848
  %850 = vrot.lane.b32.xlu0 %v354, 126
  %v851 = vpop.permute.xlu0 %850
  %852 = vrot.lane.b32.xlu0 %v357, 126
  %v853 = vpop.permute.xlu0 %852
  %854 = vrot.lane.b32.xlu0 %v360, 126
  %v855 = vpop.permute.xlu0 %854
  %856 = vrot.lane.b32.xlu0 %v363, 126
  %v857 = vpop.permute.xlu0 %856
  %858 = vrot.lane.b32.xlu0 %v366, 126
  %v859 = vpop.permute.xlu0 %858
  %860 = vrot.lane.b32.xlu0 %v369, 126
  %v861 = vpop.permute.xlu0 %860
  %862 = vrot.lane.b32.xlu0 %v372, 126
  %v863 = vpop.permute.xlu0 %862
  %864 = vrot.lane.b32.xlu0 %v375, 126
  %v865 = vpop.permute.xlu0 %864
  %866 = vrot.lane.b32.xlu0 %v378, 126
  %v867 = vpop.permute.xlu0 %866
  %868 = vrot.lane.b32.xlu0 %v381, 126
  %v869 = vpop.permute.xlu0 %868
  %870 = vrot.lane.b32.xlu0 %v384, 126
  %v871 = vpop.permute.xlu0 %870
  %872 = vrot.lane.b32.xlu0 %v387, 126
  %v873 = vpop.permute.xlu0 %872
  %874 = vrot.lane.b32.xlu0 %v390, 126
  %v875 = vpop.permute.xlu0 %874
  %876 = vrot.lane.b32.xlu0 %v393, 126
  %v877 = vpop.permute.xlu0 %876
  %878 = vrot.lane.b32.xlu0 %v396, 126
  %v879 = vpop.permute.xlu0 %878
  %880 = vrot.lane.b32.xlu0 %v399, 126
  %v881 = vpop.permute.xlu0 %880
  %882 = vrot.lane.b32.xlu0 %v402, 126
  %v883 = vpop.permute.xlu0 %882
  %884 = vrot.lane.b32.xlu0 %v405, 126
  %v885 = vpop.permute.xlu0 %884
  %886 = vrot.lane.b32.xlu0 %v408, 126
  %v887 = vpop.permute.xlu0 %886
  %888 = vrot.lane.b32.xlu0 %v411, 126
  %v889 = vpop.permute.xlu0 %888
  %890 = vrot.lane.b32.xlu0 %v414, 126
  %v891 = vpop.permute.xlu0 %890
  %892 = vrot.lane.b32.xlu0 %v417, 126
  %v893 = vpop.permute.xlu0 %892
  %894 = vrot.lane.b32.xlu0 %v420, 126
  %v895 = vpop.permute.xlu0 %894
  %896 = vrot.lane.b32.xlu0 %v423, 126
  %v897 = vpop.permute.xlu0 %896
  %898 = vrot.lane.b32.xlu0 %v426, 126
  %v899 = vpop.permute.xlu0 %898
  %900 = vrot.lane.b32.xlu0 %v429, 126
  %v901 = vpop.permute.xlu0 %900
  %902 = vrot.lane.b32.xlu0 %v432, 126
  %v903 = vpop.permute.xlu0 %902
  %904 = vrot.lane.b32.xlu0 %v435, 126
  %v905 = vpop.permute.xlu0 %904
  %906 = vrot.lane.b32.xlu0 %v438, 126
  %v907 = vpop.permute.xlu0 %906
  %908 = vrot.lane.b32.xlu0 %v441, 126
  %v909 = vpop.permute.xlu0 %908
  %910 = vrot.lane.b32.xlu0 %v444, 126
  %v911 = vpop.permute.xlu0 %910
  %912 = vrot.lane.b32.xlu0 %v447, 126
  %v913 = vpop.permute.xlu0 %912
  %914 = vrot.lane.b32.xlu0 %v450, 126
  %v915 = vpop.permute.xlu0 %914
  %916 = vrot.lane.b32.xlu0 %v453, 126
  %v917 = vpop.permute.xlu0 %916
  %918 = vrot.lane.b32.xlu0 %v456, 126
  %v919 = vpop.permute.xlu0 %918
  %920 = vrot.lane.b32.xlu0 %v459, 126
  %v921 = vpop.permute.xlu0 %920
  %922 = vrot.lane.b32.xlu0 %v462, 126
  %v923 = vpop.permute.xlu0 %922
  %924 = vrot.lane.b32.xlu0 %v465, 126
  %v925 = vpop.permute.xlu0 %924
  %926 = vrot.lane.b32.xlu0 %v468, 126
  %v927 = vpop.permute.xlu0 %926
  %928 = vrot.lane.b32.xlu0 %v471, 126
  %v929 = vpop.permute.xlu0 %928
  %930 = vrot.lane.b32.xlu0 %v474, 126
  %v931 = vpop.permute.xlu0 %930
  %932 = vrot.lane.b32.xlu0 %v477, 126
  %v933 = vpop.permute.xlu0 %932
  %934 = vrot.lane.b32.xlu0 %v480, 126
  %v935 = vpop.permute.xlu0 %934
  %936 = vrot.lane.b32.xlu0 %v483, 126
  %v937 = vpop.permute.xlu0 %936
  %938 = vrot.lane.b32.xlu0 %v486, 126
  %v939 = vpop.permute.xlu0 %938
  %v1004 = vsel %vm491, %v813, 0.0
  %1005 = vadd.xlane.f32.xlu0 %v1004
  %v1006 = vpop.xlane.xlu0 %1005
  %v1007 = vsel %vm491, %v815, 0.0
  %1008 = vadd.xlane.f32.xlu0 %v1007
  %v1009 = vpop.xlane.xlu0 %1008
  %v1010 = vsel %vm491, %v817, 0.0
  %1011 = vadd.xlane.f32.xlu0 %v1010
  %v1012 = vpop.xlane.xlu0 %1011
  %v1013 = vsel %vm491, %v819, 0.0
  %1014 = vadd.xlane.f32.xlu0 %v1013
  %v1015 = vpop.xlane.xlu0 %1014
  %v1016 = vsel %vm491, %v821, 0.0
  %1017 = vadd.xlane.f32.xlu0 %v1016
  %v1018 = vpop.xlane.xlu0 %1017
  %v1019 = vsel %vm491, %v823, 0.0
  %1020 = vadd.xlane.f32.xlu0 %v1019
  %v1021 = vpop.xlane.xlu0 %1020
  %v1022 = vsel %vm491, %v825, 0.0
  %1023 = vadd.xlane.f32.xlu0 %v1022
  %v1024 = vpop.xlane.xlu0 %1023
  %v1025 = vsel %vm491, %v827, 0.0
  %1026 = vadd.xlane.f32.xlu0 %v1025
  %v1027 = vpop.xlane.xlu0 %1026
  %v1028 = vsel %vm491, %v829, 0.0
  %1029 = vadd.xlane.f32.xlu0 %v1028
  %v1030 = vpop.xlane.xlu0 %1029
  %v1031 = vsel %vm491, %v831, 0.0
  %1032 = vadd.xlane.f32.xlu0 %v1031
  %v1033 = vpop.xlane.xlu0 %1032
  %v1034 = vsel %vm491, %v833, 0.0
  %1035 = vadd.xlane.f32.xlu0 %v1034
  %v1036 = vpop.xlane.xlu0 %1035
  %v1037 = vsel %vm491, %v835, 0.0
  %1038 = vadd.xlane.f32.xlu0 %v1037
  %v1039 = vpop.xlane.xlu0 %1038
  %v1040 = vsel %vm491, %v837, 0.0
  %1041 = vadd.xlane.f32.xlu0 %v1040
  %v1042 = vpop.xlane.xlu0 %1041
  %v1043 = vsel %vm491, %v839, 0.0
  %1044 = vadd.xlane.f32.xlu0 %v1043
  %v1045 = vpop.xlane.xlu0 %1044
  %v1046 = vsel %vm491, %v841, 0.0
  %1047 = vadd.xlane.f32.xlu0 %v1046
  %v1048 = vpop.xlane.xlu0 %1047
  %v1049 = vsel %vm491, %v843, 0.0
  %1050 = vadd.xlane.f32.xlu0 %v1049
  %v1051 = vpop.xlane.xlu0 %1050
  %v1052 = vsel %vm491, %v845, 0.0
  %1053 = vadd.xlane.f32.xlu0 %v1052
  %v1054 = vpop.xlane.xlu0 %1053
  %v1055 = vsel %vm491, %v847, 0.0
  %1056 = vadd.xlane.f32.xlu0 %v1055
  %v1057 = vpop.xlane.xlu0 %1056
  %v1058 = vsel %vm491, %v849, 0.0
  %1059 = vadd.xlane.f32.xlu0 %v1058
  %v1060 = vpop.xlane.xlu0 %1059
  %v1061 = vsel %vm491, %v851, 0.0
  %1062 = vadd.xlane.f32.xlu0 %v1061
  %v1063 = vpop.xlane.xlu0 %1062
  %v1064 = vsel %vm491, %v853, 0.0
  %1065 = vadd.xlane.f32.xlu0 %v1064
  %v1066 = vpop.xlane.xlu0 %1065
  %v1067 = vsel %vm491, %v855, 0.0
  %1068 = vadd.xlane.f32.xlu0 %v1067
  %v1069 = vpop.xlane.xlu0 %1068
  %v1070 = vsel %vm491, %v857, 0.0
  %1071 = vadd.xlane.f32.xlu0 %v1070
  %v1072 = vpop.xlane.xlu0 %1071
  %v1073 = vsel %vm491, %v859, 0.0
  %1074 = vadd.xlane.f32.xlu0 %v1073
  %v1075 = vpop.xlane.xlu0 %1074
  %v1076 = vsel %vm491, %v861, 0.0
  %1077 = vadd.xlane.f32.xlu0 %v1076
  %v1078 = vpop.xlane.xlu0 %1077
  %v1079 = vsel %vm491, %v863, 0.0
  %1080 = vadd.xlane.f32.xlu0 %v1079
  %v1081 = vpop.xlane.xlu0 %1080
  %v1082 = vsel %vm491, %v865, 0.0
  %1083 = vadd.xlane.f32.xlu0 %v1082
  %v1084 = vpop.xlane.xlu0 %1083
  %v1085 = vsel %vm491, %v867, 0.0
  %1086 = vadd.xlane.f32.xlu0 %v1085
  %v1087 = vpop.xlane.xlu0 %1086
  %v1088 = vsel %vm491, %v869, 0.0
  %1089 = vadd.xlane.f32.xlu0 %v1088
  %v1090 = vpop.xlane.xlu0 %1089
  %v1091 = vsel %vm491, %v871, 0.0
  %1092 = vadd.xlane.f32.xlu0 %v1091
  %v1093 = vpop.xlane.xlu0 %1092
  %v1094 = vsel %vm491, %v873, 0.0
  %1095 = vadd.xlane.f32.xlu0 %v1094
  %v1096 = vpop.xlane.xlu0 %1095
  %v1097 = vsel %vm491, %v875, 0.0
  %1098 = vadd.xlane.f32.xlu0 %v1097
  %v1099 = vpop.xlane.xlu0 %1098
  %v1100 = vsel %vm491, %v877, 0.0
  %1101 = vadd.xlane.f32.xlu0 %v1100
  %v1102 = vpop.xlane.xlu0 %1101
  %v1103 = vsel %vm491, %v879, 0.0
  %1104 = vadd.xlane.f32.xlu0 %v1103
  %v1105 = vpop.xlane.xlu0 %1104
  %v1106 = vsel %vm491, %v881, 0.0
  %1107 = vadd.xlane.f32.xlu0 %v1106
  %v1108 = vpop.xlane.xlu0 %1107
  %v1109 = vsel %vm491, %v883, 0.0
  %1110 = vadd.xlane.f32.xlu0 %v1109
  %v1111 = vpop.xlane.xlu0 %1110
  %v1112 = vsel %vm491, %v885, 0.0
  %1113 = vadd.xlane.f32.xlu0 %v1112
  %v1114 = vpop.xlane.xlu0 %1113
  %v1115 = vsel %vm491, %v887, 0.0
  %1116 = vadd.xlane.f32.xlu0 %v1115
  %v1117 = vpop.xlane.xlu0 %1116
  %v1118 = vsel %vm491, %v889, 0.0
  %1119 = vadd.xlane.f32.xlu0 %v1118
  %v1120 = vpop.xlane.xlu0 %1119
  %v1121 = vsel %vm491, %v891, 0.0
  %1122 = vadd.xlane.f32.xlu0 %v1121
  %v1123 = vpop.xlane.xlu0 %1122
  %v1124 = vsel %vm491, %v893, 0.0
  %1125 = vadd.xlane.f32.xlu0 %v1124
  %v1126 = vpop.xlane.xlu0 %1125
  %v1127 = vsel %vm491, %v895, 0.0
  %1128 = vadd.xlane.f32.xlu0 %v1127
  %v1129 = vpop.xlane.xlu0 %1128
  %v1130 = vsel %vm491, %v897, 0.0
  %1131 = vadd.xlane.f32.xlu0 %v1130
  %v1132 = vpop.xlane.xlu0 %1131
  %v1133 = vsel %vm491, %v899, 0.0
  %1134 = vadd.xlane.f32.xlu0 %v1133
  %v1135 = vpop.xlane.xlu0 %1134
  %v1136 = vsel %vm491, %v901, 0.0
  %1137 = vadd.xlane.f32.xlu0 %v1136
  %v1138 = vpop.xlane.xlu0 %1137
  %v1139 = vsel %vm491, %v903, 0.0
  %1140 = vadd.xlane.f32.xlu0 %v1139
  %v1141 = vpop.xlane.xlu0 %1140
  %v1142 = vsel %vm491, %v905, 0.0
  %1143 = vadd.xlane.f32.xlu0 %v1142
  %v1144 = vpop.xlane.xlu0 %1143
  %v1145 = vsel %vm491, %v907, 0.0
  %1146 = vadd.xlane.f32.xlu0 %v1145
  %v1147 = vpop.xlane.xlu0 %1146
  %v1148 = vsel %vm491, %v909, 0.0
  %1149 = vadd.xlane.f32.xlu0 %v1148
  %v1150 = vpop.xlane.xlu0 %1149
  %v1151 = vsel %vm491, %v911, 0.0
  %1152 = vadd.xlane.f32.xlu0 %v1151
  %v1153 = vpop.xlane.xlu0 %1152
  %v1154 = vsel %vm491, %v913, 0.0
  %1155 = vadd.xlane.f32.xlu0 %v1154
  %v1156 = vpop.xlane.xlu0 %1155
  %v1157 = vsel %vm491, %v915, 0.0
  %1158 = vadd.xlane.f32.xlu0 %v1157
  %v1159 = vpop.xlane.xlu0 %1158
  %v1160 = vsel %vm491, %v917, 0.0
  %1161 = vadd.xlane.f32.xlu0 %v1160
  %v1162 = vpop.xlane.xlu0 %1161
  %v1163 = vsel %vm491, %v919, 0.0
  %1164 = vadd.xlane.f32.xlu0 %v1163
  %v1165 = vpop.xlane.xlu0 %1164
  %v1166 = vsel %vm491, %v921, 0.0
  %1167 = vadd.xlane.f32.xlu0 %v1166
  %v1168 = vpop.xlane.xlu0 %1167
  %v1169 = vsel %vm491, %v923, 0.0
  %1170 = vadd.xlane.f32.xlu0 %v1169
  %v1171 = vpop.xlane.xlu0 %1170
  %v1172 = vsel %vm491, %v925, 0.0
  %1173 = vadd.xlane.f32.xlu0 %v1172
  %v1174 = vpop.xlane.xlu0 %1173
  %v1175 = vsel %vm491, %v927, 0.0
  %1176 = vadd.xlane.f32.xlu0 %v1175
  %v1177 = vpop.xlane.xlu0 %1176
  %v1178 = vsel %vm491, %v929, 0.0
  %1179 = vadd.xlane.f32.xlu0 %v1178
  %v1180 = vpop.xlane.xlu0 %1179
  %v1181 = vsel %vm491, %v931, 0.0
  %1182 = vadd.xlane.f32.xlu0 %v1181
  %v1183 = vpop.xlane.xlu0 %1182
  %v1184 = vsel %vm491, %v933, 0.0
  %1185 = vadd.xlane.f32.xlu0 %v1184
  %v1186 = vpop.xlane.xlu0 %1185
  %v1187 = vsel %vm491, %v935, 0.0
  %1188 = vadd.xlane.f32.xlu0 %v1187
  %v1189 = vpop.xlane.xlu0 %1188
  %v1190 = vsel %vm491, %v937, 0.0
  %1191 = vadd.xlane.f32.xlu0 %v1190
  %v1192 = vpop.xlane.xlu0 %1191
  %v1193 = vsel %vm491, %v939, 0.0
  %1194 = vadd.xlane.f32.xlu0 %v1193
  %v1195 = vpop.xlane.xlu0 %1194
  %v1196 = vmul.f32 %v1006, 0.5
  %v1197 = vmul.f32 %v1009, 0.5
  %v1198 = vmul.f32 %v1012, 0.5
  %v1199 = vmul.f32 %v1015, 0.5
  %v1200 = vmul.f32 %v1018, 0.5
  %v1201 = vmul.f32 %v1021, 0.5
  %v1202 = vmul.f32 %v1024, 0.5
  %v1203 = vmul.f32 %v1027, 0.5
  %v1204 = vmul.f32 %v1030, 0.5
  %v1205 = vmul.f32 %v1033, 0.5
  %v1206 = vmul.f32 %v1036, 0.5
  %v1207 = vmul.f32 %v1039, 0.5
  %v1208 = vmul.f32 %v1042, 0.5
  %v1209 = vmul.f32 %v1045, 0.5
  %v1210 = vmul.f32 %v1048, 0.5
  %v1211 = vmul.f32 %v1051, 0.5
  %v1212 = vmul.f32 %v1054, 0.5
  %v1213 = vmul.f32 %v1057, 0.5
  %v1214 = vmul.f32 %v1060, 0.5
  %v1215 = vmul.f32 %v1063, 0.5
  %v1216 = vmul.f32 %v1066, 0.5
  %v1217 = vmul.f32 %v1069, 0.5
  %v1218 = vmul.f32 %v1072, 0.5
  %v1219 = vmul.f32 %v1075, 0.5
  %v1220 = vmul.f32 %v1078, 0.5
  %v1221 = vmul.f32 %v1081, 0.5
  %v1222 = vmul.f32 %v1084, 0.5
  %v1223 = vmul.f32 %v1087, 0.5
  %v1224 = vmul.f32 %v1090, 0.5
  %v1225 = vmul.f32 %v1093, 0.5
  %v1226 = vmul.f32 %v1096, 0.5
  %v1227 = vmul.f32 %v1099, 0.5
  %v1228 = vmul.f32 %v1102, 0.5
  %v1229 = vmul.f32 %v1105, 0.5
  %v1230 = vmul.f32 %v1108, 0.5
  %v1231 = vmul.f32 %v1111, 0.5
  %v1232 = vmul.f32 %v1114, 0.5
  %v1233 = vmul.f32 %v1117, 0.5
  %v1234 = vmul.f32 %v1120, 0.5
  %v1235 = vmul.f32 %v1123, 0.5
  %v1236 = vmul.f32 %v1126, 0.5
  %v1237 = vmul.f32 %v1129, 0.5
  %v1238 = vmul.f32 %v1132, 0.5
  %v1239 = vmul.f32 %v1135, 0.5
  %v1240 = vmul.f32 %v1138, 0.5
  %v1241 = vmul.f32 %v1141, 0.5
  %v1242 = vmul.f32 %v1144, 0.5
  %v1243 = vmul.f32 %v1147, 0.5
  %v1244 = vmul.f32 %v1150, 0.5
  %v1245 = vmul.f32 %v1153, 0.5
  %v1246 = vmul.f32 %v1156, 0.5
  %v1247 = vmul.f32 %v1159, 0.5
  %v1248 = vmul.f32 %v1162, 0.5
  %v1249 = vmul.f32 %v1165, 0.5
  %v1250 = vmul.f32 %v1168, 0.5
  %v1251 = vmul.f32 %v1171, 0.5
  %v1252 = vmul.f32 %v1174, 0.5
  %v1253 = vmul.f32 %v1177, 0.5
  %v1254 = vmul.f32 %v1180, 0.5
  %v1255 = vmul.f32 %v1183, 0.5
  %v1256 = vmul.f32 %v1186, 0.5
  %v1257 = vmul.f32 %v1189, 0.5
  %v1258 = vmul.f32 %v1192, 0.5
  %v1259 = vmul.f32 %v1195, 0.5
  %v1260 = vsel %vm490, %v684, %v1196
  %v1261 = vsel %vm490, %v685, %v1197
  %v1262 = vsel %vm490, %v686, %v1198
  %v1263 = vsel %vm490, %v687, %v1199
  %v1264 = vsel %vm490, %v688, %v1200
  %v1265 = vsel %vm490, %v689, %v1201
  %v1266 = vsel %vm490, %v690, %v1202
  %v1267 = vsel %vm490, %v691, %v1203
  %v1268 = vsel %vm490, %v692, %v1204
  %v1269 = vsel %vm490, %v693, %v1205
  %v1270 = vsel %vm490, %v694, %v1206
  %v1271 = vsel %vm490, %v695, %v1207
  %v1272 = vsel %vm490, %v696, %v1208
  %v1273 = vsel %vm490, %v697, %v1209
  %v1274 = vsel %vm490, %v698, %v1210
  %v1275 = vsel %vm490, %v699, %v1211
  %v1276 = vsel %vm490, %v700, %v1212
  %v1277 = vsel %vm490, %v701, %v1213
  %v1278 = vsel %vm490, %v702, %v1214
  %v1279 = vsel %vm490, %v703, %v1215
  %v1280 = vsel %vm490, %v704, %v1216
  %v1281 = vsel %vm490, %v705, %v1217
  %v1282 = vsel %vm490, %v706, %v1218
  %v1283 = vsel %vm490, %v707, %v1219
  %v1284 = vsel %vm490, %v708, %v1220
  %v1285 = vsel %vm490, %v709, %v1221
  %v1286 = vsel %vm490, %v710, %v1222
  %v1287 = vsel %vm490, %v711, %v1223
  %v1288 = vsel %vm490, %v712, %v1224
  %v1289 = vsel %vm490, %v713, %v1225
  %v1290 = vsel %vm490, %v714, %v1226
  %v1291 = vsel %vm490, %v715, %v1227
  %v1292 = vsel %vm490, %v716, %v1228
  %v1293 = vsel %vm490, %v717, %v1229
  %v1294 = vsel %vm490, %v718, %v1230
  %v1295 = vsel %vm490, %v719, %v1231
  %v1296 = vsel %vm490, %v720, %v1232
  %v1297 = vsel %vm490, %v721, %v1233
  %v1298 = vsel %vm490, %v722, %v1234
  %v1299 = vsel %vm490, %v723, %v1235
  %v1300 = vsel %vm490, %v724, %v1236
  %v1301 = vsel %vm490, %v725, %v1237
  %v1302 = vsel %vm490, %v726, %v1238
  %v1303 = vsel %vm490, %v727, %v1239
  %v1304 = vsel %vm490, %v728, %v1240
  %v1305 = vsel %vm490, %v729, %v1241
  %v1306 = vsel %vm490, %v730, %v1242
  %v1307 = vsel %vm490, %v731, %v1243
  %v1308 = vsel %vm490, %v732, %v1244
  %v1309 = vsel %vm490, %v733, %v1245
  %v1310 = vsel %vm490, %v734, %v1246
  %v1311 = vsel %vm490, %v735, %v1247
  %v1312 = vsel %vm490, %v736, %v1248
  %v1313 = vsel %vm490, %v737, %v1249
  %v1314 = vsel %vm490, %v738, %v1250
  %v1315 = vsel %vm490, %v739, %v1251
  %v1316 = vsel %vm490, %v740, %v1252
  %v1317 = vsel %vm490, %v741, %v1253
  %v1318 = vsel %vm490, %v742, %v1254
  %v1319 = vsel %vm490, %v743, %v1255
  %v1320 = vsel %vm490, %v744, %v1256
  %v1321 = vsel %vm490, %v745, %v1257
  %v1322 = vsel %vm490, %v746, %v1258
  %v1323 = vsel %vm490, %v747, %v1259
  %v1324 = vsub.f32 %v297, %v1260
  %v1325 = vsub.f32 %v300, %v1261
  %v1326 = vsub.f32 %v303, %v1262
  %v1327 = vsub.f32 %v306, %v1263
  %v1328 = vsub.f32 %v309, %v1264
  %v1329 = vsub.f32 %v312, %v1265
  %v1330 = vsub.f32 %v315, %v1266
  %v1331 = vsub.f32 %v318, %v1267
  %v1332 = vsub.f32 %v321, %v1268
  %v1333 = vsub.f32 %v324, %v1269
  %v1334 = vsub.f32 %v327, %v1270
  %v1335 = vsub.f32 %v330, %v1271
  %v1336 = vsub.f32 %v333, %v1272
  %v1337 = vsub.f32 %v336, %v1273
  %v1338 = vsub.f32 %v339, %v1274
  %v1339 = vsub.f32 %v342, %v1275
  %v1340 = vsub.f32 %v345, %v1276
  %v1341 = vsub.f32 %v348, %v1277
  %v1342 = vsub.f32 %v351, %v1278
  %v1343 = vsub.f32 %v354, %v1279
  %v1344 = vsub.f32 %v357, %v1280
  %v1345 = vsub.f32 %v360, %v1281
  %v1346 = vsub.f32 %v363, %v1282
  %v1347 = vsub.f32 %v366, %v1283
  %v1348 = vsub.f32 %v369, %v1284
  %v1349 = vsub.f32 %v372, %v1285
  %v1350 = vsub.f32 %v375, %v1286
  %v1351 = vsub.f32 %v378, %v1287
  %v1352 = vsub.f32 %v381, %v1288
  %v1353 = vsub.f32 %v384, %v1289
  %v1354 = vsub.f32 %v387, %v1290
  %v1355 = vsub.f32 %v390, %v1291
  %v1356 = vsub.f32 %v393, %v1292
  %v1357 = vsub.f32 %v396, %v1293
  %v1358 = vsub.f32 %v399, %v1294
  %v1359 = vsub.f32 %v402, %v1295
  %v1360 = vsub.f32 %v405, %v1296
  %v1361 = vsub.f32 %v408, %v1297
  %v1362 = vsub.f32 %v411, %v1298
  %v1363 = vsub.f32 %v414, %v1299
  %v1364 = vsub.f32 %v417, %v1300
  %v1365 = vsub.f32 %v420, %v1301
  %v1366 = vsub.f32 %v423, %v1302
  %v1367 = vsub.f32 %v426, %v1303
  %v1368 = vsub.f32 %v429, %v1304
  %v1369 = vsub.f32 %v432, %v1305
  %v1370 = vsub.f32 %v435, %v1306
  %v1371 = vsub.f32 %v438, %v1307
  %v1372 = vsub.f32 %v441, %v1308
  %v1373 = vsub.f32 %v444, %v1309
  %v1374 = vsub.f32 %v447, %v1310
  %v1375 = vsub.f32 %v450, %v1311
  %v1376 = vsub.f32 %v453, %v1312
  %v1377 = vsub.f32 %v456, %v1313
  %v1378 = vsub.f32 %v459, %v1314
  %v1379 = vsub.f32 %v462, %v1315
  %v1380 = vsub.f32 %v465, %v1316
  %v1381 = vsub.f32 %v468, %v1317
  %v1382 = vsub.f32 %v471, %v1318
  %v1383 = vsub.f32 %v474, %v1319
  %v1384 = vsub.f32 %v477, %v1320
  %v1385 = vsub.f32 %v480, %v1321
  %v1386 = vsub.f32 %v483, %v1322
  %v1387 = vsub.f32 %v486, %v1323
  %v1388 = vmul.f32 %v1324, %v1324
  %v1389 = vmul.f32 %v1325, %v1325
  %v1390 = vmul.f32 %v1326, %v1326
  %v1391 = vmul.f32 %v1327, %v1327
  %v1392 = vmul.f32 %v1328, %v1328
  %v1393 = vmul.f32 %v1329, %v1329
  %v1394 = vmul.f32 %v1330, %v1330
  %v1395 = vmul.f32 %v1331, %v1331
  %v1396 = vmul.f32 %v1332, %v1332
  %v1397 = vmul.f32 %v1333, %v1333
  %v1398 = vmul.f32 %v1334, %v1334
  %v1399 = vmul.f32 %v1335, %v1335
  %v1400 = vmul.f32 %v1336, %v1336
  %v1401 = vmul.f32 %v1337, %v1337
  %v1402 = vmul.f32 %v1338, %v1338
  %v1403 = vmul.f32 %v1339, %v1339
  %v1404 = vmul.f32 %v1340, %v1340
  %v1405 = vmul.f32 %v1341, %v1341
  %v1406 = vmul.f32 %v1342, %v1342
  %v1407 = vmul.f32 %v1343, %v1343
  %v1408 = vmul.f32 %v1344, %v1344
  %v1409 = vmul.f32 %v1345, %v1345
  %v1410 = vmul.f32 %v1346, %v1346
  %v1411 = vmul.f32 %v1347, %v1347
  %v1412 = vmul.f32 %v1348, %v1348
  %v1413 = vmul.f32 %v1349, %v1349
  %v1414 = vmul.f32 %v1350, %v1350
  %v1415 = vmul.f32 %v1351, %v1351
  %v1416 = vmul.f32 %v1352, %v1352
  %v1417 = vmul.f32 %v1353, %v1353
  %v1418 = vmul.f32 %v1354, %v1354
  %v1419 = vmul.f32 %v1355, %v1355
  %v1420 = vmul.f32 %v1356, %v1356
  %v1421 = vmul.f32 %v1357, %v1357
  %v1422 = vmul.f32 %v1358, %v1358
  %v1423 = vmul.f32 %v1359, %v1359
  %v1424 = vmul.f32 %v1360, %v1360
  %v1425 = vmul.f32 %v1361, %v1361
  %v1426 = vmul.f32 %v1362, %v1362
  %v1427 = vmul.f32 %v1363, %v1363
  %v1428 = vmul.f32 %v1364, %v1364
  %v1429 = vmul.f32 %v1365, %v1365
  %v1430 = vmul.f32 %v1366, %v1366
  %v1431 = vmul.f32 %v1367, %v1367
  %v1432 = vmul.f32 %v1368, %v1368
  %v1433 = vmul.f32 %v1369, %v1369
  %v1434 = vmul.f32 %v1370, %v1370
  %v1435 = vmul.f32 %v1371, %v1371
  %v1436 = vmul.f32 %v1372, %v1372
  %v1437 = vmul.f32 %v1373, %v1373
  %v1438 = vmul.f32 %v1374, %v1374
  %v1439 = vmul.f32 %v1375, %v1375
  %v1440 = vmul.f32 %v1376, %v1376
  %v1441 = vmul.f32 %v1377, %v1377
  %v1442 = vmul.f32 %v1378, %v1378
  %v1443 = vmul.f32 %v1379, %v1379
  %v1444 = vmul.f32 %v1380, %v1380
  %v1445 = vmul.f32 %v1381, %v1381
  %v1446 = vmul.f32 %v1382, %v1382
  %v1447 = vmul.f32 %v1383, %v1383
  %v1448 = vmul.f32 %v1384, %v1384
  %v1449 = vmul.f32 %v1385, %v1385
  %v1450 = vmul.f32 %v1386, %v1386
  %v1451 = vmul.f32 %v1387, %v1387
  %v1452 = vsel %vm491, %v1388, 0.0
  %1453 = vadd.xlane.f32.xlu0 %v1452
  %v1454 = vpop.xlane.xlu0 %1453
  %v1455 = vsel %vm491, %v1389, 0.0
  %1456 = vadd.xlane.f32.xlu0 %v1455
  %v1457 = vpop.xlane.xlu0 %1456
  %v1458 = vsel %vm491, %v1390, 0.0
  %1459 = vadd.xlane.f32.xlu0 %v1458
  %v1460 = vpop.xlane.xlu0 %1459
  %v1461 = vsel %vm491, %v1391, 0.0
  %1462 = vadd.xlane.f32.xlu0 %v1461
  %v1463 = vpop.xlane.xlu0 %1462
  %v1464 = vsel %vm491, %v1392, 0.0
  %1465 = vadd.xlane.f32.xlu0 %v1464
  %v1466 = vpop.xlane.xlu0 %1465
  %v1467 = vsel %vm491, %v1393, 0.0
  %1468 = vadd.xlane.f32.xlu0 %v1467
  %v1469 = vpop.xlane.xlu0 %1468
  %v1470 = vsel %vm491, %v1394, 0.0
  %1471 = vadd.xlane.f32.xlu0 %v1470
  %v1472 = vpop.xlane.xlu0 %1471
  %v1473 = vsel %vm491, %v1395, 0.0
  %1474 = vadd.xlane.f32.xlu0 %v1473
  %v1475 = vpop.xlane.xlu0 %1474
  %v1476 = vsel %vm491, %v1396, 0.0
  %1477 = vadd.xlane.f32.xlu0 %v1476
  %v1478 = vpop.xlane.xlu0 %1477
  %v1479 = vsel %vm491, %v1397, 0.0
  %1480 = vadd.xlane.f32.xlu0 %v1479
  %v1481 = vpop.xlane.xlu0 %1480
  %v1482 = vsel %vm491, %v1398, 0.0
  %1483 = vadd.xlane.f32.xlu0 %v1482
  %v1484 = vpop.xlane.xlu0 %1483
  %v1485 = vsel %vm491, %v1399, 0.0
  %1486 = vadd.xlane.f32.xlu0 %v1485
  %v1487 = vpop.xlane.xlu0 %1486
  %v1488 = vsel %vm491, %v1400, 0.0
  %1489 = vadd.xlane.f32.xlu0 %v1488
  %v1490 = vpop.xlane.xlu0 %1489
  %v1491 = vsel %vm491, %v1401, 0.0
  %1492 = vadd.xlane.f32.xlu0 %v1491
  %v1493 = vpop.xlane.xlu0 %1492
  %v1494 = vsel %vm491, %v1402, 0.0
  %1495 = vadd.xlane.f32.xlu0 %v1494
  %v1496 = vpop.xlane.xlu0 %1495
  %v1497 = vsel %vm491, %v1403, 0.0
  %1498 = vadd.xlane.f32.xlu0 %v1497
  %v1499 = vpop.xlane.xlu0 %1498
  %v1500 = vsel %vm491, %v1404, 0.0
  %1501 = vadd.xlane.f32.xlu0 %v1500
  %v1502 = vpop.xlane.xlu0 %1501
  %v1503 = vsel %vm491, %v1405, 0.0
  %1504 = vadd.xlane.f32.xlu0 %v1503
  %v1505 = vpop.xlane.xlu0 %1504
  %v1506 = vsel %vm491, %v1406, 0.0
  %1507 = vadd.xlane.f32.xlu0 %v1506
  %v1508 = vpop.xlane.xlu0 %1507
  %v1509 = vsel %vm491, %v1407, 0.0
  %1510 = vadd.xlane.f32.xlu0 %v1509
  %v1511 = vpop.xlane.xlu0 %1510
  %v1512 = vsel %vm491, %v1408, 0.0
  %1513 = vadd.xlane.f32.xlu0 %v1512
  %v1514 = vpop.xlane.xlu0 %1513
  %v1515 = vsel %vm491, %v1409, 0.0
  %1516 = vadd.xlane.f32.xlu0 %v1515
  %v1517 = vpop.xlane.xlu0 %1516
  %v1518 = vsel %vm491, %v1410, 0.0
  %1519 = vadd.xlane.f32.xlu0 %v1518
  %v1520 = vpop.xlane.xlu0 %1519
  %v1521 = vsel %vm491, %v1411, 0.0
  %1522 = vadd.xlane.f32.xlu0 %v1521
  %v1523 = vpop.xlane.xlu0 %1522
  %v1524 = vsel %vm491, %v1412, 0.0
  %1525 = vadd.xlane.f32.xlu0 %v1524
  %v1526 = vpop.xlane.xlu0 %1525
  %v1527 = vsel %vm491, %v1413, 0.0
  %1528 = vadd.xlane.f32.xlu0 %v1527
  %v1529 = vpop.xlane.xlu0 %1528
  %v1530 = vsel %vm491, %v1414, 0.0
  %1531 = vadd.xlane.f32.xlu0 %v1530
  %v1532 = vpop.xlane.xlu0 %1531
  %v1533 = vsel %vm491, %v1415, 0.0
  %1534 = vadd.xlane.f32.xlu0 %v1533
  %v1535 = vpop.xlane.xlu0 %1534
  %v1536 = vsel %vm491, %v1416, 0.0
  %1537 = vadd.xlane.f32.xlu0 %v1536
  %v1538 = vpop.xlane.xlu0 %1537
  %v1539 = vsel %vm491, %v1417, 0.0
  %1540 = vadd.xlane.f32.xlu0 %v1539
  %v1541 = vpop.xlane.xlu0 %1540
  %v1542 = vsel %vm491, %v1418, 0.0
  %1543 = vadd.xlane.f32.xlu0 %v1542
  %v1544 = vpop.xlane.xlu0 %1543
  %v1545 = vsel %vm491, %v1419, 0.0
  %1546 = vadd.xlane.f32.xlu0 %v1545
  %v1547 = vpop.xlane.xlu0 %1546
  %v1548 = vsel %vm491, %v1420, 0.0
  %1549 = vadd.xlane.f32.xlu0 %v1548
  %v1550 = vpop.xlane.xlu0 %1549
  %v1551 = vsel %vm491, %v1421, 0.0
  %1552 = vadd.xlane.f32.xlu0 %v1551
  %v1553 = vpop.xlane.xlu0 %1552
  %v1554 = vsel %vm491, %v1422, 0.0
  %1555 = vadd.xlane.f32.xlu0 %v1554
  %v1556 = vpop.xlane.xlu0 %1555
  %v1557 = vsel %vm491, %v1423, 0.0
  %1558 = vadd.xlane.f32.xlu0 %v1557
  %v1559 = vpop.xlane.xlu0 %1558
  %v1560 = vsel %vm491, %v1424, 0.0
  %1561 = vadd.xlane.f32.xlu0 %v1560
  %v1562 = vpop.xlane.xlu0 %1561
  %v1563 = vsel %vm491, %v1425, 0.0
  %1564 = vadd.xlane.f32.xlu0 %v1563
  %v1565 = vpop.xlane.xlu0 %1564
  %v1566 = vsel %vm491, %v1426, 0.0
  %1567 = vadd.xlane.f32.xlu0 %v1566
  %v1568 = vpop.xlane.xlu0 %1567
  %v1569 = vsel %vm491, %v1427, 0.0
  %1570 = vadd.xlane.f32.xlu0 %v1569
  %v1571 = vpop.xlane.xlu0 %1570
  %v1572 = vsel %vm491, %v1428, 0.0
  %1573 = vadd.xlane.f32.xlu0 %v1572
  %v1574 = vpop.xlane.xlu0 %1573
  %v1575 = vsel %vm491, %v1429, 0.0
  %1576 = vadd.xlane.f32.xlu0 %v1575
  %v1577 = vpop.xlane.xlu0 %1576
  %v1578 = vsel %vm491, %v1430, 0.0
  %1579 = vadd.xlane.f32.xlu0 %v1578
  %v1580 = vpop.xlane.xlu0 %1579
  %v1581 = vsel %vm491, %v1431, 0.0
  %1582 = vadd.xlane.f32.xlu0 %v1581
  %v1583 = vpop.xlane.xlu0 %1582
  %v1584 = vsel %vm491, %v1432, 0.0
  %1585 = vadd.xlane.f32.xlu0 %v1584
  %v1586 = vpop.xlane.xlu0 %1585
  %v1587 = vsel %vm491, %v1433, 0.0
  %1588 = vadd.xlane.f32.xlu0 %v1587
  %v1589 = vpop.xlane.xlu0 %1588
  %v1590 = vsel %vm491, %v1434, 0.0
  %1591 = vadd.xlane.f32.xlu0 %v1590
  %v1592 = vpop.xlane.xlu0 %1591
  %v1593 = vsel %vm491, %v1435, 0.0
  %1594 = vadd.xlane.f32.xlu0 %v1593
  %v1595 = vpop.xlane.xlu0 %1594
  %v1596 = vsel %vm491, %v1436, 0.0
  %1597 = vadd.xlane.f32.xlu0 %v1596
  %v1598 = vpop.xlane.xlu0 %1597
  %v1599 = vsel %vm491, %v1437, 0.0
  %1600 = vadd.xlane.f32.xlu0 %v1599
  %v1601 = vpop.xlane.xlu0 %1600
  %v1602 = vsel %vm491, %v1438, 0.0
  %1603 = vadd.xlane.f32.xlu0 %v1602
  %v1604 = vpop.xlane.xlu0 %1603
  %v1605 = vsel %vm491, %v1439, 0.0
  %1606 = vadd.xlane.f32.xlu0 %v1605
  %v1607 = vpop.xlane.xlu0 %1606
  %v1608 = vsel %vm491, %v1440, 0.0
  %1609 = vadd.xlane.f32.xlu0 %v1608
  %v1610 = vpop.xlane.xlu0 %1609
  %v1611 = vsel %vm491, %v1441, 0.0
  %1612 = vadd.xlane.f32.xlu0 %v1611
  %v1613 = vpop.xlane.xlu0 %1612
  %v1614 = vsel %vm491, %v1442, 0.0
  %1615 = vadd.xlane.f32.xlu0 %v1614
  %v1616 = vpop.xlane.xlu0 %1615
  %v1617 = vsel %vm491, %v1443, 0.0
  %1618 = vadd.xlane.f32.xlu0 %v1617
  %v1619 = vpop.xlane.xlu0 %1618
  %v1620 = vsel %vm491, %v1444, 0.0
  %1621 = vadd.xlane.f32.xlu0 %v1620
  %v1622 = vpop.xlane.xlu0 %1621
  %v1623 = vsel %vm491, %v1445, 0.0
  %1624 = vadd.xlane.f32.xlu0 %v1623
  %v1625 = vpop.xlane.xlu0 %1624
  %v1626 = vsel %vm491, %v1446, 0.0
  %1627 = vadd.xlane.f32.xlu0 %v1626
  %v1628 = vpop.xlane.xlu0 %1627
  %v1629 = vsel %vm491, %v1447, 0.0
  %1630 = vadd.xlane.f32.xlu0 %v1629
  %v1631 = vpop.xlane.xlu0 %1630
  %v1632 = vsel %vm491, %v1448, 0.0
  %1633 = vadd.xlane.f32.xlu0 %v1632
  %v1634 = vpop.xlane.xlu0 %1633
  %v1635 = vsel %vm491, %v1449, 0.0
  %1636 = vadd.xlane.f32.xlu0 %v1635
  %v1637 = vpop.xlane.xlu0 %1636
  %v1638 = vsel %vm491, %v1450, 0.0
  %1639 = vadd.xlane.f32.xlu0 %v1638
  %v1640 = vpop.xlane.xlu0 %1639
  %v1641 = vsel %vm491, %v1451, 0.0
  %1642 = vadd.xlane.f32.xlu0 %v1641
  %v1643 = vpop.xlane.xlu0 %1642
  %v1644 = vmul.f32 %v1454, 0.5
  %v1645 = vmul.f32 %v1457, 0.5
  %v1646 = vmul.f32 %v1460, 0.5
  %v1647 = vmul.f32 %v1463, 0.5
  %v1648 = vmul.f32 %v1466, 0.5
  %v1649 = vmul.f32 %v1469, 0.5
  %v1650 = vmul.f32 %v1472, 0.5
  %v1651 = vmul.f32 %v1475, 0.5
  %v1652 = vmul.f32 %v1478, 0.5
  %v1653 = vmul.f32 %v1481, 0.5
  %v1654 = vmul.f32 %v1484, 0.5
  %v1655 = vmul.f32 %v1487, 0.5
  %v1656 = vmul.f32 %v1490, 0.5
  %v1657 = vmul.f32 %v1493, 0.5
  %v1658 = vmul.f32 %v1496, 0.5
  %v1659 = vmul.f32 %v1499, 0.5
  %v1660 = vmul.f32 %v1502, 0.5
  %v1661 = vmul.f32 %v1505, 0.5
  %v1662 = vmul.f32 %v1508, 0.5
  %v1663 = vmul.f32 %v1511, 0.5
  %v1664 = vmul.f32 %v1514, 0.5
  %v1665 = vmul.f32 %v1517, 0.5
  %v1666 = vmul.f32 %v1520, 0.5
  %v1667 = vmul.f32 %v1523, 0.5
  %v1668 = vmul.f32 %v1526, 0.5
  %v1669 = vmul.f32 %v1529, 0.5
  %v1670 = vmul.f32 %v1532, 0.5
  %v1671 = vmul.f32 %v1535, 0.5
  %v1672 = vmul.f32 %v1538, 0.5
  %v1673 = vmul.f32 %v1541, 0.5
  %v1674 = vmul.f32 %v1544, 0.5
  %v1675 = vmul.f32 %v1547, 0.5
  %v1676 = vmul.f32 %v1550, 0.5
  %v1677 = vmul.f32 %v1553, 0.5
  %v1678 = vmul.f32 %v1556, 0.5
  %v1679 = vmul.f32 %v1559, 0.5
  %v1680 = vmul.f32 %v1562, 0.5
  %v1681 = vmul.f32 %v1565, 0.5
  %v1682 = vmul.f32 %v1568, 0.5
  %v1683 = vmul.f32 %v1571, 0.5
  %v1684 = vmul.f32 %v1574, 0.5
  %v1685 = vmul.f32 %v1577, 0.5
  %v1686 = vmul.f32 %v1580, 0.5
  %v1687 = vmul.f32 %v1583, 0.5
  %v1688 = vmul.f32 %v1586, 0.5
  %v1689 = vmul.f32 %v1589, 0.5
  %v1690 = vmul.f32 %v1592, 0.5
  %v1691 = vmul.f32 %v1595, 0.5
  %v1692 = vmul.f32 %v1598, 0.5
  %v1693 = vmul.f32 %v1601, 0.5
  %v1694 = vmul.f32 %v1604, 0.5
  %v1695 = vmul.f32 %v1607, 0.5
  %v1696 = vmul.f32 %v1610, 0.5
  %v1697 = vmul.f32 %v1613, 0.5
  %v1698 = vmul.f32 %v1616, 0.5
  %v1699 = vmul.f32 %v1619, 0.5
  %v1700 = vmul.f32 %v1622, 0.5
  %v1701 = vmul.f32 %v1625, 0.5
  %v1702 = vmul.f32 %v1628, 0.5
  %v1703 = vmul.f32 %v1631, 0.5
  %v1704 = vmul.f32 %v1634, 0.5
  %v1705 = vmul.f32 %v1637, 0.5
  %v1706 = vmul.f32 %v1640, 0.5
  %v1707 = vmul.f32 %v1643, 0.5
  %1772 = vrot.lane.b32.xlu0 %v1388, 126
  %v1773 = vpop.permute.xlu0 %1772
  %1774 = vrot.lane.b32.xlu0 %v1389, 126
  %v1775 = vpop.permute.xlu0 %1774
  %1776 = vrot.lane.b32.xlu0 %v1390, 126
  %v1777 = vpop.permute.xlu0 %1776
  %1778 = vrot.lane.b32.xlu0 %v1391, 126
  %v1779 = vpop.permute.xlu0 %1778
  %1780 = vrot.lane.b32.xlu0 %v1392, 126
  %v1781 = vpop.permute.xlu0 %1780
  %1782 = vrot.lane.b32.xlu0 %v1393, 126
  %v1783 = vpop.permute.xlu0 %1782
  %1784 = vrot.lane.b32.xlu0 %v1394, 126
  %v1785 = vpop.permute.xlu0 %1784
  %1786 = vrot.lane.b32.xlu0 %v1395, 126
  %v1787 = vpop.permute.xlu0 %1786
  %1788 = vrot.lane.b32.xlu0 %v1396, 126
  %v1789 = vpop.permute.xlu0 %1788
  %1790 = vrot.lane.b32.xlu0 %v1397, 126
  %v1791 = vpop.permute.xlu0 %1790
  %1792 = vrot.lane.b32.xlu0 %v1398, 126
  %v1793 = vpop.permute.xlu0 %1792
  %1794 = vrot.lane.b32.xlu0 %v1399, 126
  %v1795 = vpop.permute.xlu0 %1794
  %1796 = vrot.lane.b32.xlu0 %v1400, 126
  %v1797 = vpop.permute.xlu0 %1796
  %1798 = vrot.lane.b32.xlu0 %v1401, 126
  %v1799 = vpop.permute.xlu0 %1798
  %1800 = vrot.lane.b32.xlu0 %v1402, 126
  %v1801 = vpop.permute.xlu0 %1800
  %1802 = vrot.lane.b32.xlu0 %v1403, 126
  %v1803 = vpop.permute.xlu0 %1802
  %1804 = vrot.lane.b32.xlu0 %v1404, 126
  %v1805 = vpop.permute.xlu0 %1804
  %1806 = vrot.lane.b32.xlu0 %v1405, 126
  %v1807 = vpop.permute.xlu0 %1806
  %1808 = vrot.lane.b32.xlu0 %v1406, 126
  %v1809 = vpop.permute.xlu0 %1808
  %1810 = vrot.lane.b32.xlu0 %v1407, 126
  %v1811 = vpop.permute.xlu0 %1810
  %1812 = vrot.lane.b32.xlu0 %v1408, 126
  %v1813 = vpop.permute.xlu0 %1812
  %1814 = vrot.lane.b32.xlu0 %v1409, 126
  %v1815 = vpop.permute.xlu0 %1814
  %1816 = vrot.lane.b32.xlu0 %v1410, 126
  %v1817 = vpop.permute.xlu0 %1816
  %1818 = vrot.lane.b32.xlu0 %v1411, 126
  %v1819 = vpop.permute.xlu0 %1818
  %1820 = vrot.lane.b32.xlu0 %v1412, 126
  %v1821 = vpop.permute.xlu0 %1820
  %1822 = vrot.lane.b32.xlu0 %v1413, 126
  %v1823 = vpop.permute.xlu0 %1822
  %1824 = vrot.lane.b32.xlu0 %v1414, 126
  %v1825 = vpop.permute.xlu0 %1824
  %1826 = vrot.lane.b32.xlu0 %v1415, 126
  %v1827 = vpop.permute.xlu0 %1826
  %1828 = vrot.lane.b32.xlu0 %v1416, 126
  %v1829 = vpop.permute.xlu0 %1828
  %1830 = vrot.lane.b32.xlu0 %v1417, 126
  %v1831 = vpop.permute.xlu0 %1830
  %1832 = vrot.lane.b32.xlu0 %v1418, 126
  %v1833 = vpop.permute.xlu0 %1832
  %1834 = vrot.lane.b32.xlu0 %v1419, 126
  %v1835 = vpop.permute.xlu0 %1834
  %1836 = vrot.lane.b32.xlu0 %v1420, 126
  %v1837 = vpop.permute.xlu0 %1836
  %1838 = vrot.lane.b32.xlu0 %v1421, 126
  %v1839 = vpop.permute.xlu0 %1838
  %1840 = vrot.lane.b32.xlu0 %v1422, 126
  %v1841 = vpop.permute.xlu0 %1840
  %1842 = vrot.lane.b32.xlu0 %v1423, 126
  %v1843 = vpop.permute.xlu0 %1842
  %1844 = vrot.lane.b32.xlu0 %v1424, 126
  %v1845 = vpop.permute.xlu0 %1844
  %1846 = vrot.lane.b32.xlu0 %v1425, 126
  %v1847 = vpop.permute.xlu0 %1846
  %1848 = vrot.lane.b32.xlu0 %v1426, 126
  %v1849 = vpop.permute.xlu0 %1848
  %1850 = vrot.lane.b32.xlu0 %v1427, 126
  %v1851 = vpop.permute.xlu0 %1850
  %1852 = vrot.lane.b32.xlu0 %v1428, 126
  %v1853 = vpop.permute.xlu0 %1852
  %1854 = vrot.lane.b32.xlu0 %v1429, 126
  %v1855 = vpop.permute.xlu0 %1854
  %1856 = vrot.lane.b32.xlu0 %v1430, 126
  %v1857 = vpop.permute.xlu0 %1856
  %1858 = vrot.lane.b32.xlu0 %v1431, 126
  %v1859 = vpop.permute.xlu0 %1858
  %1860 = vrot.lane.b32.xlu0 %v1432, 126
  %v1861 = vpop.permute.xlu0 %1860
  %1862 = vrot.lane.b32.xlu0 %v1433, 126
  %v1863 = vpop.permute.xlu0 %1862
  %1864 = vrot.lane.b32.xlu0 %v1434, 126
  %v1865 = vpop.permute.xlu0 %1864
  %1866 = vrot.lane.b32.xlu0 %v1435, 126
  %v1867 = vpop.permute.xlu0 %1866
  %1868 = vrot.lane.b32.xlu0 %v1436, 126
  %v1869 = vpop.permute.xlu0 %1868
  %1870 = vrot.lane.b32.xlu0 %v1437, 126
  %v1871 = vpop.permute.xlu0 %1870
  %1872 = vrot.lane.b32.xlu0 %v1438, 126
  %v1873 = vpop.permute.xlu0 %1872
  %1874 = vrot.lane.b32.xlu0 %v1439, 126
  %v1875 = vpop.permute.xlu0 %1874
  %1876 = vrot.lane.b32.xlu0 %v1440, 126
  %v1877 = vpop.permute.xlu0 %1876
  %1878 = vrot.lane.b32.xlu0 %v1441, 126
  %v1879 = vpop.permute.xlu0 %1878
  %1880 = vrot.lane.b32.xlu0 %v1442, 126
  %v1881 = vpop.permute.xlu0 %1880
  %1882 = vrot.lane.b32.xlu0 %v1443, 126
  %v1883 = vpop.permute.xlu0 %1882
  %1884 = vrot.lane.b32.xlu0 %v1444, 126
  %v1885 = vpop.permute.xlu0 %1884
  %1886 = vrot.lane.b32.xlu0 %v1445, 126
  %v1887 = vpop.permute.xlu0 %1886
  %1888 = vrot.lane.b32.xlu0 %v1446, 126
  %v1889 = vpop.permute.xlu0 %1888
  %1890 = vrot.lane.b32.xlu0 %v1447, 126
  %v1891 = vpop.permute.xlu0 %1890
  %1892 = vrot.lane.b32.xlu0 %v1448, 126
  %v1893 = vpop.permute.xlu0 %1892
  %1894 = vrot.lane.b32.xlu0 %v1449, 126
  %v1895 = vpop.permute.xlu0 %1894
  %1896 = vrot.lane.b32.xlu0 %v1450, 126
  %v1897 = vpop.permute.xlu0 %1896
  %1898 = vrot.lane.b32.xlu0 %v1451, 126
  %v1899 = vpop.permute.xlu0 %1898
  %v1964 = vsel %vm491, %v1773, 0.0
  %1965 = vadd.xlane.f32.xlu0 %v1964
  %v1966 = vpop.xlane.xlu0 %1965
  %v1967 = vsel %vm491, %v1775, 0.0
  %1968 = vadd.xlane.f32.xlu0 %v1967
  %v1969 = vpop.xlane.xlu0 %1968
  %v1970 = vsel %vm491, %v1777, 0.0
  %1971 = vadd.xlane.f32.xlu0 %v1970
  %v1972 = vpop.xlane.xlu0 %1971
  %v1973 = vsel %vm491, %v1779, 0.0
  %1974 = vadd.xlane.f32.xlu0 %v1973
  %v1975 = vpop.xlane.xlu0 %1974
  %v1976 = vsel %vm491, %v1781, 0.0
  %1977 = vadd.xlane.f32.xlu0 %v1976
  %v1978 = vpop.xlane.xlu0 %1977
  %v1979 = vsel %vm491, %v1783, 0.0
  %1980 = vadd.xlane.f32.xlu0 %v1979
  %v1981 = vpop.xlane.xlu0 %1980
  %v1982 = vsel %vm491, %v1785, 0.0
  %1983 = vadd.xlane.f32.xlu0 %v1982
  %v1984 = vpop.xlane.xlu0 %1983
  %v1985 = vsel %vm491, %v1787, 0.0
  %1986 = vadd.xlane.f32.xlu0 %v1985
  %v1987 = vpop.xlane.xlu0 %1986
  %v1988 = vsel %vm491, %v1789, 0.0
  %1989 = vadd.xlane.f32.xlu0 %v1988
  %v1990 = vpop.xlane.xlu0 %1989
  %v1991 = vsel %vm491, %v1791, 0.0
  %1992 = vadd.xlane.f32.xlu0 %v1991
  %v1993 = vpop.xlane.xlu0 %1992
  %v1994 = vsel %vm491, %v1793, 0.0
  %1995 = vadd.xlane.f32.xlu0 %v1994
  %v1996 = vpop.xlane.xlu0 %1995
  %v1997 = vsel %vm491, %v1795, 0.0
  %1998 = vadd.xlane.f32.xlu0 %v1997
  %v1999 = vpop.xlane.xlu0 %1998
  %v2000 = vsel %vm491, %v1797, 0.0
  %2001 = vadd.xlane.f32.xlu0 %v2000
  %v2002 = vpop.xlane.xlu0 %2001
  %v2003 = vsel %vm491, %v1799, 0.0
  %2004 = vadd.xlane.f32.xlu0 %v2003
  %v2005 = vpop.xlane.xlu0 %2004
  %v2006 = vsel %vm491, %v1801, 0.0
  %2007 = vadd.xlane.f32.xlu0 %v2006
  %v2008 = vpop.xlane.xlu0 %2007
  %v2009 = vsel %vm491, %v1803, 0.0
  %2010 = vadd.xlane.f32.xlu0 %v2009
  %v2011 = vpop.xlane.xlu0 %2010
  %v2012 = vsel %vm491, %v1805, 0.0
  %2013 = vadd.xlane.f32.xlu0 %v2012
  %v2014 = vpop.xlane.xlu0 %2013
  %v2015 = vsel %vm491, %v1807, 0.0
  %2016 = vadd.xlane.f32.xlu0 %v2015
  %v2017 = vpop.xlane.xlu0 %2016
  %v2018 = vsel %vm491, %v1809, 0.0
  %2019 = vadd.xlane.f32.xlu0 %v2018
  %v2020 = vpop.xlane.xlu0 %2019
  %v2021 = vsel %vm491, %v1811, 0.0
  %2022 = vadd.xlane.f32.xlu0 %v2021
  %v2023 = vpop.xlane.xlu0 %2022
  %v2024 = vsel %vm491, %v1813, 0.0
  %2025 = vadd.xlane.f32.xlu0 %v2024
  %v2026 = vpop.xlane.xlu0 %2025
  %v2027 = vsel %vm491, %v1815, 0.0
  %2028 = vadd.xlane.f32.xlu0 %v2027
  %v2029 = vpop.xlane.xlu0 %2028
  %v2030 = vsel %vm491, %v1817, 0.0
  %2031 = vadd.xlane.f32.xlu0 %v2030
  %v2032 = vpop.xlane.xlu0 %2031
  %v2033 = vsel %vm491, %v1819, 0.0
  %2034 = vadd.xlane.f32.xlu0 %v2033
  %v2035 = vpop.xlane.xlu0 %2034
  %v2036 = vsel %vm491, %v1821, 0.0
  %2037 = vadd.xlane.f32.xlu0 %v2036
  %v2038 = vpop.xlane.xlu0 %2037
  %v2039 = vsel %vm491, %v1823, 0.0
  %2040 = vadd.xlane.f32.xlu0 %v2039
  %v2041 = vpop.xlane.xlu0 %2040
  %v2042 = vsel %vm491, %v1825, 0.0
  %2043 = vadd.xlane.f32.xlu0 %v2042
  %v2044 = vpop.xlane.xlu0 %2043
  %v2045 = vsel %vm491, %v1827, 0.0
  %2046 = vadd.xlane.f32.xlu0 %v2045
  %v2047 = vpop.xlane.xlu0 %2046
  %v2048 = vsel %vm491, %v1829, 0.0
  %2049 = vadd.xlane.f32.xlu0 %v2048
  %v2050 = vpop.xlane.xlu0 %2049
  %v2051 = vsel %vm491, %v1831, 0.0
  %2052 = vadd.xlane.f32.xlu0 %v2051
  %v2053 = vpop.xlane.xlu0 %2052
  %v2054 = vsel %vm491, %v1833, 0.0
  %2055 = vadd.xlane.f32.xlu0 %v2054
  %v2056 = vpop.xlane.xlu0 %2055
  %v2057 = vsel %vm491, %v1835, 0.0
  %2058 = vadd.xlane.f32.xlu0 %v2057
  %v2059 = vpop.xlane.xlu0 %2058
  %v2060 = vsel %vm491, %v1837, 0.0
  %2061 = vadd.xlane.f32.xlu0 %v2060
  %v2062 = vpop.xlane.xlu0 %2061
  %v2063 = vsel %vm491, %v1839, 0.0
  %2064 = vadd.xlane.f32.xlu0 %v2063
  %v2065 = vpop.xlane.xlu0 %2064
  %v2066 = vsel %vm491, %v1841, 0.0
  %2067 = vadd.xlane.f32.xlu0 %v2066
  %v2068 = vpop.xlane.xlu0 %2067
  %v2069 = vsel %vm491, %v1843, 0.0
  %2070 = vadd.xlane.f32.xlu0 %v2069
  %v2071 = vpop.xlane.xlu0 %2070
  %v2072 = vsel %vm491, %v1845, 0.0
  %2073 = vadd.xlane.f32.xlu0 %v2072
  %v2074 = vpop.xlane.xlu0 %2073
  %v2075 = vsel %vm491, %v1847, 0.0
  %2076 = vadd.xlane.f32.xlu0 %v2075
  %v2077 = vpop.xlane.xlu0 %2076
  %v2078 = vsel %vm491, %v1849, 0.0
  %2079 = vadd.xlane.f32.xlu0 %v2078
  %v2080 = vpop.xlane.xlu0 %2079
  %v2081 = vsel %vm491, %v1851, 0.0
  %2082 = vadd.xlane.f32.xlu0 %v2081
  %v2083 = vpop.xlane.xlu0 %2082
  %v2084 = vsel %vm491, %v1853, 0.0
  %2085 = vadd.xlane.f32.xlu0 %v2084
  %v2086 = vpop.xlane.xlu0 %2085
  %v2087 = vsel %vm491, %v1855, 0.0
  %2088 = vadd.xlane.f32.xlu0 %v2087
  %v2089 = vpop.xlane.xlu0 %2088
  %v2090 = vsel %vm491, %v1857, 0.0
  %2091 = vadd.xlane.f32.xlu0 %v2090
  %v2092 = vpop.xlane.xlu0 %2091
  %v2093 = vsel %vm491, %v1859, 0.0
  %2094 = vadd.xlane.f32.xlu0 %v2093
  %v2095 = vpop.xlane.xlu0 %2094
  %v2096 = vsel %vm491, %v1861, 0.0
  %2097 = vadd.xlane.f32.xlu0 %v2096
  %v2098 = vpop.xlane.xlu0 %2097
  %v2099 = vsel %vm491, %v1863, 0.0
  %2100 = vadd.xlane.f32.xlu0 %v2099
  %v2101 = vpop.xlane.xlu0 %2100
  %v2102 = vsel %vm491, %v1865, 0.0
  %2103 = vadd.xlane.f32.xlu0 %v2102
  %v2104 = vpop.xlane.xlu0 %2103
  %v2105 = vsel %vm491, %v1867, 0.0
  %2106 = vadd.xlane.f32.xlu0 %v2105
  %v2107 = vpop.xlane.xlu0 %2106
  %v2108 = vsel %vm491, %v1869, 0.0
  %2109 = vadd.xlane.f32.xlu0 %v2108
  %v2110 = vpop.xlane.xlu0 %2109
  %v2111 = vsel %vm491, %v1871, 0.0
  %2112 = vadd.xlane.f32.xlu0 %v2111
  %v2113 = vpop.xlane.xlu0 %2112
  %v2114 = vsel %vm491, %v1873, 0.0
  %2115 = vadd.xlane.f32.xlu0 %v2114
  %v2116 = vpop.xlane.xlu0 %2115
  %v2117 = vsel %vm491, %v1875, 0.0
  %2118 = vadd.xlane.f32.xlu0 %v2117
  %v2119 = vpop.xlane.xlu0 %2118
  %v2120 = vsel %vm491, %v1877, 0.0
  %2121 = vadd.xlane.f32.xlu0 %v2120
  %v2122 = vpop.xlane.xlu0 %2121
  %v2123 = vsel %vm491, %v1879, 0.0
  %2124 = vadd.xlane.f32.xlu0 %v2123
  %v2125 = vpop.xlane.xlu0 %2124
  %v2126 = vsel %vm491, %v1881, 0.0
  %2127 = vadd.xlane.f32.xlu0 %v2126
  %v2128 = vpop.xlane.xlu0 %2127
  %v2129 = vsel %vm491, %v1883, 0.0
  %2130 = vadd.xlane.f32.xlu0 %v2129
  %v2131 = vpop.xlane.xlu0 %2130
  %v2132 = vsel %vm491, %v1885, 0.0
  %2133 = vadd.xlane.f32.xlu0 %v2132
  %v2134 = vpop.xlane.xlu0 %2133
  %v2135 = vsel %vm491, %v1887, 0.0
  %2136 = vadd.xlane.f32.xlu0 %v2135
  %v2137 = vpop.xlane.xlu0 %2136
  %v2138 = vsel %vm491, %v1889, 0.0
  %2139 = vadd.xlane.f32.xlu0 %v2138
  %v2140 = vpop.xlane.xlu0 %2139
  %v2141 = vsel %vm491, %v1891, 0.0
  %2142 = vadd.xlane.f32.xlu0 %v2141
  %v2143 = vpop.xlane.xlu0 %2142
  %v2144 = vsel %vm491, %v1893, 0.0
  %2145 = vadd.xlane.f32.xlu0 %v2144
  %v2146 = vpop.xlane.xlu0 %2145
  %v2147 = vsel %vm491, %v1895, 0.0
  %2148 = vadd.xlane.f32.xlu0 %v2147
  %v2149 = vpop.xlane.xlu0 %2148
  %v2150 = vsel %vm491, %v1897, 0.0
  %2151 = vadd.xlane.f32.xlu0 %v2150
  %v2152 = vpop.xlane.xlu0 %2151
  %v2153 = vsel %vm491, %v1899, 0.0
  %2154 = vadd.xlane.f32.xlu0 %v2153
  %v2155 = vpop.xlane.xlu0 %2154
  %v2156 = vmul.f32 %v1966, 0.5
  %v2157 = vmul.f32 %v1969, 0.5
  %v2158 = vmul.f32 %v1972, 0.5
  %v2159 = vmul.f32 %v1975, 0.5
  %v2160 = vmul.f32 %v1978, 0.5
  %v2161 = vmul.f32 %v1981, 0.5
  %v2162 = vmul.f32 %v1984, 0.5
  %v2163 = vmul.f32 %v1987, 0.5
  %v2164 = vmul.f32 %v1990, 0.5
  %v2165 = vmul.f32 %v1993, 0.5
  %v2166 = vmul.f32 %v1996, 0.5
  %v2167 = vmul.f32 %v1999, 0.5
  %v2168 = vmul.f32 %v2002, 0.5
  %v2169 = vmul.f32 %v2005, 0.5
  %v2170 = vmul.f32 %v2008, 0.5
  %v2171 = vmul.f32 %v2011, 0.5
  %v2172 = vmul.f32 %v2014, 0.5
  %v2173 = vmul.f32 %v2017, 0.5
  %v2174 = vmul.f32 %v2020, 0.5
  %v2175 = vmul.f32 %v2023, 0.5
  %v2176 = vmul.f32 %v2026, 0.5
  %v2177 = vmul.f32 %v2029, 0.5
  %v2178 = vmul.f32 %v2032, 0.5
  %v2179 = vmul.f32 %v2035, 0.5
  %v2180 = vmul.f32 %v2038, 0.5
  %v2181 = vmul.f32 %v2041, 0.5
  %v2182 = vmul.f32 %v2044, 0.5
  %v2183 = vmul.f32 %v2047, 0.5
  %v2184 = vmul.f32 %v2050, 0.5
  %v2185 = vmul.f32 %v2053, 0.5
  %v2186 = vmul.f32 %v2056, 0.5
  %v2187 = vmul.f32 %v2059, 0.5
  %v2188 = vmul.f32 %v2062, 0.5
  %v2189 = vmul.f32 %v2065, 0.5
  %v2190 = vmul.f32 %v2068, 0.5
  %v2191 = vmul.f32 %v2071, 0.5
  %v2192 = vmul.f32 %v2074, 0.5
  %v2193 = vmul.f32 %v2077, 0.5
  %v2194 = vmul.f32 %v2080, 0.5
  %v2195 = vmul.f32 %v2083, 0.5
  %v2196 = vmul.f32 %v2086, 0.5
  %v2197 = vmul.f32 %v2089, 0.5
  %v2198 = vmul.f32 %v2092, 0.5
  %v2199 = vmul.f32 %v2095, 0.5
  %v2200 = vmul.f32 %v2098, 0.5
  %v2201 = vmul.f32 %v2101, 0.5
  %v2202 = vmul.f32 %v2104, 0.5
  %v2203 = vmul.f32 %v2107, 0.5
  %v2204 = vmul.f32 %v2110, 0.5
  %v2205 = vmul.f32 %v2113, 0.5
  %v2206 = vmul.f32 %v2116, 0.5
  %v2207 = vmul.f32 %v2119, 0.5
  %v2208 = vmul.f32 %v2122, 0.5
  %v2209 = vmul.f32 %v2125, 0.5
  %v2210 = vmul.f32 %v2128, 0.5
  %v2211 = vmul.f32 %v2131, 0.5
  %v2212 = vmul.f32 %v2134, 0.5
  %v2213 = vmul.f32 %v2137, 0.5
  %v2214 = vmul.f32 %v2140, 0.5
  %v2215 = vmul.f32 %v2143, 0.5
  %v2216 = vmul.f32 %v2146, 0.5
  %v2217 = vmul.f32 %v2149, 0.5
  %v2218 = vmul.f32 %v2152, 0.5
  %v2219 = vmul.f32 %v2155, 0.5
  %v2220 = vsel %vm490, %v1644, %v2156
  %v2221 = vsel %vm490, %v1645, %v2157
  %v2222 = vsel %vm490, %v1646, %v2158
  %v2223 = vsel %vm490, %v1647, %v2159
  %v2224 = vsel %vm490, %v1648, %v2160
  %v2225 = vsel %vm490, %v1649, %v2161
  %v2226 = vsel %vm490, %v1650, %v2162
  %v2227 = vsel %vm490, %v1651, %v2163
  %v2228 = vsel %vm490, %v1652, %v2164
  %v2229 = vsel %vm490, %v1653, %v2165
  %v2230 = vsel %vm490, %v1654, %v2166
  %v2231 = vsel %vm490, %v1655, %v2167
  %v2232 = vsel %vm490, %v1656, %v2168
  %v2233 = vsel %vm490, %v1657, %v2169
  %v2234 = vsel %vm490, %v1658, %v2170
  %v2235 = vsel %vm490, %v1659, %v2171
  %v2236 = vsel %vm490, %v1660, %v2172
  %v2237 = vsel %vm490, %v1661, %v2173
  %v2238 = vsel %vm490, %v1662, %v2174
  %v2239 = vsel %vm490, %v1663, %v2175
  %v2240 = vsel %vm490, %v1664, %v2176
  %v2241 = vsel %vm490, %v1665, %v2177
  %v2242 = vsel %vm490, %v1666, %v2178
  %v2243 = vsel %vm490, %v1667, %v2179
  %v2244 = vsel %vm490, %v1668, %v2180
  %v2245 = vsel %vm490, %v1669, %v2181
  %v2246 = vsel %vm490, %v1670, %v2182
  %v2247 = vsel %vm490, %v1671, %v2183
  %v2248 = vsel %vm490, %v1672, %v2184
  %v2249 = vsel %vm490, %v1673, %v2185
  %v2250 = vsel %vm490, %v1674, %v2186
  %v2251 = vsel %vm490, %v1675, %v2187
  %v2252 = vsel %vm490, %v1676, %v2188
  %v2253 = vsel %vm490, %v1677, %v2189
  %v2254 = vsel %vm490, %v1678, %v2190
  %v2255 = vsel %vm490, %v1679, %v2191
  %v2256 = vsel %vm490, %v1680, %v2192
  %v2257 = vsel %vm490, %v1681, %v2193
  %v2258 = vsel %vm490, %v1682, %v2194
  %v2259 = vsel %vm490, %v1683, %v2195
  %v2260 = vsel %vm490, %v1684, %v2196
  %v2261 = vsel %vm490, %v1685, %v2197
  %v2262 = vsel %vm490, %v1686, %v2198
  %v2263 = vsel %vm490, %v1687, %v2199
  %v2264 = vsel %vm490, %v1688, %v2200
  %v2265 = vsel %vm490, %v1689, %v2201
  %v2266 = vsel %vm490, %v1690, %v2202
  %v2267 = vsel %vm490, %v1691, %v2203
  %v2268 = vsel %vm490, %v1692, %v2204
  %v2269 = vsel %vm490, %v1693, %v2205
  %v2270 = vsel %vm490, %v1694, %v2206
  %v2271 = vsel %vm490, %v1695, %v2207
  %v2272 = vsel %vm490, %v1696, %v2208
  %v2273 = vsel %vm490, %v1697, %v2209
  %v2274 = vsel %vm490, %v1698, %v2210
  %v2275 = vsel %vm490, %v1699, %v2211
  %v2276 = vsel %vm490, %v1700, %v2212
  %v2277 = vsel %vm490, %v1701, %v2213
  %v2278 = vsel %vm490, %v1702, %v2214
  %v2279 = vsel %vm490, %v1703, %v2215
  %v2280 = vsel %vm490, %v1704, %v2216
  %v2281 = vsel %vm490, %v1705, %v2217
  %v2282 = vsel %vm490, %v1706, %v2218
  %v2283 = vsel %vm490, %v1707, %v2219
  %v2284 = vadd.f32 %v2220, 1e-06
  %v2285 = vadd.f32 %v2221, 1e-06
  %v2286 = vadd.f32 %v2222, 1e-06
  %v2287 = vadd.f32 %v2223, 1e-06
  %v2288 = vadd.f32 %v2224, 1e-06
  %v2289 = vadd.f32 %v2225, 1e-06
  %v2290 = vadd.f32 %v2226, 1e-06
  %v2291 = vadd.f32 %v2227, 1e-06
  %v2292 = vadd.f32 %v2228, 1e-06
  %v2293 = vadd.f32 %v2229, 1e-06
  %v2294 = vadd.f32 %v2230, 1e-06
  %v2295 = vadd.f32 %v2231, 1e-06
  %v2296 = vadd.f32 %v2232, 1e-06
  %v2297 = vadd.f32 %v2233, 1e-06
  %v2298 = vadd.f32 %v2234, 1e-06
  %v2299 = vadd.f32 %v2235, 1e-06
  %v2300 = vadd.f32 %v2236, 1e-06
  %v2301 = vadd.f32 %v2237, 1e-06
  %v2302 = vadd.f32 %v2238, 1e-06
  %v2303 = vadd.f32 %v2239, 1e-06
  %v2304 = vadd.f32 %v2240, 1e-06
  %v2305 = vadd.f32 %v2241, 1e-06
  %v2306 = vadd.f32 %v2242, 1e-06
  %v2307 = vadd.f32 %v2243, 1e-06
  %v2308 = vadd.f32 %v2244, 1e-06
  %v2309 = vadd.f32 %v2245, 1e-06
  %v2310 = vadd.f32 %v2246, 1e-06
  %v2311 = vadd.f32 %v2247, 1e-06
  %v2312 = vadd.f32 %v2248, 1e-06
  %v2313 = vadd.f32 %v2249, 1e-06
  %v2314 = vadd.f32 %v2250, 1e-06
  %v2315 = vadd.f32 %v2251, 1e-06
  %v2316 = vadd.f32 %v2252, 1e-06
  %v2317 = vadd.f32 %v2253, 1e-06
  %v2318 = vadd.f32 %v2254, 1e-06
  %v2319 = vadd.f32 %v2255, 1e-06
  %v2320 = vadd.f32 %v2256, 1e-06
  %v2321 = vadd.f32 %v2257, 1e-06
  %v2322 = vadd.f32 %v2258, 1e-06
  %v2323 = vadd.f32 %v2259, 1e-06
  %v2324 = vadd.f32 %v2260, 1e-06
  %v2325 = vadd.f32 %v2261, 1e-06
  %v2326 = vadd.f32 %v2262, 1e-06
  %v2327 = vadd.f32 %v2263, 1e-06
  %v2328 = vadd.f32 %v2264, 1e-06
  %v2329 = vadd.f32 %v2265, 1e-06
  %v2330 = vadd.f32 %v2266, 1e-06
  %v2331 = vadd.f32 %v2267, 1e-06
  %v2332 = vadd.f32 %v2268, 1e-06
  %v2333 = vadd.f32 %v2269, 1e-06
  %v2334 = vadd.f32 %v2270, 1e-06
  %v2335 = vadd.f32 %v2271, 1e-06
  %v2336 = vadd.f32 %v2272, 1e-06
  %v2337 = vadd.f32 %v2273, 1e-06
  %v2338 = vadd.f32 %v2274, 1e-06
  %v2339 = vadd.f32 %v2275, 1e-06
  %v2340 = vadd.f32 %v2276, 1e-06
  %v2341 = vadd.f32 %v2277, 1e-06
  %v2342 = vadd.f32 %v2278, 1e-06
  %v2343 = vadd.f32 %v2279, 1e-06
  %v2344 = vadd.f32 %v2280, 1e-06
  %v2345 = vadd.f32 %v2281, 1e-06
  %v2346 = vadd.f32 %v2282, 1e-06
  %v2347 = vadd.f32 %v2283, 1e-06
  %v2348 = vrsqrt.pop %v2284
  %v2349 = vmul.f32 %v2348, %v2284
  %v2350 = vmul.f32 %v2349, %v2348
  %v2351 = vmul.f32 0.5, %v2350
  %v2352 = vsub.f32 1.5, %v2351
  %v2353 = vmul.f32 %v2348, %v2352
  %vm2354 = vweird.f32 %v2284
  %vm2355 = vweird.f32 %v2348
  %vm2356 = vmor %vm2354, %vm2355
  %v2357 = vsel %vm2356, %v2348, %v2353
  %v2358 = vrsqrt.pop %v2285
  %v2359 = vmul.f32 %v2358, %v2285
  %v2360 = vmul.f32 %v2359, %v2358
  %v2361 = vmul.f32 0.5, %v2360
  %v2362 = vsub.f32 1.5, %v2361
  %v2363 = vmul.f32 %v2358, %v2362
  %vm2364 = vweird.f32 %v2285
  %vm2365 = vweird.f32 %v2358
  %vm2366 = vmor %vm2364, %vm2365
  %v2367 = vsel %vm2366, %v2358, %v2363
  %v2368 = vrsqrt.pop %v2286
  %v2369 = vmul.f32 %v2368, %v2286
  %v2370 = vmul.f32 %v2369, %v2368
  %v2371 = vmul.f32 0.5, %v2370
  %v2372 = vsub.f32 1.5, %v2371
  %v2373 = vmul.f32 %v2368, %v2372
  %vm2374 = vweird.f32 %v2286
  %vm2375 = vweird.f32 %v2368
  %vm2376 = vmor %vm2374, %vm2375
  %v2377 = vsel %vm2376, %v2368, %v2373
  %v2378 = vrsqrt.pop %v2287
  %v2379 = vmul.f32 %v2378, %v2287
  %v2380 = vmul.f32 %v2379, %v2378
  %v2381 = vmul.f32 0.5, %v2380
  %v2382 = vsub.f32 1.5, %v2381
  %v2383 = vmul.f32 %v2378, %v2382
  %vm2384 = vweird.f32 %v2287
  %vm2385 = vweird.f32 %v2378
  %vm2386 = vmor %vm2384, %vm2385
  %v2387 = vsel %vm2386, %v2378, %v2383
  %v2388 = vrsqrt.pop %v2288
  %v2389 = vmul.f32 %v2388, %v2288
  %v2390 = vmul.f32 %v2389, %v2388
  %v2391 = vmul.f32 0.5, %v2390
  %v2392 = vsub.f32 1.5, %v2391
  %v2393 = vmul.f32 %v2388, %v2392
  %vm2394 = vweird.f32 %v2288
  %vm2395 = vweird.f32 %v2388
  %vm2396 = vmor %vm2394, %vm2395
  %v2397 = vsel %vm2396, %v2388, %v2393
  %v2398 = vrsqrt.pop %v2289
  %v2399 = vmul.f32 %v2398, %v2289
  %v2400 = vmul.f32 %v2399, %v2398
  %v2401 = vmul.f32 0.5, %v2400
  %v2402 = vsub.f32 1.5, %v2401
  %v2403 = vmul.f32 %v2398, %v2402
  %vm2404 = vweird.f32 %v2289
  %vm2405 = vweird.f32 %v2398
  %vm2406 = vmor %vm2404, %vm2405
  %v2407 = vsel %vm2406, %v2398, %v2403
  %v2408 = vrsqrt.pop %v2290
  %v2409 = vmul.f32 %v2408, %v2290
  %v2410 = vmul.f32 %v2409, %v2408
  %v2411 = vmul.f32 0.5, %v2410
  %v2412 = vsub.f32 1.5, %v2411
  %v2413 = vmul.f32 %v2408, %v2412
  %vm2414 = vweird.f32 %v2290
  %vm2415 = vweird.f32 %v2408
  %vm2416 = vmor %vm2414, %vm2415
  %v2417 = vsel %vm2416, %v2408, %v2413
  %v2418 = vrsqrt.pop %v2291
  %v2419 = vmul.f32 %v2418, %v2291
  %v2420 = vmul.f32 %v2419, %v2418
  %v2421 = vmul.f32 0.5, %v2420
  %v2422 = vsub.f32 1.5, %v2421
  %v2423 = vmul.f32 %v2418, %v2422
  %vm2424 = vweird.f32 %v2291
  %vm2425 = vweird.f32 %v2418
  %vm2426 = vmor %vm2424, %vm2425
  %v2427 = vsel %vm2426, %v2418, %v2423
  %v2428 = vrsqrt.pop %v2292
  %v2429 = vmul.f32 %v2428, %v2292
  %v2430 = vmul.f32 %v2429, %v2428
  %v2431 = vmul.f32 0.5, %v2430
  %v2432 = vsub.f32 1.5, %v2431
  %v2433 = vmul.f32 %v2428, %v2432
  %vm2434 = vweird.f32 %v2292
  %vm2435 = vweird.f32 %v2428
  %vm2436 = vmor %vm2434, %vm2435
  %v2437 = vsel %vm2436, %v2428, %v2433
  %v2438 = vrsqrt.pop %v2293
  %v2439 = vmul.f32 %v2438, %v2293
  %v2440 = vmul.f32 %v2439, %v2438
  %v2441 = vmul.f32 0.5, %v2440
  %v2442 = vsub.f32 1.5, %v2441
  %v2443 = vmul.f32 %v2438, %v2442
  %vm2444 = vweird.f32 %v2293
  %vm2445 = vweird.f32 %v2438
  %vm2446 = vmor %vm2444, %vm2445
  %v2447 = vsel %vm2446, %v2438, %v2443
  %v2448 = vrsqrt.pop %v2294
  %v2449 = vmul.f32 %v2448, %v2294
  %v2450 = vmul.f32 %v2449, %v2448
  %v2451 = vmul.f32 0.5, %v2450
  %v2452 = vsub.f32 1.5, %v2451
  %v2453 = vmul.f32 %v2448, %v2452
  %vm2454 = vweird.f32 %v2294
  %vm2455 = vweird.f32 %v2448
  %vm2456 = vmor %vm2454, %vm2455
  %v2457 = vsel %vm2456, %v2448, %v2453
  %v2458 = vrsqrt.pop %v2295
  %v2459 = vmul.f32 %v2458, %v2295
  %v2460 = vmul.f32 %v2459, %v2458
  %v2461 = vmul.f32 0.5, %v2460
  %v2462 = vsub.f32 1.5, %v2461
  %v2463 = vmul.f32 %v2458, %v2462
  %vm2464 = vweird.f32 %v2295
  %vm2465 = vweird.f32 %v2458
  %vm2466 = vmor %vm2464, %vm2465
  %v2467 = vsel %vm2466, %v2458, %v2463
  %v2468 = vrsqrt.pop %v2296
  %v2469 = vmul.f32 %v2468, %v2296
  %v2470 = vmul.f32 %v2469, %v2468
  %v2471 = vmul.f32 0.5, %v2470
  %v2472 = vsub.f32 1.5, %v2471
  %v2473 = vmul.f32 %v2468, %v2472
  %vm2474 = vweird.f32 %v2296
  %vm2475 = vweird.f32 %v2468
  %vm2476 = vmor %vm2474, %vm2475
  %v2477 = vsel %vm2476, %v2468, %v2473
  %v2478 = vrsqrt.pop %v2297
  %v2479 = vmul.f32 %v2478, %v2297
  %v2480 = vmul.f32 %v2479, %v2478
  %v2481 = vmul.f32 0.5, %v2480
  %v2482 = vsub.f32 1.5, %v2481
  %v2483 = vmul.f32 %v2478, %v2482
  %vm2484 = vweird.f32 %v2297
  %vm2485 = vweird.f32 %v2478
  %vm2486 = vmor %vm2484, %vm2485
  %v2487 = vsel %vm2486, %v2478, %v2483
  %v2488 = vrsqrt.pop %v2298
  %v2489 = vmul.f32 %v2488, %v2298
  %v2490 = vmul.f32 %v2489, %v2488
  %v2491 = vmul.f32 0.5, %v2490
  %v2492 = vsub.f32 1.5, %v2491
  %v2493 = vmul.f32 %v2488, %v2492
  %vm2494 = vweird.f32 %v2298
  %vm2495 = vweird.f32 %v2488
  %vm2496 = vmor %vm2494, %vm2495
  %v2497 = vsel %vm2496, %v2488, %v2493
  %v2498 = vrsqrt.pop %v2299
  %v2499 = vmul.f32 %v2498, %v2299
  %v2500 = vmul.f32 %v2499, %v2498
  %v2501 = vmul.f32 0.5, %v2500
  %v2502 = vsub.f32 1.5, %v2501
  %v2503 = vmul.f32 %v2498, %v2502
  %vm2504 = vweird.f32 %v2299
  %vm2505 = vweird.f32 %v2498
  %vm2506 = vmor %vm2504, %vm2505
  %v2507 = vsel %vm2506, %v2498, %v2503
  %v2508 = vrsqrt.pop %v2300
  %v2509 = vmul.f32 %v2508, %v2300
  %v2510 = vmul.f32 %v2509, %v2508
  %v2511 = vmul.f32 0.5, %v2510
  %v2512 = vsub.f32 1.5, %v2511
  %v2513 = vmul.f32 %v2508, %v2512
  %vm2514 = vweird.f32 %v2300
  %vm2515 = vweird.f32 %v2508
  %vm2516 = vmor %vm2514, %vm2515
  %v2517 = vsel %vm2516, %v2508, %v2513
  %v2518 = vrsqrt.pop %v2301
  %v2519 = vmul.f32 %v2518, %v2301
  %v2520 = vmul.f32 %v2519, %v2518
  %v2521 = vmul.f32 0.5, %v2520
  %v2522 = vsub.f32 1.5, %v2521
  %v2523 = vmul.f32 %v2518, %v2522
  %vm2524 = vweird.f32 %v2301
  %vm2525 = vweird.f32 %v2518
  %vm2526 = vmor %vm2524, %vm2525
  %v2527 = vsel %vm2526, %v2518, %v2523
  %v2528 = vrsqrt.pop %v2302
  %v2529 = vmul.f32 %v2528, %v2302
  %v2530 = vmul.f32 %v2529, %v2528
  %v2531 = vmul.f32 0.5, %v2530
  %v2532 = vsub.f32 1.5, %v2531
  %v2533 = vmul.f32 %v2528, %v2532
  %vm2534 = vweird.f32 %v2302
  %vm2535 = vweird.f32 %v2528
  %vm2536 = vmor %vm2534, %vm2535
  %v2537 = vsel %vm2536, %v2528, %v2533
  %v2538 = vrsqrt.pop %v2303
  %v2539 = vmul.f32 %v2538, %v2303
  %v2540 = vmul.f32 %v2539, %v2538
  %v2541 = vmul.f32 0.5, %v2540
  %v2542 = vsub.f32 1.5, %v2541
  %v2543 = vmul.f32 %v2538, %v2542
  %vm2544 = vweird.f32 %v2303
  %vm2545 = vweird.f32 %v2538
  %vm2546 = vmor %vm2544, %vm2545
  %v2547 = vsel %vm2546, %v2538, %v2543
  %v2548 = vrsqrt.pop %v2304
  %v2549 = vmul.f32 %v2548, %v2304
  %v2550 = vmul.f32 %v2549, %v2548
  %v2551 = vmul.f32 0.5, %v2550
  %v2552 = vsub.f32 1.5, %v2551
  %v2553 = vmul.f32 %v2548, %v2552
  %vm2554 = vweird.f32 %v2304
  %vm2555 = vweird.f32 %v2548
  %vm2556 = vmor %vm2554, %vm2555
  %v2557 = vsel %vm2556, %v2548, %v2553
  %v2558 = vrsqrt.pop %v2305
  %v2559 = vmul.f32 %v2558, %v2305
  %v2560 = vmul.f32 %v2559, %v2558
  %v2561 = vmul.f32 0.5, %v2560
  %v2562 = vsub.f32 1.5, %v2561
  %v2563 = vmul.f32 %v2558, %v2562
  %vm2564 = vweird.f32 %v2305
  %vm2565 = vweird.f32 %v2558
  %vm2566 = vmor %vm2564, %vm2565
  %v2567 = vsel %vm2566, %v2558, %v2563
  %v2568 = vrsqrt.pop %v2306
  %v2569 = vmul.f32 %v2568, %v2306
  %v2570 = vmul.f32 %v2569, %v2568
  %v2571 = vmul.f32 0.5, %v2570
  %v2572 = vsub.f32 1.5, %v2571
  %v2573 = vmul.f32 %v2568, %v2572
  %vm2574 = vweird.f32 %v2306
  %vm2575 = vweird.f32 %v2568
  %vm2576 = vmor %vm2574, %vm2575
  %v2577 = vsel %vm2576, %v2568, %v2573
  %v2578 = vrsqrt.pop %v2307
  %v2579 = vmul.f32 %v2578, %v2307
  %v2580 = vmul.f32 %v2579, %v2578
  %v2581 = vmul.f32 0.5, %v2580
  %v2582 = vsub.f32 1.5, %v2581
  %v2583 = vmul.f32 %v2578, %v2582
  %vm2584 = vweird.f32 %v2307
  %vm2585 = vweird.f32 %v2578
  %vm2586 = vmor %vm2584, %vm2585
  %v2587 = vsel %vm2586, %v2578, %v2583
  %v2588 = vrsqrt.pop %v2308
  %v2589 = vmul.f32 %v2588, %v2308
  %v2590 = vmul.f32 %v2589, %v2588
  %v2591 = vmul.f32 0.5, %v2590
  %v2592 = vsub.f32 1.5, %v2591
  %v2593 = vmul.f32 %v2588, %v2592
  %vm2594 = vweird.f32 %v2308
  %vm2595 = vweird.f32 %v2588
  %vm2596 = vmor %vm2594, %vm2595
  %v2597 = vsel %vm2596, %v2588, %v2593
  %v2598 = vrsqrt.pop %v2309
  %v2599 = vmul.f32 %v2598, %v2309
  %v2600 = vmul.f32 %v2599, %v2598
  %v2601 = vmul.f32 0.5, %v2600
  %v2602 = vsub.f32 1.5, %v2601
  %v2603 = vmul.f32 %v2598, %v2602
  %vm2604 = vweird.f32 %v2309
  %vm2605 = vweird.f32 %v2598
  %vm2606 = vmor %vm2604, %vm2605
  %v2607 = vsel %vm2606, %v2598, %v2603
  %v2608 = vrsqrt.pop %v2310
  %v2609 = vmul.f32 %v2608, %v2310
  %v2610 = vmul.f32 %v2609, %v2608
  %v2611 = vmul.f32 0.5, %v2610
  %v2612 = vsub.f32 1.5, %v2611
  %v2613 = vmul.f32 %v2608, %v2612
  %vm2614 = vweird.f32 %v2310
  %vm2615 = vweird.f32 %v2608
  %vm2616 = vmor %vm2614, %vm2615
  %v2617 = vsel %vm2616, %v2608, %v2613
  %v2618 = vrsqrt.pop %v2311
  %v2619 = vmul.f32 %v2618, %v2311
  %v2620 = vmul.f32 %v2619, %v2618
  %v2621 = vmul.f32 0.5, %v2620
  %v2622 = vsub.f32 1.5, %v2621
  %v2623 = vmul.f32 %v2618, %v2622
  %vm2624 = vweird.f32 %v2311
  %vm2625 = vweird.f32 %v2618
  %vm2626 = vmor %vm2624, %vm2625
  %v2627 = vsel %vm2626, %v2618, %v2623
  %v2628 = vrsqrt.pop %v2312
  %v2629 = vmul.f32 %v2628, %v2312
  %v2630 = vmul.f32 %v2629, %v2628
  %v2631 = vmul.f32 0.5, %v2630
  %v2632 = vsub.f32 1.5, %v2631
  %v2633 = vmul.f32 %v2628, %v2632
  %vm2634 = vweird.f32 %v2312
  %vm2635 = vweird.f32 %v2628
  %vm2636 = vmor %vm2634, %vm2635
  %v2637 = vsel %vm2636, %v2628, %v2633
  %v2638 = vrsqrt.pop %v2313
  %v2639 = vmul.f32 %v2638, %v2313
  %v2640 = vmul.f32 %v2639, %v2638
  %v2641 = vmul.f32 0.5, %v2640
  %v2642 = vsub.f32 1.5, %v2641
  %v2643 = vmul.f32 %v2638, %v2642
  %vm2644 = vweird.f32 %v2313
  %vm2645 = vweird.f32 %v2638
  %vm2646 = vmor %vm2644, %vm2645
  %v2647 = vsel %vm2646, %v2638, %v2643
  %v2648 = vrsqrt.pop %v2314
  %v2649 = vmul.f32 %v2648, %v2314
  %v2650 = vmul.f32 %v2649, %v2648
  %v2651 = vmul.f32 0.5, %v2650
  %v2652 = vsub.f32 1.5, %v2651
  %v2653 = vmul.f32 %v2648, %v2652
  %vm2654 = vweird.f32 %v2314
  %vm2655 = vweird.f32 %v2648
  %vm2656 = vmor %vm2654, %vm2655
  %v2657 = vsel %vm2656, %v2648, %v2653
  %v2658 = vrsqrt.pop %v2315
  %v2659 = vmul.f32 %v2658, %v2315
  %v2660 = vmul.f32 %v2659, %v2658
  %v2661 = vmul.f32 0.5, %v2660
  %v2662 = vsub.f32 1.5, %v2661
  %v2663 = vmul.f32 %v2658, %v2662
  %vm2664 = vweird.f32 %v2315
  %vm2665 = vweird.f32 %v2658
  %vm2666 = vmor %vm2664, %vm2665
  %v2667 = vsel %vm2666, %v2658, %v2663
  %v2668 = vrsqrt.pop %v2316
  %v2669 = vmul.f32 %v2668, %v2316
  %v2670 = vmul.f32 %v2669, %v2668
  %v2671 = vmul.f32 0.5, %v2670
  %v2672 = vsub.f32 1.5, %v2671
  %v2673 = vmul.f32 %v2668, %v2672
  %vm2674 = vweird.f32 %v2316
  %vm2675 = vweird.f32 %v2668
  %vm2676 = vmor %vm2674, %vm2675
  %v2677 = vsel %vm2676, %v2668, %v2673
  %v2678 = vrsqrt.pop %v2317
  %v2679 = vmul.f32 %v2678, %v2317
  %v2680 = vmul.f32 %v2679, %v2678
  %v2681 = vmul.f32 0.5, %v2680
  %v2682 = vsub.f32 1.5, %v2681
  %v2683 = vmul.f32 %v2678, %v2682
  %vm2684 = vweird.f32 %v2317
  %vm2685 = vweird.f32 %v2678
  %vm2686 = vmor %vm2684, %vm2685
  %v2687 = vsel %vm2686, %v2678, %v2683
  %v2688 = vrsqrt.pop %v2318
  %v2689 = vmul.f32 %v2688, %v2318
  %v2690 = vmul.f32 %v2689, %v2688
  %v2691 = vmul.f32 0.5, %v2690
  %v2692 = vsub.f32 1.5, %v2691
  %v2693 = vmul.f32 %v2688, %v2692
  %vm2694 = vweird.f32 %v2318
  %vm2695 = vweird.f32 %v2688
  %vm2696 = vmor %vm2694, %vm2695
  %v2697 = vsel %vm2696, %v2688, %v2693
  %v2698 = vrsqrt.pop %v2319
  %v2699 = vmul.f32 %v2698, %v2319
  %v2700 = vmul.f32 %v2699, %v2698
  %v2701 = vmul.f32 0.5, %v2700
  %v2702 = vsub.f32 1.5, %v2701
  %v2703 = vmul.f32 %v2698, %v2702
  %vm2704 = vweird.f32 %v2319
  %vm2705 = vweird.f32 %v2698
  %vm2706 = vmor %vm2704, %vm2705
  %v2707 = vsel %vm2706, %v2698, %v2703
  %v2708 = vrsqrt.pop %v2320
  %v2709 = vmul.f32 %v2708, %v2320
  %v2710 = vmul.f32 %v2709, %v2708
  %v2711 = vmul.f32 0.5, %v2710
  %v2712 = vsub.f32 1.5, %v2711
  %v2713 = vmul.f32 %v2708, %v2712
  %vm2714 = vweird.f32 %v2320
  %vm2715 = vweird.f32 %v2708
  %vm2716 = vmor %vm2714, %vm2715
  %v2717 = vsel %vm2716, %v2708, %v2713
  %v2718 = vrsqrt.pop %v2321
  %v2719 = vmul.f32 %v2718, %v2321
  %v2720 = vmul.f32 %v2719, %v2718
  %v2721 = vmul.f32 0.5, %v2720
  %v2722 = vsub.f32 1.5, %v2721
  %v2723 = vmul.f32 %v2718, %v2722
  %vm2724 = vweird.f32 %v2321
  %vm2725 = vweird.f32 %v2718
  %vm2726 = vmor %vm2724, %vm2725
  %v2727 = vsel %vm2726, %v2718, %v2723
  %v2728 = vrsqrt.pop %v2322
  %v2729 = vmul.f32 %v2728, %v2322
  %v2730 = vmul.f32 %v2729, %v2728
  %v2731 = vmul.f32 0.5, %v2730
  %v2732 = vsub.f32 1.5, %v2731
  %v2733 = vmul.f32 %v2728, %v2732
  %vm2734 = vweird.f32 %v2322
  %vm2735 = vweird.f32 %v2728
  %vm2736 = vmor %vm2734, %vm2735
  %v2737 = vsel %vm2736, %v2728, %v2733
  %v2738 = vrsqrt.pop %v2323
  %v2739 = vmul.f32 %v2738, %v2323
  %v2740 = vmul.f32 %v2739, %v2738
  %v2741 = vmul.f32 0.5, %v2740
  %v2742 = vsub.f32 1.5, %v2741
  %v2743 = vmul.f32 %v2738, %v2742
  %vm2744 = vweird.f32 %v2323
  %vm2745 = vweird.f32 %v2738
  %vm2746 = vmor %vm2744, %vm2745
  %v2747 = vsel %vm2746, %v2738, %v2743
  %v2748 = vrsqrt.pop %v2324
  %v2749 = vmul.f32 %v2748, %v2324
  %v2750 = vmul.f32 %v2749, %v2748
  %v2751 = vmul.f32 0.5, %v2750
  %v2752 = vsub.f32 1.5, %v2751
  %v2753 = vmul.f32 %v2748, %v2752
  %vm2754 = vweird.f32 %v2324
  %vm2755 = vweird.f32 %v2748
  %vm2756 = vmor %vm2754, %vm2755
  %v2757 = vsel %vm2756, %v2748, %v2753
  %v2758 = vrsqrt.pop %v2325
  %v2759 = vmul.f32 %v2758, %v2325
  %v2760 = vmul.f32 %v2759, %v2758
  %v2761 = vmul.f32 0.5, %v2760
  %v2762 = vsub.f32 1.5, %v2761
  %v2763 = vmul.f32 %v2758, %v2762
  %vm2764 = vweird.f32 %v2325
  %vm2765 = vweird.f32 %v2758
  %vm2766 = vmor %vm2764, %vm2765
  %v2767 = vsel %vm2766, %v2758, %v2763
  %v2768 = vrsqrt.pop %v2326
  %v2769 = vmul.f32 %v2768, %v2326
  %v2770 = vmul.f32 %v2769, %v2768
  %v2771 = vmul.f32 0.5, %v2770
  %v2772 = vsub.f32 1.5, %v2771
  %v2773 = vmul.f32 %v2768, %v2772
  %vm2774 = vweird.f32 %v2326
  %vm2775 = vweird.f32 %v2768
  %vm2776 = vmor %vm2774, %vm2775
  %v2777 = vsel %vm2776, %v2768, %v2773
  %v2778 = vrsqrt.pop %v2327
  %v2779 = vmul.f32 %v2778, %v2327
  %v2780 = vmul.f32 %v2779, %v2778
  %v2781 = vmul.f32 0.5, %v2780
  %v2782 = vsub.f32 1.5, %v2781
  %v2783 = vmul.f32 %v2778, %v2782
  %vm2784 = vweird.f32 %v2327
  %vm2785 = vweird.f32 %v2778
  %vm2786 = vmor %vm2784, %vm2785
  %v2787 = vsel %vm2786, %v2778, %v2783
  %v2788 = vrsqrt.pop %v2328
  %v2789 = vmul.f32 %v2788, %v2328
  %v2790 = vmul.f32 %v2789, %v2788
  %v2791 = vmul.f32 0.5, %v2790
  %v2792 = vsub.f32 1.5, %v2791
  %v2793 = vmul.f32 %v2788, %v2792
  %vm2794 = vweird.f32 %v2328
  %vm2795 = vweird.f32 %v2788
  %vm2796 = vmor %vm2794, %vm2795
  %v2797 = vsel %vm2796, %v2788, %v2793
  %v2798 = vrsqrt.pop %v2329
  %v2799 = vmul.f32 %v2798, %v2329
  %v2800 = vmul.f32 %v2799, %v2798
  %v2801 = vmul.f32 0.5, %v2800
  %v2802 = vsub.f32 1.5, %v2801
  %v2803 = vmul.f32 %v2798, %v2802
  %vm2804 = vweird.f32 %v2329
  %vm2805 = vweird.f32 %v2798
  %vm2806 = vmor %vm2804, %vm2805
  %v2807 = vsel %vm2806, %v2798, %v2803
  %v2808 = vrsqrt.pop %v2330
  %v2809 = vmul.f32 %v2808, %v2330
  %v2810 = vmul.f32 %v2809, %v2808
  %v2811 = vmul.f32 0.5, %v2810
  %v2812 = vsub.f32 1.5, %v2811
  %v2813 = vmul.f32 %v2808, %v2812
  %vm2814 = vweird.f32 %v2330
  %vm2815 = vweird.f32 %v2808
  %vm2816 = vmor %vm2814, %vm2815
  %v2817 = vsel %vm2816, %v2808, %v2813
  %v2818 = vrsqrt.pop %v2331
  %v2819 = vmul.f32 %v2818, %v2331
  %v2820 = vmul.f32 %v2819, %v2818
  %v2821 = vmul.f32 0.5, %v2820
  %v2822 = vsub.f32 1.5, %v2821
  %v2823 = vmul.f32 %v2818, %v2822
  %vm2824 = vweird.f32 %v2331
  %vm2825 = vweird.f32 %v2818
  %vm2826 = vmor %vm2824, %vm2825
  %v2827 = vsel %vm2826, %v2818, %v2823
  %v2828 = vrsqrt.pop %v2332
  %v2829 = vmul.f32 %v2828, %v2332
  %v2830 = vmul.f32 %v2829, %v2828
  %v2831 = vmul.f32 0.5, %v2830
  %v2832 = vsub.f32 1.5, %v2831
  %v2833 = vmul.f32 %v2828, %v2832
  %vm2834 = vweird.f32 %v2332
  %vm2835 = vweird.f32 %v2828
  %vm2836 = vmor %vm2834, %vm2835
  %v2837 = vsel %vm2836, %v2828, %v2833
  %v2838 = vrsqrt.pop %v2333
  %v2839 = vmul.f32 %v2838, %v2333
  %v2840 = vmul.f32 %v2839, %v2838
  %v2841 = vmul.f32 0.5, %v2840
  %v2842 = vsub.f32 1.5, %v2841
  %v2843 = vmul.f32 %v2838, %v2842
  %vm2844 = vweird.f32 %v2333
  %vm2845 = vweird.f32 %v2838
  %vm2846 = vmor %vm2844, %vm2845
  %v2847 = vsel %vm2846, %v2838, %v2843
  %v2848 = vrsqrt.pop %v2334
  %v2849 = vmul.f32 %v2848, %v2334
  %v2850 = vmul.f32 %v2849, %v2848
  %v2851 = vmul.f32 0.5, %v2850
  %v2852 = vsub.f32 1.5, %v2851
  %v2853 = vmul.f32 %v2848, %v2852
  %vm2854 = vweird.f32 %v2334
  %vm2855 = vweird.f32 %v2848
  %vm2856 = vmor %vm2854, %vm2855
  %v2857 = vsel %vm2856, %v2848, %v2853
  %v2858 = vrsqrt.pop %v2335
  %v2859 = vmul.f32 %v2858, %v2335
  %v2860 = vmul.f32 %v2859, %v2858
  %v2861 = vmul.f32 0.5, %v2860
  %v2862 = vsub.f32 1.5, %v2861
  %v2863 = vmul.f32 %v2858, %v2862
  %vm2864 = vweird.f32 %v2335
  %vm2865 = vweird.f32 %v2858
  %vm2866 = vmor %vm2864, %vm2865
  %v2867 = vsel %vm2866, %v2858, %v2863
  %v2868 = vrsqrt.pop %v2336
  %v2869 = vmul.f32 %v2868, %v2336
  %v2870 = vmul.f32 %v2869, %v2868
  %v2871 = vmul.f32 0.5, %v2870
  %v2872 = vsub.f32 1.5, %v2871
  %v2873 = vmul.f32 %v2868, %v2872
  %vm2874 = vweird.f32 %v2336
  %vm2875 = vweird.f32 %v2868
  %vm2876 = vmor %vm2874, %vm2875
  %v2877 = vsel %vm2876, %v2868, %v2873
  %v2878 = vrsqrt.pop %v2337
  %v2879 = vmul.f32 %v2878, %v2337
  %v2880 = vmul.f32 %v2879, %v2878
  %v2881 = vmul.f32 0.5, %v2880
  %v2882 = vsub.f32 1.5, %v2881
  %v2883 = vmul.f32 %v2878, %v2882
  %vm2884 = vweird.f32 %v2337
  %vm2885 = vweird.f32 %v2878
  %vm2886 = vmor %vm2884, %vm2885
  %v2887 = vsel %vm2886, %v2878, %v2883
  %v2888 = vrsqrt.pop %v2338
  %v2889 = vmul.f32 %v2888, %v2338
  %v2890 = vmul.f32 %v2889, %v2888
  %v2891 = vmul.f32 0.5, %v2890
  %v2892 = vsub.f32 1.5, %v2891
  %v2893 = vmul.f32 %v2888, %v2892
  %vm2894 = vweird.f32 %v2338
  %vm2895 = vweird.f32 %v2888
  %vm2896 = vmor %vm2894, %vm2895
  %v2897 = vsel %vm2896, %v2888, %v2893
  %v2898 = vrsqrt.pop %v2339
  %v2899 = vmul.f32 %v2898, %v2339
  %v2900 = vmul.f32 %v2899, %v2898
  %v2901 = vmul.f32 0.5, %v2900
  %v2902 = vsub.f32 1.5, %v2901
  %v2903 = vmul.f32 %v2898, %v2902
  %vm2904 = vweird.f32 %v2339
  %vm2905 = vweird.f32 %v2898
  %vm2906 = vmor %vm2904, %vm2905
  %v2907 = vsel %vm2906, %v2898, %v2903
  %v2908 = vrsqrt.pop %v2340
  %v2909 = vmul.f32 %v2908, %v2340
  %v2910 = vmul.f32 %v2909, %v2908
  %v2911 = vmul.f32 0.5, %v2910
  %v2912 = vsub.f32 1.5, %v2911
  %v2913 = vmul.f32 %v2908, %v2912
  %vm2914 = vweird.f32 %v2340
  %vm2915 = vweird.f32 %v2908
  %vm2916 = vmor %vm2914, %vm2915
  %v2917 = vsel %vm2916, %v2908, %v2913
  %v2918 = vrsqrt.pop %v2341
  %v2919 = vmul.f32 %v2918, %v2341
  %v2920 = vmul.f32 %v2919, %v2918
  %v2921 = vmul.f32 0.5, %v2920
  %v2922 = vsub.f32 1.5, %v2921
  %v2923 = vmul.f32 %v2918, %v2922
  %vm2924 = vweird.f32 %v2341
  %vm2925 = vweird.f32 %v2918
  %vm2926 = vmor %vm2924, %vm2925
  %v2927 = vsel %vm2926, %v2918, %v2923
  %v2928 = vrsqrt.pop %v2342
  %v2929 = vmul.f32 %v2928, %v2342
  %v2930 = vmul.f32 %v2929, %v2928
  %v2931 = vmul.f32 0.5, %v2930
  %v2932 = vsub.f32 1.5, %v2931
  %v2933 = vmul.f32 %v2928, %v2932
  %vm2934 = vweird.f32 %v2342
  %vm2935 = vweird.f32 %v2928
  %vm2936 = vmor %vm2934, %vm2935
  %v2937 = vsel %vm2936, %v2928, %v2933
  %v2938 = vrsqrt.pop %v2343
  %v2939 = vmul.f32 %v2938, %v2343
  %v2940 = vmul.f32 %v2939, %v2938
  %v2941 = vmul.f32 0.5, %v2940
  %v2942 = vsub.f32 1.5, %v2941
  %v2943 = vmul.f32 %v2938, %v2942
  %vm2944 = vweird.f32 %v2343
  %vm2945 = vweird.f32 %v2938
  %vm2946 = vmor %vm2944, %vm2945
  %v2947 = vsel %vm2946, %v2938, %v2943
  %v2948 = vrsqrt.pop %v2344
  %v2949 = vmul.f32 %v2948, %v2344
  %v2950 = vmul.f32 %v2949, %v2948
  %v2951 = vmul.f32 0.5, %v2950
  %v2952 = vsub.f32 1.5, %v2951
  %v2953 = vmul.f32 %v2948, %v2952
  %vm2954 = vweird.f32 %v2344
  %vm2955 = vweird.f32 %v2948
  %vm2956 = vmor %vm2954, %vm2955
  %v2957 = vsel %vm2956, %v2948, %v2953
  %v2958 = vrsqrt.pop %v2345
  %v2959 = vmul.f32 %v2958, %v2345
  %v2960 = vmul.f32 %v2959, %v2958
  %v2961 = vmul.f32 0.5, %v2960
  %v2962 = vsub.f32 1.5, %v2961
  %v2963 = vmul.f32 %v2958, %v2962
  %vm2964 = vweird.f32 %v2345
  %vm2965 = vweird.f32 %v2958
  %vm2966 = vmor %vm2964, %vm2965
  %v2967 = vsel %vm2966, %v2958, %v2963
  %v2968 = vrsqrt.pop %v2346
  %v2969 = vmul.f32 %v2968, %v2346
  %v2970 = vmul.f32 %v2969, %v2968
  %v2971 = vmul.f32 0.5, %v2970
  %v2972 = vsub.f32 1.5, %v2971
  %v2973 = vmul.f32 %v2968, %v2972
  %vm2974 = vweird.f32 %v2346
  %vm2975 = vweird.f32 %v2968
  %vm2976 = vmor %vm2974, %vm2975
  %v2977 = vsel %vm2976, %v2968, %v2973
  %v2978 = vrsqrt.pop %v2347
  %v2979 = vmul.f32 %v2978, %v2347
  %v2980 = vmul.f32 %v2979, %v2978
  %v2981 = vmul.f32 0.5, %v2980
  %v2982 = vsub.f32 1.5, %v2981
  %v2983 = vmul.f32 %v2978, %v2982
  %vm2984 = vweird.f32 %v2347
  %vm2985 = vweird.f32 %v2978
  %vm2986 = vmor %vm2984, %vm2985
  %v2987 = vsel %vm2986, %v2978, %v2983
  %v2988 = vmul.f32 %v1324, %v2357
  %v2989 = vmul.f32 %v1325, %v2367
  %v2990 = vmul.f32 %v1326, %v2377
  %v2991 = vmul.f32 %v1327, %v2387
  %v2992 = vmul.f32 %v1328, %v2397
  %v2993 = vmul.f32 %v1329, %v2407
  %v2994 = vmul.f32 %v1330, %v2417
  %v2995 = vmul.f32 %v1331, %v2427
  %v2996 = vmul.f32 %v1332, %v2437
  %v2997 = vmul.f32 %v1333, %v2447
  %v2998 = vmul.f32 %v1334, %v2457
  %v2999 = vmul.f32 %v1335, %v2467
  %v3000 = vmul.f32 %v1336, %v2477
  %v3001 = vmul.f32 %v1337, %v2487
  %v3002 = vmul.f32 %v1338, %v2497
  %v3003 = vmul.f32 %v1339, %v2507
  %v3004 = vmul.f32 %v1340, %v2517
  %v3005 = vmul.f32 %v1341, %v2527
  %v3006 = vmul.f32 %v1342, %v2537
  %v3007 = vmul.f32 %v1343, %v2547
  %v3008 = vmul.f32 %v1344, %v2557
  %v3009 = vmul.f32 %v1345, %v2567
  %v3010 = vmul.f32 %v1346, %v2577
  %v3011 = vmul.f32 %v1347, %v2587
  %v3012 = vmul.f32 %v1348, %v2597
  %v3013 = vmul.f32 %v1349, %v2607
  %v3014 = vmul.f32 %v1350, %v2617
  %v3015 = vmul.f32 %v1351, %v2627
  %v3016 = vmul.f32 %v1352, %v2637
  %v3017 = vmul.f32 %v1353, %v2647
  %v3018 = vmul.f32 %v1354, %v2657
  %v3019 = vmul.f32 %v1355, %v2667
  %v3020 = vmul.f32 %v1356, %v2677
  %v3021 = vmul.f32 %v1357, %v2687
  %v3022 = vmul.f32 %v1358, %v2697
  %v3023 = vmul.f32 %v1359, %v2707
  %v3024 = vmul.f32 %v1360, %v2717
  %v3025 = vmul.f32 %v1361, %v2727
  %v3026 = vmul.f32 %v1362, %v2737
  %v3027 = vmul.f32 %v1363, %v2747
  %v3028 = vmul.f32 %v1364, %v2757
  %v3029 = vmul.f32 %v1365, %v2767
  %v3030 = vmul.f32 %v1366, %v2777
  %v3031 = vmul.f32 %v1367, %v2787
  %v3032 = vmul.f32 %v1368, %v2797
  %v3033 = vmul.f32 %v1369, %v2807
  %v3034 = vmul.f32 %v1370, %v2817
  %v3035 = vmul.f32 %v1371, %v2827
  %v3036 = vmul.f32 %v1372, %v2837
  %v3037 = vmul.f32 %v1373, %v2847
  %v3038 = vmul.f32 %v1374, %v2857
  %v3039 = vmul.f32 %v1375, %v2867
  %v3040 = vmul.f32 %v1376, %v2877
  %v3041 = vmul.f32 %v1377, %v2887
  %v3042 = vmul.f32 %v1378, %v2897
  %v3043 = vmul.f32 %v1379, %v2907
  %v3044 = vmul.f32 %v1380, %v2917
  %v3045 = vmul.f32 %v1381, %v2927
  %v3046 = vmul.f32 %v1382, %v2937
  %v3047 = vmul.f32 %v1383, %v2947
  %v3048 = vmul.f32 %v1384, %v2957
  %v3049 = vmul.f32 %v1385, %v2967
  %v3050 = vmul.f32 %v1386, %v2977
  %v3051 = vmul.f32 %v1387, %v2987
  %v3052 = vld [vmem:[%s2] sm:$0x1]
  %v3054 = vperm.slane %v3052, 0
  %v3056 = vmul.f32 %v2988, %v3054
  %v3057 = vmul.f32 %v2989, %v3054
  %v3058 = vmul.f32 %v2990, %v3054
  %v3059 = vmul.f32 %v2991, %v3054
  %v3060 = vmul.f32 %v2992, %v3054
  %v3061 = vmul.f32 %v2993, %v3054
  %v3062 = vmul.f32 %v2994, %v3054
  %v3063 = vmul.f32 %v2995, %v3054
  %v3064 = vmul.f32 %v2996, %v3054
  %v3065 = vmul.f32 %v2997, %v3054
  %v3066 = vmul.f32 %v2998, %v3054
  %v3067 = vmul.f32 %v2999, %v3054
  %v3068 = vmul.f32 %v3000, %v3054
  %v3069 = vmul.f32 %v3001, %v3054
  %v3070 = vmul.f32 %v3002, %v3054
  %v3071 = vmul.f32 %v3003, %v3054
  %v3072 = vmul.f32 %v3004, %v3054
  %v3073 = vmul.f32 %v3005, %v3054
  %v3074 = vmul.f32 %v3006, %v3054
  %v3075 = vmul.f32 %v3007, %v3054
  %v3076 = vmul.f32 %v3008, %v3054
  %v3077 = vmul.f32 %v3009, %v3054
  %v3078 = vmul.f32 %v3010, %v3054
  %v3079 = vmul.f32 %v3011, %v3054
  %v3080 = vmul.f32 %v3012, %v3054
  %v3081 = vmul.f32 %v3013, %v3054
  %v3082 = vmul.f32 %v3014, %v3054
  %v3083 = vmul.f32 %v3015, %v3054
  %v3084 = vmul.f32 %v3016, %v3054
  %v3085 = vmul.f32 %v3017, %v3054
  %v3086 = vmul.f32 %v3018, %v3054
  %v3087 = vmul.f32 %v3019, %v3054
  %v3088 = vmul.f32 %v3020, %v3054
  %v3089 = vmul.f32 %v3021, %v3054
  %v3090 = vmul.f32 %v3022, %v3054
  %v3091 = vmul.f32 %v3023, %v3054
  %v3092 = vmul.f32 %v3024, %v3054
  %v3093 = vmul.f32 %v3025, %v3054
  %v3094 = vmul.f32 %v3026, %v3054
  %v3095 = vmul.f32 %v3027, %v3054
  %v3096 = vmul.f32 %v3028, %v3054
  %v3097 = vmul.f32 %v3029, %v3054
  %v3098 = vmul.f32 %v3030, %v3054
  %v3099 = vmul.f32 %v3031, %v3054
  %v3100 = vmul.f32 %v3032, %v3054
  %v3101 = vmul.f32 %v3033, %v3054
  %v3102 = vmul.f32 %v3034, %v3054
  %v3103 = vmul.f32 %v3035, %v3054
  %v3104 = vmul.f32 %v3036, %v3054
  %v3105 = vmul.f32 %v3037, %v3054
  %v3106 = vmul.f32 %v3038, %v3054
  %v3107 = vmul.f32 %v3039, %v3054
  %v3108 = vmul.f32 %v3040, %v3054
  %v3109 = vmul.f32 %v3041, %v3054
  %v3110 = vmul.f32 %v3042, %v3054
  %v3111 = vmul.f32 %v3043, %v3054
  %v3112 = vmul.f32 %v3044, %v3054
  %v3113 = vmul.f32 %v3045, %v3054
  %v3114 = vmul.f32 %v3046, %v3054
  %v3115 = vmul.f32 %v3047, %v3054
  %v3116 = vmul.f32 %v3048, %v3054
  %v3117 = vmul.f32 %v3049, %v3054
  %v3118 = vmul.f32 %v3050, %v3054
  %v3119 = vmul.f32 %v3051, %v3054
  %v3120 = vld [vmem:[%s3] sm:$0x1]
  %v3122 = vperm.slane %v3120, 0
  %v3124 = vadd.f32 %v3056, %v3122
  %v3125 = vadd.f32 %v3057, %v3122
  %v3126 = vadd.f32 %v3058, %v3122
  %v3127 = vadd.f32 %v3059, %v3122
  %v3128 = vadd.f32 %v3060, %v3122
  %v3129 = vadd.f32 %v3061, %v3122
  %v3130 = vadd.f32 %v3062, %v3122
  %v3131 = vadd.f32 %v3063, %v3122
  %v3132 = vadd.f32 %v3064, %v3122
  %v3133 = vadd.f32 %v3065, %v3122
  %v3134 = vadd.f32 %v3066, %v3122
  %v3135 = vadd.f32 %v3067, %v3122
  %v3136 = vadd.f32 %v3068, %v3122
  %v3137 = vadd.f32 %v3069, %v3122
  %v3138 = vadd.f32 %v3070, %v3122
  %v3139 = vadd.f32 %v3071, %v3122
  %v3140 = vadd.f32 %v3072, %v3122
  %v3141 = vadd.f32 %v3073, %v3122
  %v3142 = vadd.f32 %v3074, %v3122
  %v3143 = vadd.f32 %v3075, %v3122
  %v3144 = vadd.f32 %v3076, %v3122
  %v3145 = vadd.f32 %v3077, %v3122
  %v3146 = vadd.f32 %v3078, %v3122
  %v3147 = vadd.f32 %v3079, %v3122
  %v3148 = vadd.f32 %v3080, %v3122
  %v3149 = vadd.f32 %v3081, %v3122
  %v3150 = vadd.f32 %v3082, %v3122
  %v3151 = vadd.f32 %v3083, %v3122
  %v3152 = vadd.f32 %v3084, %v3122
  %v3153 = vadd.f32 %v3085, %v3122
  %v3154 = vadd.f32 %v3086, %v3122
  %v3155 = vadd.f32 %v3087, %v3122
  %v3156 = vadd.f32 %v3088, %v3122
  %v3157 = vadd.f32 %v3089, %v3122
  %v3158 = vadd.f32 %v3090, %v3122
  %v3159 = vadd.f32 %v3091, %v3122
  %v3160 = vadd.f32 %v3092, %v3122
  %v3161 = vadd.f32 %v3093, %v3122
  %v3162 = vadd.f32 %v3094, %v3122
  %v3163 = vadd.f32 %v3095, %v3122
  %v3164 = vadd.f32 %v3096, %v3122
  %v3165 = vadd.f32 %v3097, %v3122
  %v3166 = vadd.f32 %v3098, %v3122
  %v3167 = vadd.f32 %v3099, %v3122
  %v3168 = vadd.f32 %v3100, %v3122
  %v3169 = vadd.f32 %v3101, %v3122
  %v3170 = vadd.f32 %v3102, %v3122
  %v3171 = vadd.f32 %v3103, %v3122
  %v3172 = vadd.f32 %v3104, %v3122
  %v3173 = vadd.f32 %v3105, %v3122
  %v3174 = vadd.f32 %v3106, %v3122
  %v3175 = vadd.f32 %v3107, %v3122
  %v3176 = vadd.f32 %v3108, %v3122
  %v3177 = vadd.f32 %v3109, %v3122
  %v3178 = vadd.f32 %v3110, %v3122
  %v3179 = vadd.f32 %v3111, %v3122
  %v3180 = vadd.f32 %v3112, %v3122
  %v3181 = vadd.f32 %v3113, %v3122
  %v3182 = vadd.f32 %v3114, %v3122
  %v3183 = vadd.f32 %v3115, %v3122
  %v3184 = vadd.f32 %v3116, %v3122
  %v3185 = vadd.f32 %v3117, %v3122
  %v3186 = vadd.f32 %v3118, %v3122
  %v3187 = vadd.f32 %v3119, %v3122
  %3188 = vst.msk [vmem:[%s4] sm:$0xff] %vm82, %v3124
  %3189 = vst.msk [vmem:[%s4 + $0x8] sm:$0xff] %vm82, %v3125
  %3190 = vst.msk [vmem:[%s4 + $0x20] sm:$0xff] %vm82, %v3126
  %3191 = vst.msk [vmem:[%s4 + $0x28] sm:$0xff] %vm82, %v3127
  %3192 = vst.msk [vmem:[%s4 + $0x40] sm:$0xff] %vm82, %v3128
  %3193 = vst.msk [vmem:[%s4 + $0x48] sm:$0xff] %vm82, %v3129
  %3194 = vst.msk [vmem:[%s4 + $0x60] sm:$0xff] %vm82, %v3130
  %3195 = vst.msk [vmem:[%s4 + $0x68] sm:$0xff] %vm82, %v3131
  %3196 = vst.msk [vmem:[%s4 + $0x80] sm:$0xff] %vm82, %v3132
  %3197 = vst.msk [vmem:[%s4 + $0x88] sm:$0xff] %vm82, %v3133
  %3198 = vst.msk [vmem:[%s4 + $0xa0] sm:$0xff] %vm82, %v3134
  %3199 = vst.msk [vmem:[%s4 + $0xa8] sm:$0xff] %vm82, %v3135
  %3200 = vst.msk [vmem:[%s4 + $0xc0] sm:$0xff] %vm82, %v3136
  %3201 = vst.msk [vmem:[%s4 + $0xc8] sm:$0xff] %vm82, %v3137
  %3202 = vst.msk [vmem:[%s4 + $0xe0] sm:$0xff] %vm82, %v3138
  %3203 = vst.msk [vmem:[%s4 + $0xe8] sm:$0xff] %vm82, %v3139
  %3204 = vst.msk [vmem:[%s4 + $0x100] sm:$0xff] %vm82, %v3140
  %3205 = vst.msk [vmem:[%s4 + $0x108] sm:$0xff] %vm82, %v3141
  %3206 = vst.msk [vmem:[%s4 + $0x120] sm:$0xff] %vm82, %v3142
  %3207 = vst.msk [vmem:[%s4 + $0x128] sm:$0xff] %vm82, %v3143
  %3208 = vst.msk [vmem:[%s4 + $0x140] sm:$0xff] %vm82, %v3144
  %3209 = vst.msk [vmem:[%s4 + $0x148] sm:$0xff] %vm82, %v3145
  %3210 = vst.msk [vmem:[%s4 + $0x160] sm:$0xff] %vm82, %v3146
  %3211 = vst.msk [vmem:[%s4 + $0x168] sm:$0xff] %vm82, %v3147
  %3212 = vst.msk [vmem:[%s4 + $0x180] sm:$0xff] %vm82, %v3148
  %3213 = vst.msk [vmem:[%s4 + $0x188] sm:$0xff] %vm82, %v3149
  %3214 = vst.msk [vmem:[%s4 + $0x1a0] sm:$0xff] %vm82, %v3150
  %3215 = vst.msk [vmem:[%s4 + $0x1a8] sm:$0xff] %vm82, %v3151
  %3216 = vst.msk [vmem:[%s4 + $0x1c0] sm:$0xff] %vm82, %v3152
  %3217 = vst.msk [vmem:[%s4 + $0x1c8] sm:$0xff] %vm82, %v3153
  %3218 = vst.msk [vmem:[%s4 + $0x1e0] sm:$0xff] %vm82, %v3154
  %3219 = vst.msk [vmem:[%s4 + $0x1e8] sm:$0xff] %vm82, %v3155
  %3220 = vst.msk [vmem:[%s4 + $0x200] sm:$0xff] %vm82, %v3156
  %3221 = vst.msk [vmem:[%s4 + $0x208] sm:$0xff] %vm82, %v3157
  %3222 = vst.msk [vmem:[%s4 + $0x220] sm:$0xff] %vm82, %v3158
  %3223 = vst.msk [vmem:[%s4 + $0x228] sm:$0xff] %vm82, %v3159
  %3224 = vst.msk [vmem:[%s4 + $0x240] sm:$0xff] %vm82, %v3160
  %3225 = vst.msk [vmem:[%s4 + $0x248] sm:$0xff] %vm82, %v3161
  %3226 = vst.msk [vmem:[%s4 + $0x260] sm:$0xff] %vm82, %v3162
  %3227 = vst.msk [vmem:[%s4 + $0x268] sm:$0xff] %vm82, %v3163
  %3228 = vst.msk [vmem:[%s4 + $0x280] sm:$0xff] %vm82, %v3164
  %3229 = vst.msk [vmem:[%s4 + $0x288] sm:$0xff] %vm82, %v3165
  %3230 = vst.msk [vmem:[%s4 + $0x2a0] sm:$0xff] %vm82, %v3166
  %3231 = vst.msk [vmem:[%s4 + $0x2a8] sm:$0xff] %vm82, %v3167
  %3232 = vst.msk [vmem:[%s4 + $0x2c0] sm:$0xff] %vm82, %v3168
  %3233 = vst.msk [vmem:[%s4 + $0x2c8] sm:$0xff] %vm82, %v3169
  %3234 = vst.msk [vmem:[%s4 + $0x2e0] sm:$0xff] %vm82, %v3170
  %3235 = vst.msk [vmem:[%s4 + $0x2e8] sm:$0xff] %vm82, %v3171
  %3236 = vst.msk [vmem:[%s4 + $0x300] sm:$0xff] %vm82, %v3172
  %3237 = vst.msk [vmem:[%s4 + $0x308] sm:$0xff] %vm82, %v3173
  %3238 = vst.msk [vmem:[%s4 + $0x320] sm:$0xff] %vm82, %v3174
  %3239 = vst.msk [vmem:[%s4 + $0x328] sm:$0xff] %vm82, %v3175
  %3240 = vst.msk [vmem:[%s4 + $0x340] sm:$0xff] %vm82, %v3176
  %3241 = vst.msk [vmem:[%s4 + $0x348] sm:$0xff] %vm82, %v3177
  %3242 = vst.msk [vmem:[%s4 + $0x360] sm:$0xff] %vm82, %v3178
  %3243 = vst.msk [vmem:[%s4 + $0x368] sm:$0xff] %vm82, %v3179
  %3244 = vst.msk [vmem:[%s4 + $0x380] sm:$0xff] %vm82, %v3180
  %3245 = vst.msk [vmem:[%s4 + $0x388] sm:$0xff] %vm82, %v3181
  %3246 = vst.msk [vmem:[%s4 + $0x3a0] sm:$0xff] %vm82, %v3182
  %3247 = vst.msk [vmem:[%s4 + $0x3a8] sm:$0xff] %vm82, %v3183
  %3248 = vst.msk [vmem:[%s4 + $0x3c0] sm:$0xff] %vm82, %v3184
  %3249 = vst.msk [vmem:[%s4 + $0x3c8] sm:$0xff] %vm82, %v3185
  %3250 = vst.msk [vmem:[%s4 + $0x3e0] sm:$0xff] %vm82, %v3186
  %3251 = vst.msk [vmem:[%s4 + $0x3e8] sm:$0xff] %vm82, %v3187
  %3252 = vrot.lane.b32.xlu0 %v297, 124
  %v3253 = vpop.permute.xlu0 %3252
  %3254 = vrot.lane.b32.xlu0 %v300, 124
  %v3255 = vpop.permute.xlu0 %3254
  %3256 = vrot.lane.b32.xlu0 %v303, 124
  %v3257 = vpop.permute.xlu0 %3256
  %3258 = vrot.lane.b32.xlu0 %v306, 124
  %v3259 = vpop.permute.xlu0 %3258
  %3260 = vrot.lane.b32.xlu0 %v309, 124
  %v3261 = vpop.permute.xlu0 %3260
  %3262 = vrot.lane.b32.xlu0 %v312, 124
  %v3263 = vpop.permute.xlu0 %3262
  %3264 = vrot.lane.b32.xlu0 %v315, 124
  %v3265 = vpop.permute.xlu0 %3264
  %3266 = vrot.lane.b32.xlu0 %v318, 124
  %v3267 = vpop.permute.xlu0 %3266
  %3268 = vrot.lane.b32.xlu0 %v321, 124
  %v3269 = vpop.permute.xlu0 %3268
  %3270 = vrot.lane.b32.xlu0 %v324, 124
  %v3271 = vpop.permute.xlu0 %3270
  %3272 = vrot.lane.b32.xlu0 %v327, 124
  %v3273 = vpop.permute.xlu0 %3272
  %3274 = vrot.lane.b32.xlu0 %v330, 124
  %v3275 = vpop.permute.xlu0 %3274
  %3276 = vrot.lane.b32.xlu0 %v333, 124
  %v3277 = vpop.permute.xlu0 %3276
  %3278 = vrot.lane.b32.xlu0 %v336, 124
  %v3279 = vpop.permute.xlu0 %3278
  %3280 = vrot.lane.b32.xlu0 %v339, 124
  %v3281 = vpop.permute.xlu0 %3280
  %3282 = vrot.lane.b32.xlu0 %v342, 124
  %v3283 = vpop.permute.xlu0 %3282
  %3284 = vrot.lane.b32.xlu0 %v345, 124
  %v3285 = vpop.permute.xlu0 %3284
  %3286 = vrot.lane.b32.xlu0 %v348, 124
  %v3287 = vpop.permute.xlu0 %3286
  %3288 = vrot.lane.b32.xlu0 %v351, 124
  %v3289 = vpop.permute.xlu0 %3288
  %3290 = vrot.lane.b32.xlu0 %v354, 124
  %v3291 = vpop.permute.xlu0 %3290
  %3292 = vrot.lane.b32.xlu0 %v357, 124
  %v3293 = vpop.permute.xlu0 %3292
  %3294 = vrot.lane.b32.xlu0 %v360, 124
  %v3295 = vpop.permute.xlu0 %3294
  %3296 = vrot.lane.b32.xlu0 %v363, 124
  %v3297 = vpop.permute.xlu0 %3296
  %3298 = vrot.lane.b32.xlu0 %v366, 124
  %v3299 = vpop.permute.xlu0 %3298
  %3300 = vrot.lane.b32.xlu0 %v369, 124
  %v3301 = vpop.permute.xlu0 %3300
  %3302 = vrot.lane.b32.xlu0 %v372, 124
  %v3303 = vpop.permute.xlu0 %3302
  %3304 = vrot.lane.b32.xlu0 %v375, 124
  %v3305 = vpop.permute.xlu0 %3304
  %3306 = vrot.lane.b32.xlu0 %v378, 124
  %v3307 = vpop.permute.xlu0 %3306
  %3308 = vrot.lane.b32.xlu0 %v381, 124
  %v3309 = vpop.permute.xlu0 %3308
  %3310 = vrot.lane.b32.xlu0 %v384, 124
  %v3311 = vpop.permute.xlu0 %3310
  %3312 = vrot.lane.b32.xlu0 %v387, 124
  %v3313 = vpop.permute.xlu0 %3312
  %3314 = vrot.lane.b32.xlu0 %v390, 124
  %v3315 = vpop.permute.xlu0 %3314
  %3316 = vrot.lane.b32.xlu0 %v393, 124
  %v3317 = vpop.permute.xlu0 %3316
  %3318 = vrot.lane.b32.xlu0 %v396, 124
  %v3319 = vpop.permute.xlu0 %3318
  %3320 = vrot.lane.b32.xlu0 %v399, 124
  %v3321 = vpop.permute.xlu0 %3320
  %3322 = vrot.lane.b32.xlu0 %v402, 124
  %v3323 = vpop.permute.xlu0 %3322
  %3324 = vrot.lane.b32.xlu0 %v405, 124
  %v3325 = vpop.permute.xlu0 %3324
  %3326 = vrot.lane.b32.xlu0 %v408, 124
  %v3327 = vpop.permute.xlu0 %3326
  %3328 = vrot.lane.b32.xlu0 %v411, 124
  %v3329 = vpop.permute.xlu0 %3328
  %3330 = vrot.lane.b32.xlu0 %v414, 124
  %v3331 = vpop.permute.xlu0 %3330
  %3332 = vrot.lane.b32.xlu0 %v417, 124
  %v3333 = vpop.permute.xlu0 %3332
  %3334 = vrot.lane.b32.xlu0 %v420, 124
  %v3335 = vpop.permute.xlu0 %3334
  %3336 = vrot.lane.b32.xlu0 %v423, 124
  %v3337 = vpop.permute.xlu0 %3336
  %3338 = vrot.lane.b32.xlu0 %v426, 124
  %v3339 = vpop.permute.xlu0 %3338
  %3340 = vrot.lane.b32.xlu0 %v429, 124
  %v3341 = vpop.permute.xlu0 %3340
  %3342 = vrot.lane.b32.xlu0 %v432, 124
  %v3343 = vpop.permute.xlu0 %3342
  %3344 = vrot.lane.b32.xlu0 %v435, 124
  %v3345 = vpop.permute.xlu0 %3344
  %3346 = vrot.lane.b32.xlu0 %v438, 124
  %v3347 = vpop.permute.xlu0 %3346
  %3348 = vrot.lane.b32.xlu0 %v441, 124
  %v3349 = vpop.permute.xlu0 %3348
  %3350 = vrot.lane.b32.xlu0 %v444, 124
  %v3351 = vpop.permute.xlu0 %3350
  %3352 = vrot.lane.b32.xlu0 %v447, 124
  %v3353 = vpop.permute.xlu0 %3352
  %3354 = vrot.lane.b32.xlu0 %v450, 124
  %v3355 = vpop.permute.xlu0 %3354
  %3356 = vrot.lane.b32.xlu0 %v453, 124
  %v3357 = vpop.permute.xlu0 %3356
  %3358 = vrot.lane.b32.xlu0 %v456, 124
  %v3359 = vpop.permute.xlu0 %3358
  %3360 = vrot.lane.b32.xlu0 %v459, 124
  %v3361 = vpop.permute.xlu0 %3360
  %3362 = vrot.lane.b32.xlu0 %v462, 124
  %v3363 = vpop.permute.xlu0 %3362
  %3364 = vrot.lane.b32.xlu0 %v465, 124
  %v3365 = vpop.permute.xlu0 %3364
  %3366 = vrot.lane.b32.xlu0 %v468, 124
  %v3367 = vpop.permute.xlu0 %3366
  %3368 = vrot.lane.b32.xlu0 %v471, 124
  %v3369 = vpop.permute.xlu0 %3368
  %3370 = vrot.lane.b32.xlu0 %v474, 124
  %v3371 = vpop.permute.xlu0 %3370
  %3372 = vrot.lane.b32.xlu0 %v477, 124
  %v3373 = vpop.permute.xlu0 %3372
  %3374 = vrot.lane.b32.xlu0 %v480, 124
  %v3375 = vpop.permute.xlu0 %3374
  %3376 = vrot.lane.b32.xlu0 %v483, 124
  %v3377 = vpop.permute.xlu0 %3376
  %3378 = vrot.lane.b32.xlu0 %v486, 124
  %v3379 = vpop.permute.xlu0 %3378
  %v3444 = vsel %vm491, %v3253, 0.0
  %3445 = vadd.xlane.f32.xlu0 %v3444
  %v3446 = vpop.xlane.xlu0 %3445
  %v3447 = vsel %vm491, %v3255, 0.0
  %3448 = vadd.xlane.f32.xlu0 %v3447
  %v3449 = vpop.xlane.xlu0 %3448
  %v3450 = vsel %vm491, %v3257, 0.0
  %3451 = vadd.xlane.f32.xlu0 %v3450
  %v3452 = vpop.xlane.xlu0 %3451
  %v3453 = vsel %vm491, %v3259, 0.0
  %3454 = vadd.xlane.f32.xlu0 %v3453
  %v3455 = vpop.xlane.xlu0 %3454
  %v3456 = vsel %vm491, %v3261, 0.0
  %3457 = vadd.xlane.f32.xlu0 %v3456
  %v3458 = vpop.xlane.xlu0 %3457
  %v3459 = vsel %vm491, %v3263, 0.0
  %3460 = vadd.xlane.f32.xlu0 %v3459
  %v3461 = vpop.xlane.xlu0 %3460
  %v3462 = vsel %vm491, %v3265, 0.0
  %3463 = vadd.xlane.f32.xlu0 %v3462
  %v3464 = vpop.xlane.xlu0 %3463
  %v3465 = vsel %vm491, %v3267, 0.0
  %3466 = vadd.xlane.f32.xlu0 %v3465
  %v3467 = vpop.xlane.xlu0 %3466
  %v3468 = vsel %vm491, %v3269, 0.0
  %3469 = vadd.xlane.f32.xlu0 %v3468
  %v3470 = vpop.xlane.xlu0 %3469
  %v3471 = vsel %vm491, %v3271, 0.0
  %3472 = vadd.xlane.f32.xlu0 %v3471
  %v3473 = vpop.xlane.xlu0 %3472
  %v3474 = vsel %vm491, %v3273, 0.0
  %3475 = vadd.xlane.f32.xlu0 %v3474
  %v3476 = vpop.xlane.xlu0 %3475
  %v3477 = vsel %vm491, %v3275, 0.0
  %3478 = vadd.xlane.f32.xlu0 %v3477
  %v3479 = vpop.xlane.xlu0 %3478
  %v3480 = vsel %vm491, %v3277, 0.0
  %3481 = vadd.xlane.f32.xlu0 %v3480
  %v3482 = vpop.xlane.xlu0 %3481
  %v3483 = vsel %vm491, %v3279, 0.0
  %3484 = vadd.xlane.f32.xlu0 %v3483
  %v3485 = vpop.xlane.xlu0 %3484
  %v3486 = vsel %vm491, %v3281, 0.0
  %3487 = vadd.xlane.f32.xlu0 %v3486
  %v3488 = vpop.xlane.xlu0 %3487
  %v3489 = vsel %vm491, %v3283, 0.0
  %3490 = vadd.xlane.f32.xlu0 %v3489
  %v3491 = vpop.xlane.xlu0 %3490
  %v3492 = vsel %vm491, %v3285, 0.0
  %3493 = vadd.xlane.f32.xlu0 %v3492
  %v3494 = vpop.xlane.xlu0 %3493
  %v3495 = vsel %vm491, %v3287, 0.0
  %3496 = vadd.xlane.f32.xlu0 %v3495
  %v3497 = vpop.xlane.xlu0 %3496
  %v3498 = vsel %vm491, %v3289, 0.0
  %3499 = vadd.xlane.f32.xlu0 %v3498
  %v3500 = vpop.xlane.xlu0 %3499
  %v3501 = vsel %vm491, %v3291, 0.0
  %3502 = vadd.xlane.f32.xlu0 %v3501
  %v3503 = vpop.xlane.xlu0 %3502
  %v3504 = vsel %vm491, %v3293, 0.0
  %3505 = vadd.xlane.f32.xlu0 %v3504
  %v3506 = vpop.xlane.xlu0 %3505
  %v3507 = vsel %vm491, %v3295, 0.0
  %3508 = vadd.xlane.f32.xlu0 %v3507
  %v3509 = vpop.xlane.xlu0 %3508
  %v3510 = vsel %vm491, %v3297, 0.0
  %3511 = vadd.xlane.f32.xlu0 %v3510
  %v3512 = vpop.xlane.xlu0 %3511
  %v3513 = vsel %vm491, %v3299, 0.0
  %3514 = vadd.xlane.f32.xlu0 %v3513
  %v3515 = vpop.xlane.xlu0 %3514
  %v3516 = vsel %vm491, %v3301, 0.0
  %3517 = vadd.xlane.f32.xlu0 %v3516
  %v3518 = vpop.xlane.xlu0 %3517
  %v3519 = vsel %vm491, %v3303, 0.0
  %3520 = vadd.xlane.f32.xlu0 %v3519
  %v3521 = vpop.xlane.xlu0 %3520
  %v3522 = vsel %vm491, %v3305, 0.0
  %3523 = vadd.xlane.f32.xlu0 %v3522
  %v3524 = vpop.xlane.xlu0 %3523
  %v3525 = vsel %vm491, %v3307, 0.0
  %3526 = vadd.xlane.f32.xlu0 %v3525
  %v3527 = vpop.xlane.xlu0 %3526
  %v3528 = vsel %vm491, %v3309, 0.0
  %3529 = vadd.xlane.f32.xlu0 %v3528
  %v3530 = vpop.xlane.xlu0 %3529
  %v3531 = vsel %vm491, %v3311, 0.0
  %3532 = vadd.xlane.f32.xlu0 %v3531
  %v3533 = vpop.xlane.xlu0 %3532
  %v3534 = vsel %vm491, %v3313, 0.0
  %3535 = vadd.xlane.f32.xlu0 %v3534
  %v3536 = vpop.xlane.xlu0 %3535
  %v3537 = vsel %vm491, %v3315, 0.0
  %3538 = vadd.xlane.f32.xlu0 %v3537
  %v3539 = vpop.xlane.xlu0 %3538
  %v3540 = vsel %vm491, %v3317, 0.0
  %3541 = vadd.xlane.f32.xlu0 %v3540
  %v3542 = vpop.xlane.xlu0 %3541
  %v3543 = vsel %vm491, %v3319, 0.0
  %3544 = vadd.xlane.f32.xlu0 %v3543
  %v3545 = vpop.xlane.xlu0 %3544
  %v3546 = vsel %vm491, %v3321, 0.0
  %3547 = vadd.xlane.f32.xlu0 %v3546
  %v3548 = vpop.xlane.xlu0 %3547
  %v3549 = vsel %vm491, %v3323, 0.0
  %3550 = vadd.xlane.f32.xlu0 %v3549
  %v3551 = vpop.xlane.xlu0 %3550
  %v3552 = vsel %vm491, %v3325, 0.0
  %3553 = vadd.xlane.f32.xlu0 %v3552
  %v3554 = vpop.xlane.xlu0 %3553
  %v3555 = vsel %vm491, %v3327, 0.0
  %3556 = vadd.xlane.f32.xlu0 %v3555
  %v3557 = vpop.xlane.xlu0 %3556
  %v3558 = vsel %vm491, %v3329, 0.0
  %3559 = vadd.xlane.f32.xlu0 %v3558
  %v3560 = vpop.xlane.xlu0 %3559
  %v3561 = vsel %vm491, %v3331, 0.0
  %3562 = vadd.xlane.f32.xlu0 %v3561
  %v3563 = vpop.xlane.xlu0 %3562
  %v3564 = vsel %vm491, %v3333, 0.0
  %3565 = vadd.xlane.f32.xlu0 %v3564
  %v3566 = vpop.xlane.xlu0 %3565
  %v3567 = vsel %vm491, %v3335, 0.0
  %3568 = vadd.xlane.f32.xlu0 %v3567
  %v3569 = vpop.xlane.xlu0 %3568
  %v3570 = vsel %vm491, %v3337, 0.0
  %3571 = vadd.xlane.f32.xlu0 %v3570
  %v3572 = vpop.xlane.xlu0 %3571
  %v3573 = vsel %vm491, %v3339, 0.0
  %3574 = vadd.xlane.f32.xlu0 %v3573
  %v3575 = vpop.xlane.xlu0 %3574
  %v3576 = vsel %vm491, %v3341, 0.0
  %3577 = vadd.xlane.f32.xlu0 %v3576
  %v3578 = vpop.xlane.xlu0 %3577
  %v3579 = vsel %vm491, %v3343, 0.0
  %3580 = vadd.xlane.f32.xlu0 %v3579
  %v3581 = vpop.xlane.xlu0 %3580
  %v3582 = vsel %vm491, %v3345, 0.0
  %3583 = vadd.xlane.f32.xlu0 %v3582
  %v3584 = vpop.xlane.xlu0 %3583
  %v3585 = vsel %vm491, %v3347, 0.0
  %3586 = vadd.xlane.f32.xlu0 %v3585
  %v3587 = vpop.xlane.xlu0 %3586
  %v3588 = vsel %vm491, %v3349, 0.0
  %3589 = vadd.xlane.f32.xlu0 %v3588
  %v3590 = vpop.xlane.xlu0 %3589
  %v3591 = vsel %vm491, %v3351, 0.0
  %3592 = vadd.xlane.f32.xlu0 %v3591
  %v3593 = vpop.xlane.xlu0 %3592
  %v3594 = vsel %vm491, %v3353, 0.0
  %3595 = vadd.xlane.f32.xlu0 %v3594
  %v3596 = vpop.xlane.xlu0 %3595
  %v3597 = vsel %vm491, %v3355, 0.0
  %3598 = vadd.xlane.f32.xlu0 %v3597
  %v3599 = vpop.xlane.xlu0 %3598
  %v3600 = vsel %vm491, %v3357, 0.0
  %3601 = vadd.xlane.f32.xlu0 %v3600
  %v3602 = vpop.xlane.xlu0 %3601
  %v3603 = vsel %vm491, %v3359, 0.0
  %3604 = vadd.xlane.f32.xlu0 %v3603
  %v3605 = vpop.xlane.xlu0 %3604
  %v3606 = vsel %vm491, %v3361, 0.0
  %3607 = vadd.xlane.f32.xlu0 %v3606
  %v3608 = vpop.xlane.xlu0 %3607
  %v3609 = vsel %vm491, %v3363, 0.0
  %3610 = vadd.xlane.f32.xlu0 %v3609
  %v3611 = vpop.xlane.xlu0 %3610
  %v3612 = vsel %vm491, %v3365, 0.0
  %3613 = vadd.xlane.f32.xlu0 %v3612
  %v3614 = vpop.xlane.xlu0 %3613
  %v3615 = vsel %vm491, %v3367, 0.0
  %3616 = vadd.xlane.f32.xlu0 %v3615
  %v3617 = vpop.xlane.xlu0 %3616
  %v3618 = vsel %vm491, %v3369, 0.0
  %3619 = vadd.xlane.f32.xlu0 %v3618
  %v3620 = vpop.xlane.xlu0 %3619
  %v3621 = vsel %vm491, %v3371, 0.0
  %3622 = vadd.xlane.f32.xlu0 %v3621
  %v3623 = vpop.xlane.xlu0 %3622
  %v3624 = vsel %vm491, %v3373, 0.0
  %3625 = vadd.xlane.f32.xlu0 %v3624
  %v3626 = vpop.xlane.xlu0 %3625
  %v3627 = vsel %vm491, %v3375, 0.0
  %3628 = vadd.xlane.f32.xlu0 %v3627
  %v3629 = vpop.xlane.xlu0 %3628
  %v3630 = vsel %vm491, %v3377, 0.0
  %3631 = vadd.xlane.f32.xlu0 %v3630
  %v3632 = vpop.xlane.xlu0 %3631
  %v3633 = vsel %vm491, %v3379, 0.0
  %3634 = vadd.xlane.f32.xlu0 %v3633
  %v3635 = vpop.xlane.xlu0 %3634
  %v3636 = vmul.f32 %v3446, 0.5
  %v3637 = vmul.f32 %v3449, 0.5
  %v3638 = vmul.f32 %v3452, 0.5
  %v3639 = vmul.f32 %v3455, 0.5
  %v3640 = vmul.f32 %v3458, 0.5
  %v3641 = vmul.f32 %v3461, 0.5
  %v3642 = vmul.f32 %v3464, 0.5
  %v3643 = vmul.f32 %v3467, 0.5
  %v3644 = vmul.f32 %v3470, 0.5
  %v3645 = vmul.f32 %v3473, 0.5
  %v3646 = vmul.f32 %v3476, 0.5
  %v3647 = vmul.f32 %v3479, 0.5
  %v3648 = vmul.f32 %v3482, 0.5
  %v3649 = vmul.f32 %v3485, 0.5
  %v3650 = vmul.f32 %v3488, 0.5
  %v3651 = vmul.f32 %v3491, 0.5
  %v3652 = vmul.f32 %v3494, 0.5
  %v3653 = vmul.f32 %v3497, 0.5
  %v3654 = vmul.f32 %v3500, 0.5
  %v3655 = vmul.f32 %v3503, 0.5
  %v3656 = vmul.f32 %v3506, 0.5
  %v3657 = vmul.f32 %v3509, 0.5
  %v3658 = vmul.f32 %v3512, 0.5
  %v3659 = vmul.f32 %v3515, 0.5
  %v3660 = vmul.f32 %v3518, 0.5
  %v3661 = vmul.f32 %v3521, 0.5
  %v3662 = vmul.f32 %v3524, 0.5
  %v3663 = vmul.f32 %v3527, 0.5
  %v3664 = vmul.f32 %v3530, 0.5
  %v3665 = vmul.f32 %v3533, 0.5
  %v3666 = vmul.f32 %v3536, 0.5
  %v3667 = vmul.f32 %v3539, 0.5
  %v3668 = vmul.f32 %v3542, 0.5
  %v3669 = vmul.f32 %v3545, 0.5
  %v3670 = vmul.f32 %v3548, 0.5
  %v3671 = vmul.f32 %v3551, 0.5
  %v3672 = vmul.f32 %v3554, 0.5
  %v3673 = vmul.f32 %v3557, 0.5
  %v3674 = vmul.f32 %v3560, 0.5
  %v3675 = vmul.f32 %v3563, 0.5
  %v3676 = vmul.f32 %v3566, 0.5
  %v3677 = vmul.f32 %v3569, 0.5
  %v3678 = vmul.f32 %v3572, 0.5
  %v3679 = vmul.f32 %v3575, 0.5
  %v3680 = vmul.f32 %v3578, 0.5
  %v3681 = vmul.f32 %v3581, 0.5
  %v3682 = vmul.f32 %v3584, 0.5
  %v3683 = vmul.f32 %v3587, 0.5
  %v3684 = vmul.f32 %v3590, 0.5
  %v3685 = vmul.f32 %v3593, 0.5
  %v3686 = vmul.f32 %v3596, 0.5
  %v3687 = vmul.f32 %v3599, 0.5
  %v3688 = vmul.f32 %v3602, 0.5
  %v3689 = vmul.f32 %v3605, 0.5
  %v3690 = vmul.f32 %v3608, 0.5
  %v3691 = vmul.f32 %v3611, 0.5
  %v3692 = vmul.f32 %v3614, 0.5
  %v3693 = vmul.f32 %v3617, 0.5
  %v3694 = vmul.f32 %v3620, 0.5
  %v3695 = vmul.f32 %v3623, 0.5
  %v3696 = vmul.f32 %v3626, 0.5
  %v3697 = vmul.f32 %v3629, 0.5
  %v3698 = vmul.f32 %v3632, 0.5
  %v3699 = vmul.f32 %v3635, 0.5
  %3700 = vrot.lane.b32.xlu0 %v297, 122
  %v3701 = vpop.permute.xlu0 %3700
  %3702 = vrot.lane.b32.xlu0 %v300, 122
  %v3703 = vpop.permute.xlu0 %3702
  %3704 = vrot.lane.b32.xlu0 %v303, 122
  %v3705 = vpop.permute.xlu0 %3704
  %3706 = vrot.lane.b32.xlu0 %v306, 122
  %v3707 = vpop.permute.xlu0 %3706
  %3708 = vrot.lane.b32.xlu0 %v309, 122
  %v3709 = vpop.permute.xlu0 %3708
  %3710 = vrot.lane.b32.xlu0 %v312, 122
  %v3711 = vpop.permute.xlu0 %3710
  %3712 = vrot.lane.b32.xlu0 %v315, 122
  %v3713 = vpop.permute.xlu0 %3712
  %3714 = vrot.lane.b32.xlu0 %v318, 122
  %v3715 = vpop.permute.xlu0 %3714
  %3716 = vrot.lane.b32.xlu0 %v321, 122
  %v3717 = vpop.permute.xlu0 %3716
  %3718 = vrot.lane.b32.xlu0 %v324, 122
  %v3719 = vpop.permute.xlu0 %3718
  %3720 = vrot.lane.b32.xlu0 %v327, 122
  %v3721 = vpop.permute.xlu0 %3720
  %3722 = vrot.lane.b32.xlu0 %v330, 122
  %v3723 = vpop.permute.xlu0 %3722
  %3724 = vrot.lane.b32.xlu0 %v333, 122
  %v3725 = vpop.permute.xlu0 %3724
  %3726 = vrot.lane.b32.xlu0 %v336, 122
  %v3727 = vpop.permute.xlu0 %3726
  %3728 = vrot.lane.b32.xlu0 %v339, 122
  %v3729 = vpop.permute.xlu0 %3728
  %3730 = vrot.lane.b32.xlu0 %v342, 122
  %v3731 = vpop.permute.xlu0 %3730
  %3732 = vrot.lane.b32.xlu0 %v345, 122
  %v3733 = vpop.permute.xlu0 %3732
  %3734 = vrot.lane.b32.xlu0 %v348, 122
  %v3735 = vpop.permute.xlu0 %3734
  %3736 = vrot.lane.b32.xlu0 %v351, 122
  %v3737 = vpop.permute.xlu0 %3736
  %3738 = vrot.lane.b32.xlu0 %v354, 122
  %v3739 = vpop.permute.xlu0 %3738
  %3740 = vrot.lane.b32.xlu0 %v357, 122
  %v3741 = vpop.permute.xlu0 %3740
  %3742 = vrot.lane.b32.xlu0 %v360, 122
  %v3743 = vpop.permute.xlu0 %3742
  %3744 = vrot.lane.b32.xlu0 %v363, 122
  %v3745 = vpop.permute.xlu0 %3744
  %3746 = vrot.lane.b32.xlu0 %v366, 122
  %v3747 = vpop.permute.xlu0 %3746
  %3748 = vrot.lane.b32.xlu0 %v369, 122
  %v3749 = vpop.permute.xlu0 %3748
  %3750 = vrot.lane.b32.xlu0 %v372, 122
  %v3751 = vpop.permute.xlu0 %3750
  %3752 = vrot.lane.b32.xlu0 %v375, 122
  %v3753 = vpop.permute.xlu0 %3752
  %3754 = vrot.lane.b32.xlu0 %v378, 122
  %v3755 = vpop.permute.xlu0 %3754
  %3756 = vrot.lane.b32.xlu0 %v381, 122
  %v3757 = vpop.permute.xlu0 %3756
  %3758 = vrot.lane.b32.xlu0 %v384, 122
  %v3759 = vpop.permute.xlu0 %3758
  %3760 = vrot.lane.b32.xlu0 %v387, 122
  %v3761 = vpop.permute.xlu0 %3760
  %3762 = vrot.lane.b32.xlu0 %v390, 122
  %v3763 = vpop.permute.xlu0 %3762
  %3764 = vrot.lane.b32.xlu0 %v393, 122
  %v3765 = vpop.permute.xlu0 %3764
  %3766 = vrot.lane.b32.xlu0 %v396, 122
  %v3767 = vpop.permute.xlu0 %3766
  %3768 = vrot.lane.b32.xlu0 %v399, 122
  %v3769 = vpop.permute.xlu0 %3768
  %3770 = vrot.lane.b32.xlu0 %v402, 122
  %v3771 = vpop.permute.xlu0 %3770
  %3772 = vrot.lane.b32.xlu0 %v405, 122
  %v3773 = vpop.permute.xlu0 %3772
  %3774 = vrot.lane.b32.xlu0 %v408, 122
  %v3775 = vpop.permute.xlu0 %3774
  %3776 = vrot.lane.b32.xlu0 %v411, 122
  %v3777 = vpop.permute.xlu0 %3776
  %3778 = vrot.lane.b32.xlu0 %v414, 122
  %v3779 = vpop.permute.xlu0 %3778
  %3780 = vrot.lane.b32.xlu0 %v417, 122
  %v3781 = vpop.permute.xlu0 %3780
  %3782 = vrot.lane.b32.xlu0 %v420, 122
  %v3783 = vpop.permute.xlu0 %3782
  %3784 = vrot.lane.b32.xlu0 %v423, 122
  %v3785 = vpop.permute.xlu0 %3784
  %3786 = vrot.lane.b32.xlu0 %v426, 122
  %v3787 = vpop.permute.xlu0 %3786
  %3788 = vrot.lane.b32.xlu0 %v429, 122
  %v3789 = vpop.permute.xlu0 %3788
  %3790 = vrot.lane.b32.xlu0 %v432, 122
  %v3791 = vpop.permute.xlu0 %3790
  %3792 = vrot.lane.b32.xlu0 %v435, 122
  %v3793 = vpop.permute.xlu0 %3792
  %3794 = vrot.lane.b32.xlu0 %v438, 122
  %v3795 = vpop.permute.xlu0 %3794
  %3796 = vrot.lane.b32.xlu0 %v441, 122
  %v3797 = vpop.permute.xlu0 %3796
  %3798 = vrot.lane.b32.xlu0 %v444, 122
  %v3799 = vpop.permute.xlu0 %3798
  %3800 = vrot.lane.b32.xlu0 %v447, 122
  %v3801 = vpop.permute.xlu0 %3800
  %3802 = vrot.lane.b32.xlu0 %v450, 122
  %v3803 = vpop.permute.xlu0 %3802
  %3804 = vrot.lane.b32.xlu0 %v453, 122
  %v3805 = vpop.permute.xlu0 %3804
  %3806 = vrot.lane.b32.xlu0 %v456, 122
  %v3807 = vpop.permute.xlu0 %3806
  %3808 = vrot.lane.b32.xlu0 %v459, 122
  %v3809 = vpop.permute.xlu0 %3808
  %3810 = vrot.lane.b32.xlu0 %v462, 122
  %v3811 = vpop.permute.xlu0 %3810
  %3812 = vrot.lane.b32.xlu0 %v465, 122
  %v3813 = vpop.permute.xlu0 %3812
  %3814 = vrot.lane.b32.xlu0 %v468, 122
  %v3815 = vpop.permute.xlu0 %3814
  %3816 = vrot.lane.b32.xlu0 %v471, 122
  %v3817 = vpop.permute.xlu0 %3816
  %3818 = vrot.lane.b32.xlu0 %v474, 122
  %v3819 = vpop.permute.xlu0 %3818
  %3820 = vrot.lane.b32.xlu0 %v477, 122
  %v3821 = vpop.permute.xlu0 %3820
  %3822 = vrot.lane.b32.xlu0 %v480, 122
  %v3823 = vpop.permute.xlu0 %3822
  %3824 = vrot.lane.b32.xlu0 %v483, 122
  %v3825 = vpop.permute.xlu0 %3824
  %3826 = vrot.lane.b32.xlu0 %v486, 122
  %v3827 = vpop.permute.xlu0 %3826
  %v3892 = vsel %vm491, %v3701, 0.0
  %3893 = vadd.xlane.f32.xlu0 %v3892
  %v3894 = vpop.xlane.xlu0 %3893
  %v3895 = vsel %vm491, %v3703, 0.0
  %3896 = vadd.xlane.f32.xlu0 %v3895
  %v3897 = vpop.xlane.xlu0 %3896
  %v3898 = vsel %vm491, %v3705, 0.0
  %3899 = vadd.xlane.f32.xlu0 %v3898
  %v3900 = vpop.xlane.xlu0 %3899
  %v3901 = vsel %vm491, %v3707, 0.0
  %3902 = vadd.xlane.f32.xlu0 %v3901
  %v3903 = vpop.xlane.xlu0 %3902
  %v3904 = vsel %vm491, %v3709, 0.0
  %3905 = vadd.xlane.f32.xlu0 %v3904
  %v3906 = vpop.xlane.xlu0 %3905
  %v3907 = vsel %vm491, %v3711, 0.0
  %3908 = vadd.xlane.f32.xlu0 %v3907
  %v3909 = vpop.xlane.xlu0 %3908
  %v3910 = vsel %vm491, %v3713, 0.0
  %3911 = vadd.xlane.f32.xlu0 %v3910
  %v3912 = vpop.xlane.xlu0 %3911
  %v3913 = vsel %vm491, %v3715, 0.0
  %3914 = vadd.xlane.f32.xlu0 %v3913
  %v3915 = vpop.xlane.xlu0 %3914
  %v3916 = vsel %vm491, %v3717, 0.0
  %3917 = vadd.xlane.f32.xlu0 %v3916
  %v3918 = vpop.xlane.xlu0 %3917
  %v3919 = vsel %vm491, %v3719, 0.0
  %3920 = vadd.xlane.f32.xlu0 %v3919
  %v3921 = vpop.xlane.xlu0 %3920
  %v3922 = vsel %vm491, %v3721, 0.0
  %3923 = vadd.xlane.f32.xlu0 %v3922
  %v3924 = vpop.xlane.xlu0 %3923
  %v3925 = vsel %vm491, %v3723, 0.0
  %3926 = vadd.xlane.f32.xlu0 %v3925
  %v3927 = vpop.xlane.xlu0 %3926
  %v3928 = vsel %vm491, %v3725, 0.0
  %3929 = vadd.xlane.f32.xlu0 %v3928
  %v3930 = vpop.xlane.xlu0 %3929
  %v3931 = vsel %vm491, %v3727, 0.0
  %3932 = vadd.xlane.f32.xlu0 %v3931
  %v3933 = vpop.xlane.xlu0 %3932
  %v3934 = vsel %vm491, %v3729, 0.0
  %3935 = vadd.xlane.f32.xlu0 %v3934
  %v3936 = vpop.xlane.xlu0 %3935
  %v3937 = vsel %vm491, %v3731, 0.0
  %3938 = vadd.xlane.f32.xlu0 %v3937
  %v3939 = vpop.xlane.xlu0 %3938
  %v3940 = vsel %vm491, %v3733, 0.0
  %3941 = vadd.xlane.f32.xlu0 %v3940
  %v3942 = vpop.xlane.xlu0 %3941
  %v3943 = vsel %vm491, %v3735, 0.0
  %3944 = vadd.xlane.f32.xlu0 %v3943
  %v3945 = vpop.xlane.xlu0 %3944
  %v3946 = vsel %vm491, %v3737, 0.0
  %3947 = vadd.xlane.f32.xlu0 %v3946
  %v3948 = vpop.xlane.xlu0 %3947
  %v3949 = vsel %vm491, %v3739, 0.0
  %3950 = vadd.xlane.f32.xlu0 %v3949
  %v3951 = vpop.xlane.xlu0 %3950
  %v3952 = vsel %vm491, %v3741, 0.0
  %3953 = vadd.xlane.f32.xlu0 %v3952
  %v3954 = vpop.xlane.xlu0 %3953
  %v3955 = vsel %vm491, %v3743, 0.0
  %3956 = vadd.xlane.f32.xlu0 %v3955
  %v3957 = vpop.xlane.xlu0 %3956
  %v3958 = vsel %vm491, %v3745, 0.0
  %3959 = vadd.xlane.f32.xlu0 %v3958
  %v3960 = vpop.xlane.xlu0 %3959
  %v3961 = vsel %vm491, %v3747, 0.0
  %3962 = vadd.xlane.f32.xlu0 %v3961
  %v3963 = vpop.xlane.xlu0 %3962
  %v3964 = vsel %vm491, %v3749, 0.0
  %3965 = vadd.xlane.f32.xlu0 %v3964
  %v3966 = vpop.xlane.xlu0 %3965
  %v3967 = vsel %vm491, %v3751, 0.0
  %3968 = vadd.xlane.f32.xlu0 %v3967
  %v3969 = vpop.xlane.xlu0 %3968
  %v3970 = vsel %vm491, %v3753, 0.0
  %3971 = vadd.xlane.f32.xlu0 %v3970
  %v3972 = vpop.xlane.xlu0 %3971
  %v3973 = vsel %vm491, %v3755, 0.0
  %3974 = vadd.xlane.f32.xlu0 %v3973
  %v3975 = vpop.xlane.xlu0 %3974
  %v3976 = vsel %vm491, %v3757, 0.0
  %3977 = vadd.xlane.f32.xlu0 %v3976
  %v3978 = vpop.xlane.xlu0 %3977
  %v3979 = vsel %vm491, %v3759, 0.0
  %3980 = vadd.xlane.f32.xlu0 %v3979
  %v3981 = vpop.xlane.xlu0 %3980
  %v3982 = vsel %vm491, %v3761, 0.0
  %3983 = vadd.xlane.f32.xlu0 %v3982
  %v3984 = vpop.xlane.xlu0 %3983
  %v3985 = vsel %vm491, %v3763, 0.0
  %3986 = vadd.xlane.f32.xlu0 %v3985
  %v3987 = vpop.xlane.xlu0 %3986
  %v3988 = vsel %vm491, %v3765, 0.0
  %3989 = vadd.xlane.f32.xlu0 %v3988
  %v3990 = vpop.xlane.xlu0 %3989
  %v3991 = vsel %vm491, %v3767, 0.0
  %3992 = vadd.xlane.f32.xlu0 %v3991
  %v3993 = vpop.xlane.xlu0 %3992
  %v3994 = vsel %vm491, %v3769, 0.0
  %3995 = vadd.xlane.f32.xlu0 %v3994
  %v3996 = vpop.xlane.xlu0 %3995
  %v3997 = vsel %vm491, %v3771, 0.0
  %3998 = vadd.xlane.f32.xlu0 %v3997
  %v3999 = vpop.xlane.xlu0 %3998
  %v4000 = vsel %vm491, %v3773, 0.0
  %4001 = vadd.xlane.f32.xlu0 %v4000
  %v4002 = vpop.xlane.xlu0 %4001
  %v4003 = vsel %vm491, %v3775, 0.0
  %4004 = vadd.xlane.f32.xlu0 %v4003
  %v4005 = vpop.xlane.xlu0 %4004
  %v4006 = vsel %vm491, %v3777, 0.0
  %4007 = vadd.xlane.f32.xlu0 %v4006
  %v4008 = vpop.xlane.xlu0 %4007
  %v4009 = vsel %vm491, %v3779, 0.0
  %4010 = vadd.xlane.f32.xlu0 %v4009
  %v4011 = vpop.xlane.xlu0 %4010
  %v4012 = vsel %vm491, %v3781, 0.0
  %4013 = vadd.xlane.f32.xlu0 %v4012
  %v4014 = vpop.xlane.xlu0 %4013
  %v4015 = vsel %vm491, %v3783, 0.0
  %4016 = vadd.xlane.f32.xlu0 %v4015
  %v4017 = vpop.xlane.xlu0 %4016
  %v4018 = vsel %vm491, %v3785, 0.0
  %4019 = vadd.xlane.f32.xlu0 %v4018
  %v4020 = vpop.xlane.xlu0 %4019
  %v4021 = vsel %vm491, %v3787, 0.0
  %4022 = vadd.xlane.f32.xlu0 %v4021
  %v4023 = vpop.xlane.xlu0 %4022
  %v4024 = vsel %vm491, %v3789, 0.0
  %4025 = vadd.xlane.f32.xlu0 %v4024
  %v4026 = vpop.xlane.xlu0 %4025
  %v4027 = vsel %vm491, %v3791, 0.0
  %4028 = vadd.xlane.f32.xlu0 %v4027
  %v4029 = vpop.xlane.xlu0 %4028
  %v4030 = vsel %vm491, %v3793, 0.0
  %4031 = vadd.xlane.f32.xlu0 %v4030
  %v4032 = vpop.xlane.xlu0 %4031
  %v4033 = vsel %vm491, %v3795, 0.0
  %4034 = vadd.xlane.f32.xlu0 %v4033
  %v4035 = vpop.xlane.xlu0 %4034
  %v4036 = vsel %vm491, %v3797, 0.0
  %4037 = vadd.xlane.f32.xlu0 %v4036
  %v4038 = vpop.xlane.xlu0 %4037
  %v4039 = vsel %vm491, %v3799, 0.0
  %4040 = vadd.xlane.f32.xlu0 %v4039
  %v4041 = vpop.xlane.xlu0 %4040
  %v4042 = vsel %vm491, %v3801, 0.0
  %4043 = vadd.xlane.f32.xlu0 %v4042
  %v4044 = vpop.xlane.xlu0 %4043
  %v4045 = vsel %vm491, %v3803, 0.0
  %4046 = vadd.xlane.f32.xlu0 %v4045
  %v4047 = vpop.xlane.xlu0 %4046
  %v4048 = vsel %vm491, %v3805, 0.0
  %4049 = vadd.xlane.f32.xlu0 %v4048
  %v4050 = vpop.xlane.xlu0 %4049
  %v4051 = vsel %vm491, %v3807, 0.0
  %4052 = vadd.xlane.f32.xlu0 %v4051
  %v4053 = vpop.xlane.xlu0 %4052
  %v4054 = vsel %vm491, %v3809, 0.0
  %4055 = vadd.xlane.f32.xlu0 %v4054
  %v4056 = vpop.xlane.xlu0 %4055
  %v4057 = vsel %vm491, %v3811, 0.0
  %4058 = vadd.xlane.f32.xlu0 %v4057
  %v4059 = vpop.xlane.xlu0 %4058
  %v4060 = vsel %vm491, %v3813, 0.0
  %4061 = vadd.xlane.f32.xlu0 %v4060
  %v4062 = vpop.xlane.xlu0 %4061
  %v4063 = vsel %vm491, %v3815, 0.0
  %4064 = vadd.xlane.f32.xlu0 %v4063
  %v4065 = vpop.xlane.xlu0 %4064
  %v4066 = vsel %vm491, %v3817, 0.0
  %4067 = vadd.xlane.f32.xlu0 %v4066
  %v4068 = vpop.xlane.xlu0 %4067
  %v4069 = vsel %vm491, %v3819, 0.0
  %4070 = vadd.xlane.f32.xlu0 %v4069
  %v4071 = vpop.xlane.xlu0 %4070
  %v4072 = vsel %vm491, %v3821, 0.0
  %4073 = vadd.xlane.f32.xlu0 %v4072
  %v4074 = vpop.xlane.xlu0 %4073
  %v4075 = vsel %vm491, %v3823, 0.0
  %4076 = vadd.xlane.f32.xlu0 %v4075
  %v4077 = vpop.xlane.xlu0 %4076
  %v4078 = vsel %vm491, %v3825, 0.0
  %4079 = vadd.xlane.f32.xlu0 %v4078
  %v4080 = vpop.xlane.xlu0 %4079
  %v4081 = vsel %vm491, %v3827, 0.0
  %4082 = vadd.xlane.f32.xlu0 %v4081
  %v4083 = vpop.xlane.xlu0 %4082
  %v4084 = vmul.f32 %v3894, 0.5
  %v4085 = vmul.f32 %v3897, 0.5
  %v4086 = vmul.f32 %v3900, 0.5
  %v4087 = vmul.f32 %v3903, 0.5
  %v4088 = vmul.f32 %v3906, 0.5
  %v4089 = vmul.f32 %v3909, 0.5
  %v4090 = vmul.f32 %v3912, 0.5
  %v4091 = vmul.f32 %v3915, 0.5
  %v4092 = vmul.f32 %v3918, 0.5
  %v4093 = vmul.f32 %v3921, 0.5
  %v4094 = vmul.f32 %v3924, 0.5
  %v4095 = vmul.f32 %v3927, 0.5
  %v4096 = vmul.f32 %v3930, 0.5
  %v4097 = vmul.f32 %v3933, 0.5
  %v4098 = vmul.f32 %v3936, 0.5
  %v4099 = vmul.f32 %v3939, 0.5
  %v4100 = vmul.f32 %v3942, 0.5
  %v4101 = vmul.f32 %v3945, 0.5
  %v4102 = vmul.f32 %v3948, 0.5
  %v4103 = vmul.f32 %v3951, 0.5
  %v4104 = vmul.f32 %v3954, 0.5
  %v4105 = vmul.f32 %v3957, 0.5
  %v4106 = vmul.f32 %v3960, 0.5
  %v4107 = vmul.f32 %v3963, 0.5
  %v4108 = vmul.f32 %v3966, 0.5
  %v4109 = vmul.f32 %v3969, 0.5
  %v4110 = vmul.f32 %v3972, 0.5
  %v4111 = vmul.f32 %v3975, 0.5
  %v4112 = vmul.f32 %v3978, 0.5
  %v4113 = vmul.f32 %v3981, 0.5
  %v4114 = vmul.f32 %v3984, 0.5
  %v4115 = vmul.f32 %v3987, 0.5
  %v4116 = vmul.f32 %v3990, 0.5
  %v4117 = vmul.f32 %v3993, 0.5
  %v4118 = vmul.f32 %v3996, 0.5
  %v4119 = vmul.f32 %v3999, 0.5
  %v4120 = vmul.f32 %v4002, 0.5
  %v4121 = vmul.f32 %v4005, 0.5
  %v4122 = vmul.f32 %v4008, 0.5
  %v4123 = vmul.f32 %v4011, 0.5
  %v4124 = vmul.f32 %v4014, 0.5
  %v4125 = vmul.f32 %v4017, 0.5
  %v4126 = vmul.f32 %v4020, 0.5
  %v4127 = vmul.f32 %v4023, 0.5
  %v4128 = vmul.f32 %v4026, 0.5
  %v4129 = vmul.f32 %v4029, 0.5
  %v4130 = vmul.f32 %v4032, 0.5
  %v4131 = vmul.f32 %v4035, 0.5
  %v4132 = vmul.f32 %v4038, 0.5
  %v4133 = vmul.f32 %v4041, 0.5
  %v4134 = vmul.f32 %v4044, 0.5
  %v4135 = vmul.f32 %v4047, 0.5
  %v4136 = vmul.f32 %v4050, 0.5
  %v4137 = vmul.f32 %v4053, 0.5
  %v4138 = vmul.f32 %v4056, 0.5
  %v4139 = vmul.f32 %v4059, 0.5
  %v4140 = vmul.f32 %v4062, 0.5
  %v4141 = vmul.f32 %v4065, 0.5
  %v4142 = vmul.f32 %v4068, 0.5
  %v4143 = vmul.f32 %v4071, 0.5
  %v4144 = vmul.f32 %v4074, 0.5
  %v4145 = vmul.f32 %v4077, 0.5
  %v4146 = vmul.f32 %v4080, 0.5
  %v4147 = vmul.f32 %v4083, 0.5
  %v4148 = vsel %vm490, %v3636, %v4084
  %v4149 = vsel %vm490, %v3637, %v4085
  %v4150 = vsel %vm490, %v3638, %v4086
  %v4151 = vsel %vm490, %v3639, %v4087
  %v4152 = vsel %vm490, %v3640, %v4088
  %v4153 = vsel %vm490, %v3641, %v4089
  %v4154 = vsel %vm490, %v3642, %v4090
  %v4155 = vsel %vm490, %v3643, %v4091
  %v4156 = vsel %vm490, %v3644, %v4092
  %v4157 = vsel %vm490, %v3645, %v4093
  %v4158 = vsel %vm490, %v3646, %v4094
  %v4159 = vsel %vm490, %v3647, %v4095
  %v4160 = vsel %vm490, %v3648, %v4096
  %v4161 = vsel %vm490, %v3649, %v4097
  %v4162 = vsel %vm490, %v3650, %v4098
  %v4163 = vsel %vm490, %v3651, %v4099
  %v4164 = vsel %vm490, %v3652, %v4100
  %v4165 = vsel %vm490, %v3653, %v4101
  %v4166 = vsel %vm490, %v3654, %v4102
  %v4167 = vsel %vm490, %v3655, %v4103
  %v4168 = vsel %vm490, %v3656, %v4104
  %v4169 = vsel %vm490, %v3657, %v4105
  %v4170 = vsel %vm490, %v3658, %v4106
  %v4171 = vsel %vm490, %v3659, %v4107
  %v4172 = vsel %vm490, %v3660, %v4108
  %v4173 = vsel %vm490, %v3661, %v4109
  %v4174 = vsel %vm490, %v3662, %v4110
  %v4175 = vsel %vm490, %v3663, %v4111
  %v4176 = vsel %vm490, %v3664, %v4112
  %v4177 = vsel %vm490, %v3665, %v4113
  %v4178 = vsel %vm490, %v3666, %v4114
  %v4179 = vsel %vm490, %v3667, %v4115
  %v4180 = vsel %vm490, %v3668, %v4116
  %v4181 = vsel %vm490, %v3669, %v4117
  %v4182 = vsel %vm490, %v3670, %v4118
  %v4183 = vsel %vm490, %v3671, %v4119
  %v4184 = vsel %vm490, %v3672, %v4120
  %v4185 = vsel %vm490, %v3673, %v4121
  %v4186 = vsel %vm490, %v3674, %v4122
  %v4187 = vsel %vm490, %v3675, %v4123
  %v4188 = vsel %vm490, %v3676, %v4124
  %v4189 = vsel %vm490, %v3677, %v4125
  %v4190 = vsel %vm490, %v3678, %v4126
  %v4191 = vsel %vm490, %v3679, %v4127
  %v4192 = vsel %vm490, %v3680, %v4128
  %v4193 = vsel %vm490, %v3681, %v4129
  %v4194 = vsel %vm490, %v3682, %v4130
  %v4195 = vsel %vm490, %v3683, %v4131
  %v4196 = vsel %vm490, %v3684, %v4132
  %v4197 = vsel %vm490, %v3685, %v4133
  %v4198 = vsel %vm490, %v3686, %v4134
  %v4199 = vsel %vm490, %v3687, %v4135
  %v4200 = vsel %vm490, %v3688, %v4136
  %v4201 = vsel %vm490, %v3689, %v4137
  %v4202 = vsel %vm490, %v3690, %v4138
  %v4203 = vsel %vm490, %v3691, %v4139
  %v4204 = vsel %vm490, %v3692, %v4140
  %v4205 = vsel %vm490, %v3693, %v4141
  %v4206 = vsel %vm490, %v3694, %v4142
  %v4207 = vsel %vm490, %v3695, %v4143
  %v4208 = vsel %vm490, %v3696, %v4144
  %v4209 = vsel %vm490, %v3697, %v4145
  %v4210 = vsel %vm490, %v3698, %v4146
  %v4211 = vsel %vm490, %v3699, %v4147
  %4276 = vrot.lane.b32.xlu0 %v4148, 4
  %v4277 = vpop.permute.xlu0 %4276
  %4278 = vrot.lane.b32.xlu0 %v4149, 4
  %v4279 = vpop.permute.xlu0 %4278
  %4280 = vrot.lane.b32.xlu0 %v4150, 4
  %v4281 = vpop.permute.xlu0 %4280
  %4282 = vrot.lane.b32.xlu0 %v4151, 4
  %v4283 = vpop.permute.xlu0 %4282
  %4284 = vrot.lane.b32.xlu0 %v4152, 4
  %v4285 = vpop.permute.xlu0 %4284
  %4286 = vrot.lane.b32.xlu0 %v4153, 4
  %v4287 = vpop.permute.xlu0 %4286
  %4288 = vrot.lane.b32.xlu0 %v4154, 4
  %v4289 = vpop.permute.xlu0 %4288
  %4290 = vrot.lane.b32.xlu0 %v4155, 4
  %v4291 = vpop.permute.xlu0 %4290
  %4292 = vrot.lane.b32.xlu0 %v4156, 4
  %v4293 = vpop.permute.xlu0 %4292
  %4294 = vrot.lane.b32.xlu0 %v4157, 4
  %v4295 = vpop.permute.xlu0 %4294
  %4296 = vrot.lane.b32.xlu0 %v4158, 4
  %v4297 = vpop.permute.xlu0 %4296
  %4298 = vrot.lane.b32.xlu0 %v4159, 4
  %v4299 = vpop.permute.xlu0 %4298
  %4300 = vrot.lane.b32.xlu0 %v4160, 4
  %v4301 = vpop.permute.xlu0 %4300
  %4302 = vrot.lane.b32.xlu0 %v4161, 4
  %v4303 = vpop.permute.xlu0 %4302
  %4304 = vrot.lane.b32.xlu0 %v4162, 4
  %v4305 = vpop.permute.xlu0 %4304
  %4306 = vrot.lane.b32.xlu0 %v4163, 4
  %v4307 = vpop.permute.xlu0 %4306
  %4308 = vrot.lane.b32.xlu0 %v4164, 4
  %v4309 = vpop.permute.xlu0 %4308
  %4310 = vrot.lane.b32.xlu0 %v4165, 4
  %v4311 = vpop.permute.xlu0 %4310
  %4312 = vrot.lane.b32.xlu0 %v4166, 4
  %v4313 = vpop.permute.xlu0 %4312
  %4314 = vrot.lane.b32.xlu0 %v4167, 4
  %v4315 = vpop.permute.xlu0 %4314
  %4316 = vrot.lane.b32.xlu0 %v4168, 4
  %v4317 = vpop.permute.xlu0 %4316
  %4318 = vrot.lane.b32.xlu0 %v4169, 4
  %v4319 = vpop.permute.xlu0 %4318
  %4320 = vrot.lane.b32.xlu0 %v4170, 4
  %v4321 = vpop.permute.xlu0 %4320
  %4322 = vrot.lane.b32.xlu0 %v4171, 4
  %v4323 = vpop.permute.xlu0 %4322
  %4324 = vrot.lane.b32.xlu0 %v4172, 4
  %v4325 = vpop.permute.xlu0 %4324
  %4326 = vrot.lane.b32.xlu0 %v4173, 4
  %v4327 = vpop.permute.xlu0 %4326
  %4328 = vrot.lane.b32.xlu0 %v4174, 4
  %v4329 = vpop.permute.xlu0 %4328
  %4330 = vrot.lane.b32.xlu0 %v4175, 4
  %v4331 = vpop.permute.xlu0 %4330
  %4332 = vrot.lane.b32.xlu0 %v4176, 4
  %v4333 = vpop.permute.xlu0 %4332
  %4334 = vrot.lane.b32.xlu0 %v4177, 4
  %v4335 = vpop.permute.xlu0 %4334
  %4336 = vrot.lane.b32.xlu0 %v4178, 4
  %v4337 = vpop.permute.xlu0 %4336
  %4338 = vrot.lane.b32.xlu0 %v4179, 4
  %v4339 = vpop.permute.xlu0 %4338
  %4340 = vrot.lane.b32.xlu0 %v4180, 4
  %v4341 = vpop.permute.xlu0 %4340
  %4342 = vrot.lane.b32.xlu0 %v4181, 4
  %v4343 = vpop.permute.xlu0 %4342
  %4344 = vrot.lane.b32.xlu0 %v4182, 4
  %v4345 = vpop.permute.xlu0 %4344
  %4346 = vrot.lane.b32.xlu0 %v4183, 4
  %v4347 = vpop.permute.xlu0 %4346
  %4348 = vrot.lane.b32.xlu0 %v4184, 4
  %v4349 = vpop.permute.xlu0 %4348
  %4350 = vrot.lane.b32.xlu0 %v4185, 4
  %v4351 = vpop.permute.xlu0 %4350
  %4352 = vrot.lane.b32.xlu0 %v4186, 4
  %v4353 = vpop.permute.xlu0 %4352
  %4354 = vrot.lane.b32.xlu0 %v4187, 4
  %v4355 = vpop.permute.xlu0 %4354
  %4356 = vrot.lane.b32.xlu0 %v4188, 4
  %v4357 = vpop.permute.xlu0 %4356
  %4358 = vrot.lane.b32.xlu0 %v4189, 4
  %v4359 = vpop.permute.xlu0 %4358
  %4360 = vrot.lane.b32.xlu0 %v4190, 4
  %v4361 = vpop.permute.xlu0 %4360
  %4362 = vrot.lane.b32.xlu0 %v4191, 4
  %v4363 = vpop.permute.xlu0 %4362
  %4364 = vrot.lane.b32.xlu0 %v4192, 4
  %v4365 = vpop.permute.xlu0 %4364
  %4366 = vrot.lane.b32.xlu0 %v4193, 4
  %v4367 = vpop.permute.xlu0 %4366
  %4368 = vrot.lane.b32.xlu0 %v4194, 4
  %v4369 = vpop.permute.xlu0 %4368
  %4370 = vrot.lane.b32.xlu0 %v4195, 4
  %v4371 = vpop.permute.xlu0 %4370
  %4372 = vrot.lane.b32.xlu0 %v4196, 4
  %v4373 = vpop.permute.xlu0 %4372
  %4374 = vrot.lane.b32.xlu0 %v4197, 4
  %v4375 = vpop.permute.xlu0 %4374
  %4376 = vrot.lane.b32.xlu0 %v4198, 4
  %v4377 = vpop.permute.xlu0 %4376
  %4378 = vrot.lane.b32.xlu0 %v4199, 4
  %v4379 = vpop.permute.xlu0 %4378
  %4380 = vrot.lane.b32.xlu0 %v4200, 4
  %v4381 = vpop.permute.xlu0 %4380
  %4382 = vrot.lane.b32.xlu0 %v4201, 4
  %v4383 = vpop.permute.xlu0 %4382
  %4384 = vrot.lane.b32.xlu0 %v4202, 4
  %v4385 = vpop.permute.xlu0 %4384
  %4386 = vrot.lane.b32.xlu0 %v4203, 4
  %v4387 = vpop.permute.xlu0 %4386
  %4388 = vrot.lane.b32.xlu0 %v4204, 4
  %v4389 = vpop.permute.xlu0 %4388
  %4390 = vrot.lane.b32.xlu0 %v4205, 4
  %v4391 = vpop.permute.xlu0 %4390
  %4392 = vrot.lane.b32.xlu0 %v4206, 4
  %v4393 = vpop.permute.xlu0 %4392
  %4394 = vrot.lane.b32.xlu0 %v4207, 4
  %v4395 = vpop.permute.xlu0 %4394
  %4396 = vrot.lane.b32.xlu0 %v4208, 4
  %v4397 = vpop.permute.xlu0 %4396
  %4398 = vrot.lane.b32.xlu0 %v4209, 4
  %v4399 = vpop.permute.xlu0 %4398
  %4400 = vrot.lane.b32.xlu0 %v4210, 4
  %v4401 = vpop.permute.xlu0 %4400
  %4402 = vrot.lane.b32.xlu0 %v4211, 4
  %v4403 = vpop.permute.xlu0 %4402
  %v4468 = vsub.f32 %v297, %v4277
  %v4469 = vsub.f32 %v300, %v4279
  %v4470 = vsub.f32 %v303, %v4281
  %v4471 = vsub.f32 %v306, %v4283
  %v4472 = vsub.f32 %v309, %v4285
  %v4473 = vsub.f32 %v312, %v4287
  %v4474 = vsub.f32 %v315, %v4289
  %v4475 = vsub.f32 %v318, %v4291
  %v4476 = vsub.f32 %v321, %v4293
  %v4477 = vsub.f32 %v324, %v4295
  %v4478 = vsub.f32 %v327, %v4297
  %v4479 = vsub.f32 %v330, %v4299
  %v4480 = vsub.f32 %v333, %v4301
  %v4481 = vsub.f32 %v336, %v4303
  %v4482 = vsub.f32 %v339, %v4305
  %v4483 = vsub.f32 %v342, %v4307
  %v4484 = vsub.f32 %v345, %v4309
  %v4485 = vsub.f32 %v348, %v4311
  %v4486 = vsub.f32 %v351, %v4313
  %v4487 = vsub.f32 %v354, %v4315
  %v4488 = vsub.f32 %v357, %v4317
  %v4489 = vsub.f32 %v360, %v4319
  %v4490 = vsub.f32 %v363, %v4321
  %v4491 = vsub.f32 %v366, %v4323
  %v4492 = vsub.f32 %v369, %v4325
  %v4493 = vsub.f32 %v372, %v4327
  %v4494 = vsub.f32 %v375, %v4329
  %v4495 = vsub.f32 %v378, %v4331
  %v4496 = vsub.f32 %v381, %v4333
  %v4497 = vsub.f32 %v384, %v4335
  %v4498 = vsub.f32 %v387, %v4337
  %v4499 = vsub.f32 %v390, %v4339
  %v4500 = vsub.f32 %v393, %v4341
  %v4501 = vsub.f32 %v396, %v4343
  %v4502 = vsub.f32 %v399, %v4345
  %v4503 = vsub.f32 %v402, %v4347
  %v4504 = vsub.f32 %v405, %v4349
  %v4505 = vsub.f32 %v408, %v4351
  %v4506 = vsub.f32 %v411, %v4353
  %v4507 = vsub.f32 %v414, %v4355
  %v4508 = vsub.f32 %v417, %v4357
  %v4509 = vsub.f32 %v420, %v4359
  %v4510 = vsub.f32 %v423, %v4361
  %v4511 = vsub.f32 %v426, %v4363
  %v4512 = vsub.f32 %v429, %v4365
  %v4513 = vsub.f32 %v432, %v4367
  %v4514 = vsub.f32 %v435, %v4369
  %v4515 = vsub.f32 %v438, %v4371
  %v4516 = vsub.f32 %v441, %v4373
  %v4517 = vsub.f32 %v444, %v4375
  %v4518 = vsub.f32 %v447, %v4377
  %v4519 = vsub.f32 %v450, %v4379
  %v4520 = vsub.f32 %v453, %v4381
  %v4521 = vsub.f32 %v456, %v4383
  %v4522 = vsub.f32 %v459, %v4385
  %v4523 = vsub.f32 %v462, %v4387
  %v4524 = vsub.f32 %v465, %v4389
  %v4525 = vsub.f32 %v468, %v4391
  %v4526 = vsub.f32 %v471, %v4393
  %v4527 = vsub.f32 %v474, %v4395
  %v4528 = vsub.f32 %v477, %v4397
  %v4529 = vsub.f32 %v480, %v4399
  %v4530 = vsub.f32 %v483, %v4401
  %v4531 = vsub.f32 %v486, %v4403
  %v4532 = vmul.f32 %v4468, %v4468
  %v4533 = vmul.f32 %v4469, %v4469
  %v4534 = vmul.f32 %v4470, %v4470
  %v4535 = vmul.f32 %v4471, %v4471
  %v4536 = vmul.f32 %v4472, %v4472
  %v4537 = vmul.f32 %v4473, %v4473
  %v4538 = vmul.f32 %v4474, %v4474
  %v4539 = vmul.f32 %v4475, %v4475
  %v4540 = vmul.f32 %v4476, %v4476
  %v4541 = vmul.f32 %v4477, %v4477
  %v4542 = vmul.f32 %v4478, %v4478
  %v4543 = vmul.f32 %v4479, %v4479
  %v4544 = vmul.f32 %v4480, %v4480
  %v4545 = vmul.f32 %v4481, %v4481
  %v4546 = vmul.f32 %v4482, %v4482
  %v4547 = vmul.f32 %v4483, %v4483
  %v4548 = vmul.f32 %v4484, %v4484
  %v4549 = vmul.f32 %v4485, %v4485
  %v4550 = vmul.f32 %v4486, %v4486
  %v4551 = vmul.f32 %v4487, %v4487
  %v4552 = vmul.f32 %v4488, %v4488
  %v4553 = vmul.f32 %v4489, %v4489
  %v4554 = vmul.f32 %v4490, %v4490
  %v4555 = vmul.f32 %v4491, %v4491
  %v4556 = vmul.f32 %v4492, %v4492
  %v4557 = vmul.f32 %v4493, %v4493
  %v4558 = vmul.f32 %v4494, %v4494
  %v4559 = vmul.f32 %v4495, %v4495
  %v4560 = vmul.f32 %v4496, %v4496
  %v4561 = vmul.f32 %v4497, %v4497
  %v4562 = vmul.f32 %v4498, %v4498
  %v4563 = vmul.f32 %v4499, %v4499
  %v4564 = vmul.f32 %v4500, %v4500
  %v4565 = vmul.f32 %v4501, %v4501
  %v4566 = vmul.f32 %v4502, %v4502
  %v4567 = vmul.f32 %v4503, %v4503
  %v4568 = vmul.f32 %v4504, %v4504
  %v4569 = vmul.f32 %v4505, %v4505
  %v4570 = vmul.f32 %v4506, %v4506
  %v4571 = vmul.f32 %v4507, %v4507
  %v4572 = vmul.f32 %v4508, %v4508
  %v4573 = vmul.f32 %v4509, %v4509
  %v4574 = vmul.f32 %v4510, %v4510
  %v4575 = vmul.f32 %v4511, %v4511
  %v4576 = vmul.f32 %v4512, %v4512
  %v4577 = vmul.f32 %v4513, %v4513
  %v4578 = vmul.f32 %v4514, %v4514
  %v4579 = vmul.f32 %v4515, %v4515
  %v4580 = vmul.f32 %v4516, %v4516
  %v4581 = vmul.f32 %v4517, %v4517
  %v4582 = vmul.f32 %v4518, %v4518
  %v4583 = vmul.f32 %v4519, %v4519
  %v4584 = vmul.f32 %v4520, %v4520
  %v4585 = vmul.f32 %v4521, %v4521
  %v4586 = vmul.f32 %v4522, %v4522
  %v4587 = vmul.f32 %v4523, %v4523
  %v4588 = vmul.f32 %v4524, %v4524
  %v4589 = vmul.f32 %v4525, %v4525
  %v4590 = vmul.f32 %v4526, %v4526
  %v4591 = vmul.f32 %v4527, %v4527
  %v4592 = vmul.f32 %v4528, %v4528
  %v4593 = vmul.f32 %v4529, %v4529
  %v4594 = vmul.f32 %v4530, %v4530
  %v4595 = vmul.f32 %v4531, %v4531
  %4660 = vrot.lane.b32.xlu0 %v4532, 124
  %v4661 = vpop.permute.xlu0 %4660
  %4662 = vrot.lane.b32.xlu0 %v4533, 124
  %v4663 = vpop.permute.xlu0 %4662
  %4664 = vrot.lane.b32.xlu0 %v4534, 124
  %v4665 = vpop.permute.xlu0 %4664
  %4666 = vrot.lane.b32.xlu0 %v4535, 124
  %v4667 = vpop.permute.xlu0 %4666
  %4668 = vrot.lane.b32.xlu0 %v4536, 124
  %v4669 = vpop.permute.xlu0 %4668
  %4670 = vrot.lane.b32.xlu0 %v4537, 124
  %v4671 = vpop.permute.xlu0 %4670
  %4672 = vrot.lane.b32.xlu0 %v4538, 124
  %v4673 = vpop.permute.xlu0 %4672
  %4674 = vrot.lane.b32.xlu0 %v4539, 124
  %v4675 = vpop.permute.xlu0 %4674
  %4676 = vrot.lane.b32.xlu0 %v4540, 124
  %v4677 = vpop.permute.xlu0 %4676
  %4678 = vrot.lane.b32.xlu0 %v4541, 124
  %v4679 = vpop.permute.xlu0 %4678
  %4680 = vrot.lane.b32.xlu0 %v4542, 124
  %v4681 = vpop.permute.xlu0 %4680
  %4682 = vrot.lane.b32.xlu0 %v4543, 124
  %v4683 = vpop.permute.xlu0 %4682
  %4684 = vrot.lane.b32.xlu0 %v4544, 124
  %v4685 = vpop.permute.xlu0 %4684
  %4686 = vrot.lane.b32.xlu0 %v4545, 124
  %v4687 = vpop.permute.xlu0 %4686
  %4688 = vrot.lane.b32.xlu0 %v4546, 124
  %v4689 = vpop.permute.xlu0 %4688
  %4690 = vrot.lane.b32.xlu0 %v4547, 124
  %v4691 = vpop.permute.xlu0 %4690
  %4692 = vrot.lane.b32.xlu0 %v4548, 124
  %v4693 = vpop.permute.xlu0 %4692
  %4694 = vrot.lane.b32.xlu0 %v4549, 124
  %v4695 = vpop.permute.xlu0 %4694
  %4696 = vrot.lane.b32.xlu0 %v4550, 124
  %v4697 = vpop.permute.xlu0 %4696
  %4698 = vrot.lane.b32.xlu0 %v4551, 124
  %v4699 = vpop.permute.xlu0 %4698
  %4700 = vrot.lane.b32.xlu0 %v4552, 124
  %v4701 = vpop.permute.xlu0 %4700
  %4702 = vrot.lane.b32.xlu0 %v4553, 124
  %v4703 = vpop.permute.xlu0 %4702
  %4704 = vrot.lane.b32.xlu0 %v4554, 124
  %v4705 = vpop.permute.xlu0 %4704
  %4706 = vrot.lane.b32.xlu0 %v4555, 124
  %v4707 = vpop.permute.xlu0 %4706
  %4708 = vrot.lane.b32.xlu0 %v4556, 124
  %v4709 = vpop.permute.xlu0 %4708
  %4710 = vrot.lane.b32.xlu0 %v4557, 124
  %v4711 = vpop.permute.xlu0 %4710
  %4712 = vrot.lane.b32.xlu0 %v4558, 124
  %v4713 = vpop.permute.xlu0 %4712
  %4714 = vrot.lane.b32.xlu0 %v4559, 124
  %v4715 = vpop.permute.xlu0 %4714
  %4716 = vrot.lane.b32.xlu0 %v4560, 124
  %v4717 = vpop.permute.xlu0 %4716
  %4718 = vrot.lane.b32.xlu0 %v4561, 124
  %v4719 = vpop.permute.xlu0 %4718
  %4720 = vrot.lane.b32.xlu0 %v4562, 124
  %v4721 = vpop.permute.xlu0 %4720
  %4722 = vrot.lane.b32.xlu0 %v4563, 124
  %v4723 = vpop.permute.xlu0 %4722
  %4724 = vrot.lane.b32.xlu0 %v4564, 124
  %v4725 = vpop.permute.xlu0 %4724
  %4726 = vrot.lane.b32.xlu0 %v4565, 124
  %v4727 = vpop.permute.xlu0 %4726
  %4728 = vrot.lane.b32.xlu0 %v4566, 124
  %v4729 = vpop.permute.xlu0 %4728
  %4730 = vrot.lane.b32.xlu0 %v4567, 124
  %v4731 = vpop.permute.xlu0 %4730
  %4732 = vrot.lane.b32.xlu0 %v4568, 124
  %v4733 = vpop.permute.xlu0 %4732
  %4734 = vrot.lane.b32.xlu0 %v4569, 124
  %v4735 = vpop.permute.xlu0 %4734
  %4736 = vrot.lane.b32.xlu0 %v4570, 124
  %v4737 = vpop.permute.xlu0 %4736
  %4738 = vrot.lane.b32.xlu0 %v4571, 124
  %v4739 = vpop.permute.xlu0 %4738
  %4740 = vrot.lane.b32.xlu0 %v4572, 124
  %v4741 = vpop.permute.xlu0 %4740
  %4742 = vrot.lane.b32.xlu0 %v4573, 124
  %v4743 = vpop.permute.xlu0 %4742
  %4744 = vrot.lane.b32.xlu0 %v4574, 124
  %v4745 = vpop.permute.xlu0 %4744
  %4746 = vrot.lane.b32.xlu0 %v4575, 124
  %v4747 = vpop.permute.xlu0 %4746
  %4748 = vrot.lane.b32.xlu0 %v4576, 124
  %v4749 = vpop.permute.xlu0 %4748
  %4750 = vrot.lane.b32.xlu0 %v4577, 124
  %v4751 = vpop.permute.xlu0 %4750
  %4752 = vrot.lane.b32.xlu0 %v4578, 124
  %v4753 = vpop.permute.xlu0 %4752
  %4754 = vrot.lane.b32.xlu0 %v4579, 124
  %v4755 = vpop.permute.xlu0 %4754
  %4756 = vrot.lane.b32.xlu0 %v4580, 124
  %v4757 = vpop.permute.xlu0 %4756
  %4758 = vrot.lane.b32.xlu0 %v4581, 124
  %v4759 = vpop.permute.xlu0 %4758
  %4760 = vrot.lane.b32.xlu0 %v4582, 124
  %v4761 = vpop.permute.xlu0 %4760
  %4762 = vrot.lane.b32.xlu0 %v4583, 124
  %v4763 = vpop.permute.xlu0 %4762
  %4764 = vrot.lane.b32.xlu0 %v4584, 124
  %v4765 = vpop.permute.xlu0 %4764
  %4766 = vrot.lane.b32.xlu0 %v4585, 124
  %v4767 = vpop.permute.xlu0 %4766
  %4768 = vrot.lane.b32.xlu0 %v4586, 124
  %v4769 = vpop.permute.xlu0 %4768
  %4770 = vrot.lane.b32.xlu0 %v4587, 124
  %v4771 = vpop.permute.xlu0 %4770
  %4772 = vrot.lane.b32.xlu0 %v4588, 124
  %v4773 = vpop.permute.xlu0 %4772
  %4774 = vrot.lane.b32.xlu0 %v4589, 124
  %v4775 = vpop.permute.xlu0 %4774
  %4776 = vrot.lane.b32.xlu0 %v4590, 124
  %v4777 = vpop.permute.xlu0 %4776
  %4778 = vrot.lane.b32.xlu0 %v4591, 124
  %v4779 = vpop.permute.xlu0 %4778
  %4780 = vrot.lane.b32.xlu0 %v4592, 124
  %v4781 = vpop.permute.xlu0 %4780
  %4782 = vrot.lane.b32.xlu0 %v4593, 124
  %v4783 = vpop.permute.xlu0 %4782
  %4784 = vrot.lane.b32.xlu0 %v4594, 124
  %v4785 = vpop.permute.xlu0 %4784
  %4786 = vrot.lane.b32.xlu0 %v4595, 124
  %v4787 = vpop.permute.xlu0 %4786
  %v4852 = vsel %vm491, %v4661, 0.0
  %4853 = vadd.xlane.f32.xlu0 %v4852
  %v4854 = vpop.xlane.xlu0 %4853
  %v4855 = vsel %vm491, %v4663, 0.0
  %4856 = vadd.xlane.f32.xlu0 %v4855
  %v4857 = vpop.xlane.xlu0 %4856
  %v4858 = vsel %vm491, %v4665, 0.0
  %4859 = vadd.xlane.f32.xlu0 %v4858
  %v4860 = vpop.xlane.xlu0 %4859
  %v4861 = vsel %vm491, %v4667, 0.0
  %4862 = vadd.xlane.f32.xlu0 %v4861
  %v4863 = vpop.xlane.xlu0 %4862
  %v4864 = vsel %vm491, %v4669, 0.0
  %4865 = vadd.xlane.f32.xlu0 %v4864
  %v4866 = vpop.xlane.xlu0 %4865
  %v4867 = vsel %vm491, %v4671, 0.0
  %4868 = vadd.xlane.f32.xlu0 %v4867
  %v4869 = vpop.xlane.xlu0 %4868
  %v4870 = vsel %vm491, %v4673, 0.0
  %4871 = vadd.xlane.f32.xlu0 %v4870
  %v4872 = vpop.xlane.xlu0 %4871
  %v4873 = vsel %vm491, %v4675, 0.0
  %4874 = vadd.xlane.f32.xlu0 %v4873
  %v4875 = vpop.xlane.xlu0 %4874
  %v4876 = vsel %vm491, %v4677, 0.0
  %4877 = vadd.xlane.f32.xlu0 %v4876
  %v4878 = vpop.xlane.xlu0 %4877
  %v4879 = vsel %vm491, %v4679, 0.0
  %4880 = vadd.xlane.f32.xlu0 %v4879
  %v4881 = vpop.xlane.xlu0 %4880
  %v4882 = vsel %vm491, %v4681, 0.0
  %4883 = vadd.xlane.f32.xlu0 %v4882
  %v4884 = vpop.xlane.xlu0 %4883
  %v4885 = vsel %vm491, %v4683, 0.0
  %4886 = vadd.xlane.f32.xlu0 %v4885
  %v4887 = vpop.xlane.xlu0 %4886
  %v4888 = vsel %vm491, %v4685, 0.0
  %4889 = vadd.xlane.f32.xlu0 %v4888
  %v4890 = vpop.xlane.xlu0 %4889
  %v4891 = vsel %vm491, %v4687, 0.0
  %4892 = vadd.xlane.f32.xlu0 %v4891
  %v4893 = vpop.xlane.xlu0 %4892
  %v4894 = vsel %vm491, %v4689, 0.0
  %4895 = vadd.xlane.f32.xlu0 %v4894
  %v4896 = vpop.xlane.xlu0 %4895
  %v4897 = vsel %vm491, %v4691, 0.0
  %4898 = vadd.xlane.f32.xlu0 %v4897
  %v4899 = vpop.xlane.xlu0 %4898
  %v4900 = vsel %vm491, %v4693, 0.0
  %4901 = vadd.xlane.f32.xlu0 %v4900
  %v4902 = vpop.xlane.xlu0 %4901
  %v4903 = vsel %vm491, %v4695, 0.0
  %4904 = vadd.xlane.f32.xlu0 %v4903
  %v4905 = vpop.xlane.xlu0 %4904
  %v4906 = vsel %vm491, %v4697, 0.0
  %4907 = vadd.xlane.f32.xlu0 %v4906
  %v4908 = vpop.xlane.xlu0 %4907
  %v4909 = vsel %vm491, %v4699, 0.0
  %4910 = vadd.xlane.f32.xlu0 %v4909
  %v4911 = vpop.xlane.xlu0 %4910
  %v4912 = vsel %vm491, %v4701, 0.0
  %4913 = vadd.xlane.f32.xlu0 %v4912
  %v4914 = vpop.xlane.xlu0 %4913
  %v4915 = vsel %vm491, %v4703, 0.0
  %4916 = vadd.xlane.f32.xlu0 %v4915
  %v4917 = vpop.xlane.xlu0 %4916
  %v4918 = vsel %vm491, %v4705, 0.0
  %4919 = vadd.xlane.f32.xlu0 %v4918
  %v4920 = vpop.xlane.xlu0 %4919
  %v4921 = vsel %vm491, %v4707, 0.0
  %4922 = vadd.xlane.f32.xlu0 %v4921
  %v4923 = vpop.xlane.xlu0 %4922
  %v4924 = vsel %vm491, %v4709, 0.0
  %4925 = vadd.xlane.f32.xlu0 %v4924
  %v4926 = vpop.xlane.xlu0 %4925
  %v4927 = vsel %vm491, %v4711, 0.0
  %4928 = vadd.xlane.f32.xlu0 %v4927
  %v4929 = vpop.xlane.xlu0 %4928
  %v4930 = vsel %vm491, %v4713, 0.0
  %4931 = vadd.xlane.f32.xlu0 %v4930
  %v4932 = vpop.xlane.xlu0 %4931
  %v4933 = vsel %vm491, %v4715, 0.0
  %4934 = vadd.xlane.f32.xlu0 %v4933
  %v4935 = vpop.xlane.xlu0 %4934
  %v4936 = vsel %vm491, %v4717, 0.0
  %4937 = vadd.xlane.f32.xlu0 %v4936
  %v4938 = vpop.xlane.xlu0 %4937
  %v4939 = vsel %vm491, %v4719, 0.0
  %4940 = vadd.xlane.f32.xlu0 %v4939
  %v4941 = vpop.xlane.xlu0 %4940
  %v4942 = vsel %vm491, %v4721, 0.0
  %4943 = vadd.xlane.f32.xlu0 %v4942
  %v4944 = vpop.xlane.xlu0 %4943
  %v4945 = vsel %vm491, %v4723, 0.0
  %4946 = vadd.xlane.f32.xlu0 %v4945
  %v4947 = vpop.xlane.xlu0 %4946
  %v4948 = vsel %vm491, %v4725, 0.0
  %4949 = vadd.xlane.f32.xlu0 %v4948
  %v4950 = vpop.xlane.xlu0 %4949
  %v4951 = vsel %vm491, %v4727, 0.0
  %4952 = vadd.xlane.f32.xlu0 %v4951
  %v4953 = vpop.xlane.xlu0 %4952
  %v4954 = vsel %vm491, %v4729, 0.0
  %4955 = vadd.xlane.f32.xlu0 %v4954
  %v4956 = vpop.xlane.xlu0 %4955
  %v4957 = vsel %vm491, %v4731, 0.0
  %4958 = vadd.xlane.f32.xlu0 %v4957
  %v4959 = vpop.xlane.xlu0 %4958
  %v4960 = vsel %vm491, %v4733, 0.0
  %4961 = vadd.xlane.f32.xlu0 %v4960
  %v4962 = vpop.xlane.xlu0 %4961
  %v4963 = vsel %vm491, %v4735, 0.0
  %4964 = vadd.xlane.f32.xlu0 %v4963
  %v4965 = vpop.xlane.xlu0 %4964
  %v4966 = vsel %vm491, %v4737, 0.0
  %4967 = vadd.xlane.f32.xlu0 %v4966
  %v4968 = vpop.xlane.xlu0 %4967
  %v4969 = vsel %vm491, %v4739, 0.0
  %4970 = vadd.xlane.f32.xlu0 %v4969
  %v4971 = vpop.xlane.xlu0 %4970
  %v4972 = vsel %vm491, %v4741, 0.0
  %4973 = vadd.xlane.f32.xlu0 %v4972
  %v4974 = vpop.xlane.xlu0 %4973
  %v4975 = vsel %vm491, %v4743, 0.0
  %4976 = vadd.xlane.f32.xlu0 %v4975
  %v4977 = vpop.xlane.xlu0 %4976
  %v4978 = vsel %vm491, %v4745, 0.0
  %4979 = vadd.xlane.f32.xlu0 %v4978
  %v4980 = vpop.xlane.xlu0 %4979
  %v4981 = vsel %vm491, %v4747, 0.0
  %4982 = vadd.xlane.f32.xlu0 %v4981
  %v4983 = vpop.xlane.xlu0 %4982
  %v4984 = vsel %vm491, %v4749, 0.0
  %4985 = vadd.xlane.f32.xlu0 %v4984
  %v4986 = vpop.xlane.xlu0 %4985
  %v4987 = vsel %vm491, %v4751, 0.0
  %4988 = vadd.xlane.f32.xlu0 %v4987
  %v4989 = vpop.xlane.xlu0 %4988
  %v4990 = vsel %vm491, %v4753, 0.0
  %4991 = vadd.xlane.f32.xlu0 %v4990
  %v4992 = vpop.xlane.xlu0 %4991
  %v4993 = vsel %vm491, %v4755, 0.0
  %4994 = vadd.xlane.f32.xlu0 %v4993
  %v4995 = vpop.xlane.xlu0 %4994
  %v4996 = vsel %vm491, %v4757, 0.0
  %4997 = vadd.xlane.f32.xlu0 %v4996
  %v4998 = vpop.xlane.xlu0 %4997
  %v4999 = vsel %vm491, %v4759, 0.0
  %5000 = vadd.xlane.f32.xlu0 %v4999
  %v5001 = vpop.xlane.xlu0 %5000
  %v5002 = vsel %vm491, %v4761, 0.0
  %5003 = vadd.xlane.f32.xlu0 %v5002
  %v5004 = vpop.xlane.xlu0 %5003
  %v5005 = vsel %vm491, %v4763, 0.0
  %5006 = vadd.xlane.f32.xlu0 %v5005
  %v5007 = vpop.xlane.xlu0 %5006
  %v5008 = vsel %vm491, %v4765, 0.0
  %5009 = vadd.xlane.f32.xlu0 %v5008
  %v5010 = vpop.xlane.xlu0 %5009
  %v5011 = vsel %vm491, %v4767, 0.0
  %5012 = vadd.xlane.f32.xlu0 %v5011
  %v5013 = vpop.xlane.xlu0 %5012
  %v5014 = vsel %vm491, %v4769, 0.0
  %5015 = vadd.xlane.f32.xlu0 %v5014
  %v5016 = vpop.xlane.xlu0 %5015
  %v5017 = vsel %vm491, %v4771, 0.0
  %5018 = vadd.xlane.f32.xlu0 %v5017
  %v5019 = vpop.xlane.xlu0 %5018
  %v5020 = vsel %vm491, %v4773, 0.0
  %5021 = vadd.xlane.f32.xlu0 %v5020
  %v5022 = vpop.xlane.xlu0 %5021
  %v5023 = vsel %vm491, %v4775, 0.0
  %5024 = vadd.xlane.f32.xlu0 %v5023
  %v5025 = vpop.xlane.xlu0 %5024
  %v5026 = vsel %vm491, %v4777, 0.0
  %5027 = vadd.xlane.f32.xlu0 %v5026
  %v5028 = vpop.xlane.xlu0 %5027
  %v5029 = vsel %vm491, %v4779, 0.0
  %5030 = vadd.xlane.f32.xlu0 %v5029
  %v5031 = vpop.xlane.xlu0 %5030
  %v5032 = vsel %vm491, %v4781, 0.0
  %5033 = vadd.xlane.f32.xlu0 %v5032
  %v5034 = vpop.xlane.xlu0 %5033
  %v5035 = vsel %vm491, %v4783, 0.0
  %5036 = vadd.xlane.f32.xlu0 %v5035
  %v5037 = vpop.xlane.xlu0 %5036
  %v5038 = vsel %vm491, %v4785, 0.0
  %5039 = vadd.xlane.f32.xlu0 %v5038
  %v5040 = vpop.xlane.xlu0 %5039
  %v5041 = vsel %vm491, %v4787, 0.0
  %5042 = vadd.xlane.f32.xlu0 %v5041
  %v5043 = vpop.xlane.xlu0 %5042
  %v5044 = vmul.f32 %v4854, 0.5
  %v5045 = vmul.f32 %v4857, 0.5
  %v5046 = vmul.f32 %v4860, 0.5
  %v5047 = vmul.f32 %v4863, 0.5
  %v5048 = vmul.f32 %v4866, 0.5
  %v5049 = vmul.f32 %v4869, 0.5
  %v5050 = vmul.f32 %v4872, 0.5
  %v5051 = vmul.f32 %v4875, 0.5
  %v5052 = vmul.f32 %v4878, 0.5
  %v5053 = vmul.f32 %v4881, 0.5
  %v5054 = vmul.f32 %v4884, 0.5
  %v5055 = vmul.f32 %v4887, 0.5
  %v5056 = vmul.f32 %v4890, 0.5
  %v5057 = vmul.f32 %v4893, 0.5
  %v5058 = vmul.f32 %v4896, 0.5
  %v5059 = vmul.f32 %v4899, 0.5
  %v5060 = vmul.f32 %v4902, 0.5
  %v5061 = vmul.f32 %v4905, 0.5
  %v5062 = vmul.f32 %v4908, 0.5
  %v5063 = vmul.f32 %v4911, 0.5
  %v5064 = vmul.f32 %v4914, 0.5
  %v5065 = vmul.f32 %v4917, 0.5
  %v5066 = vmul.f32 %v4920, 0.5
  %v5067 = vmul.f32 %v4923, 0.5
  %v5068 = vmul.f32 %v4926, 0.5
  %v5069 = vmul.f32 %v4929, 0.5
  %v5070 = vmul.f32 %v4932, 0.5
  %v5071 = vmul.f32 %v4935, 0.5
  %v5072 = vmul.f32 %v4938, 0.5
  %v5073 = vmul.f32 %v4941, 0.5
  %v5074 = vmul.f32 %v4944, 0.5
  %v5075 = vmul.f32 %v4947, 0.5
  %v5076 = vmul.f32 %v4950, 0.5
  %v5077 = vmul.f32 %v4953, 0.5
  %v5078 = vmul.f32 %v4956, 0.5
  %v5079 = vmul.f32 %v4959, 0.5
  %v5080 = vmul.f32 %v4962, 0.5
  %v5081 = vmul.f32 %v4965, 0.5
  %v5082 = vmul.f32 %v4968, 0.5
  %v5083 = vmul.f32 %v4971, 0.5
  %v5084 = vmul.f32 %v4974, 0.5
  %v5085 = vmul.f32 %v4977, 0.5
  %v5086 = vmul.f32 %v4980, 0.5
  %v5087 = vmul.f32 %v4983, 0.5
  %v5088 = vmul.f32 %v4986, 0.5
  %v5089 = vmul.f32 %v4989, 0.5
  %v5090 = vmul.f32 %v4992, 0.5
  %v5091 = vmul.f32 %v4995, 0.5
  %v5092 = vmul.f32 %v4998, 0.5
  %v5093 = vmul.f32 %v5001, 0.5
  %v5094 = vmul.f32 %v5004, 0.5
  %v5095 = vmul.f32 %v5007, 0.5
  %v5096 = vmul.f32 %v5010, 0.5
  %v5097 = vmul.f32 %v5013, 0.5
  %v5098 = vmul.f32 %v5016, 0.5
  %v5099 = vmul.f32 %v5019, 0.5
  %v5100 = vmul.f32 %v5022, 0.5
  %v5101 = vmul.f32 %v5025, 0.5
  %v5102 = vmul.f32 %v5028, 0.5
  %v5103 = vmul.f32 %v5031, 0.5
  %v5104 = vmul.f32 %v5034, 0.5
  %v5105 = vmul.f32 %v5037, 0.5
  %v5106 = vmul.f32 %v5040, 0.5
  %v5107 = vmul.f32 %v5043, 0.5
  %5108 = vrot.lane.b32.xlu0 %v4532, 122
  %v5109 = vpop.permute.xlu0 %5108
  %5110 = vrot.lane.b32.xlu0 %v4533, 122
  %v5111 = vpop.permute.xlu0 %5110
  %5112 = vrot.lane.b32.xlu0 %v4534, 122
  %v5113 = vpop.permute.xlu0 %5112
  %5114 = vrot.lane.b32.xlu0 %v4535, 122
  %v5115 = vpop.permute.xlu0 %5114
  %5116 = vrot.lane.b32.xlu0 %v4536, 122
  %v5117 = vpop.permute.xlu0 %5116
  %5118 = vrot.lane.b32.xlu0 %v4537, 122
  %v5119 = vpop.permute.xlu0 %5118
  %5120 = vrot.lane.b32.xlu0 %v4538, 122
  %v5121 = vpop.permute.xlu0 %5120
  %5122 = vrot.lane.b32.xlu0 %v4539, 122
  %v5123 = vpop.permute.xlu0 %5122
  %5124 = vrot.lane.b32.xlu0 %v4540, 122
  %v5125 = vpop.permute.xlu0 %5124
  %5126 = vrot.lane.b32.xlu0 %v4541, 122
  %v5127 = vpop.permute.xlu0 %5126
  %5128 = vrot.lane.b32.xlu0 %v4542, 122
  %v5129 = vpop.permute.xlu0 %5128
  %5130 = vrot.lane.b32.xlu0 %v4543, 122
  %v5131 = vpop.permute.xlu0 %5130
  %5132 = vrot.lane.b32.xlu0 %v4544, 122
  %v5133 = vpop.permute.xlu0 %5132
  %5134 = vrot.lane.b32.xlu0 %v4545, 122
  %v5135 = vpop.permute.xlu0 %5134
  %5136 = vrot.lane.b32.xlu0 %v4546, 122
  %v5137 = vpop.permute.xlu0 %5136
  %5138 = vrot.lane.b32.xlu0 %v4547, 122
  %v5139 = vpop.permute.xlu0 %5138
  %5140 = vrot.lane.b32.xlu0 %v4548, 122
  %v5141 = vpop.permute.xlu0 %5140
  %5142 = vrot.lane.b32.xlu0 %v4549, 122
  %v5143 = vpop.permute.xlu0 %5142
  %5144 = vrot.lane.b32.xlu0 %v4550, 122
  %v5145 = vpop.permute.xlu0 %5144
  %5146 = vrot.lane.b32.xlu0 %v4551, 122
  %v5147 = vpop.permute.xlu0 %5146
  %5148 = vrot.lane.b32.xlu0 %v4552, 122
  %v5149 = vpop.permute.xlu0 %5148
  %5150 = vrot.lane.b32.xlu0 %v4553, 122
  %v5151 = vpop.permute.xlu0 %5150
  %5152 = vrot.lane.b32.xlu0 %v4554, 122
  %v5153 = vpop.permute.xlu0 %5152
  %5154 = vrot.lane.b32.xlu0 %v4555, 122
  %v5155 = vpop.permute.xlu0 %5154
  %5156 = vrot.lane.b32.xlu0 %v4556, 122
  %v5157 = vpop.permute.xlu0 %5156
  %5158 = vrot.lane.b32.xlu0 %v4557, 122
  %v5159 = vpop.permute.xlu0 %5158
  %5160 = vrot.lane.b32.xlu0 %v4558, 122
  %v5161 = vpop.permute.xlu0 %5160
  %5162 = vrot.lane.b32.xlu0 %v4559, 122
  %v5163 = vpop.permute.xlu0 %5162
  %5164 = vrot.lane.b32.xlu0 %v4560, 122
  %v5165 = vpop.permute.xlu0 %5164
  %5166 = vrot.lane.b32.xlu0 %v4561, 122
  %v5167 = vpop.permute.xlu0 %5166
  %5168 = vrot.lane.b32.xlu0 %v4562, 122
  %v5169 = vpop.permute.xlu0 %5168
  %5170 = vrot.lane.b32.xlu0 %v4563, 122
  %v5171 = vpop.permute.xlu0 %5170
  %5172 = vrot.lane.b32.xlu0 %v4564, 122
  %v5173 = vpop.permute.xlu0 %5172
  %5174 = vrot.lane.b32.xlu0 %v4565, 122
  %v5175 = vpop.permute.xlu0 %5174
  %5176 = vrot.lane.b32.xlu0 %v4566, 122
  %v5177 = vpop.permute.xlu0 %5176
  %5178 = vrot.lane.b32.xlu0 %v4567, 122
  %v5179 = vpop.permute.xlu0 %5178
  %5180 = vrot.lane.b32.xlu0 %v4568, 122
  %v5181 = vpop.permute.xlu0 %5180
  %5182 = vrot.lane.b32.xlu0 %v4569, 122
  %v5183 = vpop.permute.xlu0 %5182
  %5184 = vrot.lane.b32.xlu0 %v4570, 122
  %v5185 = vpop.permute.xlu0 %5184
  %5186 = vrot.lane.b32.xlu0 %v4571, 122
  %v5187 = vpop.permute.xlu0 %5186
  %5188 = vrot.lane.b32.xlu0 %v4572, 122
  %v5189 = vpop.permute.xlu0 %5188
  %5190 = vrot.lane.b32.xlu0 %v4573, 122
  %v5191 = vpop.permute.xlu0 %5190
  %5192 = vrot.lane.b32.xlu0 %v4574, 122
  %v5193 = vpop.permute.xlu0 %5192
  %5194 = vrot.lane.b32.xlu0 %v4575, 122
  %v5195 = vpop.permute.xlu0 %5194
  %5196 = vrot.lane.b32.xlu0 %v4576, 122
  %v5197 = vpop.permute.xlu0 %5196
  %5198 = vrot.lane.b32.xlu0 %v4577, 122
  %v5199 = vpop.permute.xlu0 %5198
  %5200 = vrot.lane.b32.xlu0 %v4578, 122
  %v5201 = vpop.permute.xlu0 %5200
  %5202 = vrot.lane.b32.xlu0 %v4579, 122
  %v5203 = vpop.permute.xlu0 %5202
  %5204 = vrot.lane.b32.xlu0 %v4580, 122
  %v5205 = vpop.permute.xlu0 %5204
  %5206 = vrot.lane.b32.xlu0 %v4581, 122
  %v5207 = vpop.permute.xlu0 %5206
  %5208 = vrot.lane.b32.xlu0 %v4582, 122
  %v5209 = vpop.permute.xlu0 %5208
  %5210 = vrot.lane.b32.xlu0 %v4583, 122
  %v5211 = vpop.permute.xlu0 %5210
  %5212 = vrot.lane.b32.xlu0 %v4584, 122
  %v5213 = vpop.permute.xlu0 %5212
  %5214 = vrot.lane.b32.xlu0 %v4585, 122
  %v5215 = vpop.permute.xlu0 %5214
  %5216 = vrot.lane.b32.xlu0 %v4586, 122
  %v5217 = vpop.permute.xlu0 %5216
  %5218 = vrot.lane.b32.xlu0 %v4587, 122
  %v5219 = vpop.permute.xlu0 %5218
  %5220 = vrot.lane.b32.xlu0 %v4588, 122
  %v5221 = vpop.permute.xlu0 %5220
  %5222 = vrot.lane.b32.xlu0 %v4589, 122
  %v5223 = vpop.permute.xlu0 %5222
  %5224 = vrot.lane.b32.xlu0 %v4590, 122
  %v5225 = vpop.permute.xlu0 %5224
  %5226 = vrot.lane.b32.xlu0 %v4591, 122
  %v5227 = vpop.permute.xlu0 %5226
  %5228 = vrot.lane.b32.xlu0 %v4592, 122
  %v5229 = vpop.permute.xlu0 %5228
  %5230 = vrot.lane.b32.xlu0 %v4593, 122
  %v5231 = vpop.permute.xlu0 %5230
  %5232 = vrot.lane.b32.xlu0 %v4594, 122
  %v5233 = vpop.permute.xlu0 %5232
  %5234 = vrot.lane.b32.xlu0 %v4595, 122
  %v5235 = vpop.permute.xlu0 %5234
  %v5300 = vsel %vm491, %v5109, 0.0
  %5301 = vadd.xlane.f32.xlu0 %v5300
  %v5302 = vpop.xlane.xlu0 %5301
  %v5303 = vsel %vm491, %v5111, 0.0
  %5304 = vadd.xlane.f32.xlu0 %v5303
  %v5305 = vpop.xlane.xlu0 %5304
  %v5306 = vsel %vm491, %v5113, 0.0
  %5307 = vadd.xlane.f32.xlu0 %v5306
  %v5308 = vpop.xlane.xlu0 %5307
  %v5309 = vsel %vm491, %v5115, 0.0
  %5310 = vadd.xlane.f32.xlu0 %v5309
  %v5311 = vpop.xlane.xlu0 %5310
  %v5312 = vsel %vm491, %v5117, 0.0
  %5313 = vadd.xlane.f32.xlu0 %v5312
  %v5314 = vpop.xlane.xlu0 %5313
  %v5315 = vsel %vm491, %v5119, 0.0
  %5316 = vadd.xlane.f32.xlu0 %v5315
  %v5317 = vpop.xlane.xlu0 %5316
  %v5318 = vsel %vm491, %v5121, 0.0
  %5319 = vadd.xlane.f32.xlu0 %v5318
  %v5320 = vpop.xlane.xlu0 %5319
  %v5321 = vsel %vm491, %v5123, 0.0
  %5322 = vadd.xlane.f32.xlu0 %v5321
  %v5323 = vpop.xlane.xlu0 %5322
  %v5324 = vsel %vm491, %v5125, 0.0
  %5325 = vadd.xlane.f32.xlu0 %v5324
  %v5326 = vpop.xlane.xlu0 %5325
  %v5327 = vsel %vm491, %v5127, 0.0
  %5328 = vadd.xlane.f32.xlu0 %v5327
  %v5329 = vpop.xlane.xlu0 %5328
  %v5330 = vsel %vm491, %v5129, 0.0
  %5331 = vadd.xlane.f32.xlu0 %v5330
  %v5332 = vpop.xlane.xlu0 %5331
  %v5333 = vsel %vm491, %v5131, 0.0
  %5334 = vadd.xlane.f32.xlu0 %v5333
  %v5335 = vpop.xlane.xlu0 %5334
  %v5336 = vsel %vm491, %v5133, 0.0
  %5337 = vadd.xlane.f32.xlu0 %v5336
  %v5338 = vpop.xlane.xlu0 %5337
  %v5339 = vsel %vm491, %v5135, 0.0
  %5340 = vadd.xlane.f32.xlu0 %v5339
  %v5341 = vpop.xlane.xlu0 %5340
  %v5342 = vsel %vm491, %v5137, 0.0
  %5343 = vadd.xlane.f32.xlu0 %v5342
  %v5344 = vpop.xlane.xlu0 %5343
  %v5345 = vsel %vm491, %v5139, 0.0
  %5346 = vadd.xlane.f32.xlu0 %v5345
  %v5347 = vpop.xlane.xlu0 %5346
  %v5348 = vsel %vm491, %v5141, 0.0
  %5349 = vadd.xlane.f32.xlu0 %v5348
  %v5350 = vpop.xlane.xlu0 %5349
  %v5351 = vsel %vm491, %v5143, 0.0
  %5352 = vadd.xlane.f32.xlu0 %v5351
  %v5353 = vpop.xlane.xlu0 %5352
  %v5354 = vsel %vm491, %v5145, 0.0
  %5355 = vadd.xlane.f32.xlu0 %v5354
  %v5356 = vpop.xlane.xlu0 %5355
  %v5357 = vsel %vm491, %v5147, 0.0
  %5358 = vadd.xlane.f32.xlu0 %v5357
  %v5359 = vpop.xlane.xlu0 %5358
  %v5360 = vsel %vm491, %v5149, 0.0
  %5361 = vadd.xlane.f32.xlu0 %v5360
  %v5362 = vpop.xlane.xlu0 %5361
  %v5363 = vsel %vm491, %v5151, 0.0
  %5364 = vadd.xlane.f32.xlu0 %v5363
  %v5365 = vpop.xlane.xlu0 %5364
  %v5366 = vsel %vm491, %v5153, 0.0
  %5367 = vadd.xlane.f32.xlu0 %v5366
  %v5368 = vpop.xlane.xlu0 %5367
  %v5369 = vsel %vm491, %v5155, 0.0
  %5370 = vadd.xlane.f32.xlu0 %v5369
  %v5371 = vpop.xlane.xlu0 %5370
  %v5372 = vsel %vm491, %v5157, 0.0
  %5373 = vadd.xlane.f32.xlu0 %v5372
  %v5374 = vpop.xlane.xlu0 %5373
  %v5375 = vsel %vm491, %v5159, 0.0
  %5376 = vadd.xlane.f32.xlu0 %v5375
  %v5377 = vpop.xlane.xlu0 %5376
  %v5378 = vsel %vm491, %v5161, 0.0
  %5379 = vadd.xlane.f32.xlu0 %v5378
  %v5380 = vpop.xlane.xlu0 %5379
  %v5381 = vsel %vm491, %v5163, 0.0
  %5382 = vadd.xlane.f32.xlu0 %v5381
  %v5383 = vpop.xlane.xlu0 %5382
  %v5384 = vsel %vm491, %v5165, 0.0
  %5385 = vadd.xlane.f32.xlu0 %v5384
  %v5386 = vpop.xlane.xlu0 %5385
  %v5387 = vsel %vm491, %v5167, 0.0
  %5388 = vadd.xlane.f32.xlu0 %v5387
  %v5389 = vpop.xlane.xlu0 %5388
  %v5390 = vsel %vm491, %v5169, 0.0
  %5391 = vadd.xlane.f32.xlu0 %v5390
  %v5392 = vpop.xlane.xlu0 %5391
  %v5393 = vsel %vm491, %v5171, 0.0
  %5394 = vadd.xlane.f32.xlu0 %v5393
  %v5395 = vpop.xlane.xlu0 %5394
  %v5396 = vsel %vm491, %v5173, 0.0
  %5397 = vadd.xlane.f32.xlu0 %v5396
  %v5398 = vpop.xlane.xlu0 %5397
  %v5399 = vsel %vm491, %v5175, 0.0
  %5400 = vadd.xlane.f32.xlu0 %v5399
  %v5401 = vpop.xlane.xlu0 %5400
  %v5402 = vsel %vm491, %v5177, 0.0
  %5403 = vadd.xlane.f32.xlu0 %v5402
  %v5404 = vpop.xlane.xlu0 %5403
  %v5405 = vsel %vm491, %v5179, 0.0
  %5406 = vadd.xlane.f32.xlu0 %v5405
  %v5407 = vpop.xlane.xlu0 %5406
  %v5408 = vsel %vm491, %v5181, 0.0
  %5409 = vadd.xlane.f32.xlu0 %v5408
  %v5410 = vpop.xlane.xlu0 %5409
  %v5411 = vsel %vm491, %v5183, 0.0
  %5412 = vadd.xlane.f32.xlu0 %v5411
  %v5413 = vpop.xlane.xlu0 %5412
  %v5414 = vsel %vm491, %v5185, 0.0
  %5415 = vadd.xlane.f32.xlu0 %v5414
  %v5416 = vpop.xlane.xlu0 %5415
  %v5417 = vsel %vm491, %v5187, 0.0
  %5418 = vadd.xlane.f32.xlu0 %v5417
  %v5419 = vpop.xlane.xlu0 %5418
  %v5420 = vsel %vm491, %v5189, 0.0
  %5421 = vadd.xlane.f32.xlu0 %v5420
  %v5422 = vpop.xlane.xlu0 %5421
  %v5423 = vsel %vm491, %v5191, 0.0
  %5424 = vadd.xlane.f32.xlu0 %v5423
  %v5425 = vpop.xlane.xlu0 %5424
  %v5426 = vsel %vm491, %v5193, 0.0
  %5427 = vadd.xlane.f32.xlu0 %v5426
  %v5428 = vpop.xlane.xlu0 %5427
  %v5429 = vsel %vm491, %v5195, 0.0
  %5430 = vadd.xlane.f32.xlu0 %v5429
  %v5431 = vpop.xlane.xlu0 %5430
  %v5432 = vsel %vm491, %v5197, 0.0
  %5433 = vadd.xlane.f32.xlu0 %v5432
  %v5434 = vpop.xlane.xlu0 %5433
  %v5435 = vsel %vm491, %v5199, 0.0
  %5436 = vadd.xlane.f32.xlu0 %v5435
  %v5437 = vpop.xlane.xlu0 %5436
  %v5438 = vsel %vm491, %v5201, 0.0
  %5439 = vadd.xlane.f32.xlu0 %v5438
  %v5440 = vpop.xlane.xlu0 %5439
  %v5441 = vsel %vm491, %v5203, 0.0
  %5442 = vadd.xlane.f32.xlu0 %v5441
  %v5443 = vpop.xlane.xlu0 %5442
  %v5444 = vsel %vm491, %v5205, 0.0
  %5445 = vadd.xlane.f32.xlu0 %v5444
  %v5446 = vpop.xlane.xlu0 %5445
  %v5447 = vsel %vm491, %v5207, 0.0
  %5448 = vadd.xlane.f32.xlu0 %v5447
  %v5449 = vpop.xlane.xlu0 %5448
  %v5450 = vsel %vm491, %v5209, 0.0
  %5451 = vadd.xlane.f32.xlu0 %v5450
  %v5452 = vpop.xlane.xlu0 %5451
  %v5453 = vsel %vm491, %v5211, 0.0
  %5454 = vadd.xlane.f32.xlu0 %v5453
  %v5455 = vpop.xlane.xlu0 %5454
  %v5456 = vsel %vm491, %v5213, 0.0
  %5457 = vadd.xlane.f32.xlu0 %v5456
  %v5458 = vpop.xlane.xlu0 %5457
  %v5459 = vsel %vm491, %v5215, 0.0
  %5460 = vadd.xlane.f32.xlu0 %v5459
  %v5461 = vpop.xlane.xlu0 %5460
  %v5462 = vsel %vm491, %v5217, 0.0
  %5463 = vadd.xlane.f32.xlu0 %v5462
  %v5464 = vpop.xlane.xlu0 %5463
  %v5465 = vsel %vm491, %v5219, 0.0
  %5466 = vadd.xlane.f32.xlu0 %v5465
  %v5467 = vpop.xlane.xlu0 %5466
  %v5468 = vsel %vm491, %v5221, 0.0
  %5469 = vadd.xlane.f32.xlu0 %v5468
  %v5470 = vpop.xlane.xlu0 %5469
  %v5471 = vsel %vm491, %v5223, 0.0
  %5472 = vadd.xlane.f32.xlu0 %v5471
  %v5473 = vpop.xlane.xlu0 %5472
  %v5474 = vsel %vm491, %v5225, 0.0
  %5475 = vadd.xlane.f32.xlu0 %v5474
  %v5476 = vpop.xlane.xlu0 %5475
  %v5477 = vsel %vm491, %v5227, 0.0
  %5478 = vadd.xlane.f32.xlu0 %v5477
  %v5479 = vpop.xlane.xlu0 %5478
  %v5480 = vsel %vm491, %v5229, 0.0
  %5481 = vadd.xlane.f32.xlu0 %v5480
  %v5482 = vpop.xlane.xlu0 %5481
  %v5483 = vsel %vm491, %v5231, 0.0
  %5484 = vadd.xlane.f32.xlu0 %v5483
  %v5485 = vpop.xlane.xlu0 %5484
  %v5486 = vsel %vm491, %v5233, 0.0
  %5487 = vadd.xlane.f32.xlu0 %v5486
  %v5488 = vpop.xlane.xlu0 %5487
  %v5489 = vsel %vm491, %v5235, 0.0
  %5490 = vadd.xlane.f32.xlu0 %v5489
  %v5491 = vpop.xlane.xlu0 %5490
  %v5492 = vmul.f32 %v5302, 0.5
  %v5493 = vmul.f32 %v5305, 0.5
  %v5494 = vmul.f32 %v5308, 0.5
  %v5495 = vmul.f32 %v5311, 0.5
  %v5496 = vmul.f32 %v5314, 0.5
  %v5497 = vmul.f32 %v5317, 0.5
  %v5498 = vmul.f32 %v5320, 0.5
  %v5499 = vmul.f32 %v5323, 0.5
  %v5500 = vmul.f32 %v5326, 0.5
  %v5501 = vmul.f32 %v5329, 0.5
  %v5502 = vmul.f32 %v5332, 0.5
  %v5503 = vmul.f32 %v5335, 0.5
  %v5504 = vmul.f32 %v5338, 0.5
  %v5505 = vmul.f32 %v5341, 0.5
  %v5506 = vmul.f32 %v5344, 0.5
  %v5507 = vmul.f32 %v5347, 0.5
  %v5508 = vmul.f32 %v5350, 0.5
  %v5509 = vmul.f32 %v5353, 0.5
  %v5510 = vmul.f32 %v5356, 0.5
  %v5511 = vmul.f32 %v5359, 0.5
  %v5512 = vmul.f32 %v5362, 0.5
  %v5513 = vmul.f32 %v5365, 0.5
  %v5514 = vmul.f32 %v5368, 0.5
  %v5515 = vmul.f32 %v5371, 0.5
  %v5516 = vmul.f32 %v5374, 0.5
  %v5517 = vmul.f32 %v5377, 0.5
  %v5518 = vmul.f32 %v5380, 0.5
  %v5519 = vmul.f32 %v5383, 0.5
  %v5520 = vmul.f32 %v5386, 0.5
  %v5521 = vmul.f32 %v5389, 0.5
  %v5522 = vmul.f32 %v5392, 0.5
  %v5523 = vmul.f32 %v5395, 0.5
  %v5524 = vmul.f32 %v5398, 0.5
  %v5525 = vmul.f32 %v5401, 0.5
  %v5526 = vmul.f32 %v5404, 0.5
  %v5527 = vmul.f32 %v5407, 0.5
  %v5528 = vmul.f32 %v5410, 0.5
  %v5529 = vmul.f32 %v5413, 0.5
  %v5530 = vmul.f32 %v5416, 0.5
  %v5531 = vmul.f32 %v5419, 0.5
  %v5532 = vmul.f32 %v5422, 0.5
  %v5533 = vmul.f32 %v5425, 0.5
  %v5534 = vmul.f32 %v5428, 0.5
  %v5535 = vmul.f32 %v5431, 0.5
  %v5536 = vmul.f32 %v5434, 0.5
  %v5537 = vmul.f32 %v5437, 0.5
  %v5538 = vmul.f32 %v5440, 0.5
  %v5539 = vmul.f32 %v5443, 0.5
  %v5540 = vmul.f32 %v5446, 0.5
  %v5541 = vmul.f32 %v5449, 0.5
  %v5542 = vmul.f32 %v5452, 0.5
  %v5543 = vmul.f32 %v5455, 0.5
  %v5544 = vmul.f32 %v5458, 0.5
  %v5545 = vmul.f32 %v5461, 0.5
  %v5546 = vmul.f32 %v5464, 0.5
  %v5547 = vmul.f32 %v5467, 0.5
  %v5548 = vmul.f32 %v5470, 0.5
  %v5549 = vmul.f32 %v5473, 0.5
  %v5550 = vmul.f32 %v5476, 0.5
  %v5551 = vmul.f32 %v5479, 0.5
  %v5552 = vmul.f32 %v5482, 0.5
  %v5553 = vmul.f32 %v5485, 0.5
  %v5554 = vmul.f32 %v5488, 0.5
  %v5555 = vmul.f32 %v5491, 0.5
  %v5556 = vsel %vm490, %v5044, %v5492
  %v5557 = vsel %vm490, %v5045, %v5493
  %v5558 = vsel %vm490, %v5046, %v5494
  %v5559 = vsel %vm490, %v5047, %v5495
  %v5560 = vsel %vm490, %v5048, %v5496
  %v5561 = vsel %vm490, %v5049, %v5497
  %v5562 = vsel %vm490, %v5050, %v5498
  %v5563 = vsel %vm490, %v5051, %v5499
  %v5564 = vsel %vm490, %v5052, %v5500
  %v5565 = vsel %vm490, %v5053, %v5501
  %v5566 = vsel %vm490, %v5054, %v5502
  %v5567 = vsel %vm490, %v5055, %v5503
  %v5568 = vsel %vm490, %v5056, %v5504
  %v5569 = vsel %vm490, %v5057, %v5505
  %v5570 = vsel %vm490, %v5058, %v5506
  %v5571 = vsel %vm490, %v5059, %v5507
  %v5572 = vsel %vm490, %v5060, %v5508
  %v5573 = vsel %vm490, %v5061, %v5509
  %v5574 = vsel %vm490, %v5062, %v5510
  %v5575 = vsel %vm490, %v5063, %v5511
  %v5576 = vsel %vm490, %v5064, %v5512
  %v5577 = vsel %vm490, %v5065, %v5513
  %v5578 = vsel %vm490, %v5066, %v5514
  %v5579 = vsel %vm490, %v5067, %v5515
  %v5580 = vsel %vm490, %v5068, %v5516
  %v5581 = vsel %vm490, %v5069, %v5517
  %v5582 = vsel %vm490, %v5070, %v5518
  %v5583 = vsel %vm490, %v5071, %v5519
  %v5584 = vsel %vm490, %v5072, %v5520
  %v5585 = vsel %vm490, %v5073, %v5521
  %v5586 = vsel %vm490, %v5074, %v5522
  %v5587 = vsel %vm490, %v5075, %v5523
  %v5588 = vsel %vm490, %v5076, %v5524
  %v5589 = vsel %vm490, %v5077, %v5525
  %v5590 = vsel %vm490, %v5078, %v5526
  %v5591 = vsel %vm490, %v5079, %v5527
  %v5592 = vsel %vm490, %v5080, %v5528
  %v5593 = vsel %vm490, %v5081, %v5529
  %v5594 = vsel %vm490, %v5082, %v5530
  %v5595 = vsel %vm490, %v5083, %v5531
  %v5596 = vsel %vm490, %v5084, %v5532
  %v5597 = vsel %vm490, %v5085, %v5533
  %v5598 = vsel %vm490, %v5086, %v5534
  %v5599 = vsel %vm490, %v5087, %v5535
  %v5600 = vsel %vm490, %v5088, %v5536
  %v5601 = vsel %vm490, %v5089, %v5537
  %v5602 = vsel %vm490, %v5090, %v5538
  %v5603 = vsel %vm490, %v5091, %v5539
  %v5604 = vsel %vm490, %v5092, %v5540
  %v5605 = vsel %vm490, %v5093, %v5541
  %v5606 = vsel %vm490, %v5094, %v5542
  %v5607 = vsel %vm490, %v5095, %v5543
  %v5608 = vsel %vm490, %v5096, %v5544
  %v5609 = vsel %vm490, %v5097, %v5545
  %v5610 = vsel %vm490, %v5098, %v5546
  %v5611 = vsel %vm490, %v5099, %v5547
  %v5612 = vsel %vm490, %v5100, %v5548
  %v5613 = vsel %vm490, %v5101, %v5549
  %v5614 = vsel %vm490, %v5102, %v5550
  %v5615 = vsel %vm490, %v5103, %v5551
  %v5616 = vsel %vm490, %v5104, %v5552
  %v5617 = vsel %vm490, %v5105, %v5553
  %v5618 = vsel %vm490, %v5106, %v5554
  %v5619 = vsel %vm490, %v5107, %v5555
  %v5620 = vadd.f32 %v5556, 1e-06
  %v5621 = vadd.f32 %v5557, 1e-06
  %v5622 = vadd.f32 %v5558, 1e-06
  %v5623 = vadd.f32 %v5559, 1e-06
  %v5624 = vadd.f32 %v5560, 1e-06
  %v5625 = vadd.f32 %v5561, 1e-06
  %v5626 = vadd.f32 %v5562, 1e-06
  %v5627 = vadd.f32 %v5563, 1e-06
  %v5628 = vadd.f32 %v5564, 1e-06
  %v5629 = vadd.f32 %v5565, 1e-06
  %v5630 = vadd.f32 %v5566, 1e-06
  %v5631 = vadd.f32 %v5567, 1e-06
  %v5632 = vadd.f32 %v5568, 1e-06
  %v5633 = vadd.f32 %v5569, 1e-06
  %v5634 = vadd.f32 %v5570, 1e-06
  %v5635 = vadd.f32 %v5571, 1e-06
  %v5636 = vadd.f32 %v5572, 1e-06
  %v5637 = vadd.f32 %v5573, 1e-06
  %v5638 = vadd.f32 %v5574, 1e-06
  %v5639 = vadd.f32 %v5575, 1e-06
  %v5640 = vadd.f32 %v5576, 1e-06
  %v5641 = vadd.f32 %v5577, 1e-06
  %v5642 = vadd.f32 %v5578, 1e-06
  %v5643 = vadd.f32 %v5579, 1e-06
  %v5644 = vadd.f32 %v5580, 1e-06
  %v5645 = vadd.f32 %v5581, 1e-06
  %v5646 = vadd.f32 %v5582, 1e-06
  %v5647 = vadd.f32 %v5583, 1e-06
  %v5648 = vadd.f32 %v5584, 1e-06
  %v5649 = vadd.f32 %v5585, 1e-06
  %v5650 = vadd.f32 %v5586, 1e-06
  %v5651 = vadd.f32 %v5587, 1e-06
  %v5652 = vadd.f32 %v5588, 1e-06
  %v5653 = vadd.f32 %v5589, 1e-06
  %v5654 = vadd.f32 %v5590, 1e-06
  %v5655 = vadd.f32 %v5591, 1e-06
  %v5656 = vadd.f32 %v5592, 1e-06
  %v5657 = vadd.f32 %v5593, 1e-06
  %v5658 = vadd.f32 %v5594, 1e-06
  %v5659 = vadd.f32 %v5595, 1e-06
  %v5660 = vadd.f32 %v5596, 1e-06
  %v5661 = vadd.f32 %v5597, 1e-06
  %v5662 = vadd.f32 %v5598, 1e-06
  %v5663 = vadd.f32 %v5599, 1e-06
  %v5664 = vadd.f32 %v5600, 1e-06
  %v5665 = vadd.f32 %v5601, 1e-06
  %v5666 = vadd.f32 %v5602, 1e-06
  %v5667 = vadd.f32 %v5603, 1e-06
  %v5668 = vadd.f32 %v5604, 1e-06
  %v5669 = vadd.f32 %v5605, 1e-06
  %v5670 = vadd.f32 %v5606, 1e-06
  %v5671 = vadd.f32 %v5607, 1e-06
  %v5672 = vadd.f32 %v5608, 1e-06
  %v5673 = vadd.f32 %v5609, 1e-06
  %v5674 = vadd.f32 %v5610, 1e-06
  %v5675 = vadd.f32 %v5611, 1e-06
  %v5676 = vadd.f32 %v5612, 1e-06
  %v5677 = vadd.f32 %v5613, 1e-06
  %v5678 = vadd.f32 %v5614, 1e-06
  %v5679 = vadd.f32 %v5615, 1e-06
  %v5680 = vadd.f32 %v5616, 1e-06
  %v5681 = vadd.f32 %v5617, 1e-06
  %v5682 = vadd.f32 %v5618, 1e-06
  %v5683 = vadd.f32 %v5619, 1e-06
  %v5684 = vrsqrt.pop %v5620
  %v5685 = vmul.f32 %v5684, %v5620
  %v5686 = vmul.f32 %v5685, %v5684
  %v5687 = vmul.f32 0.5, %v5686
  %v5688 = vsub.f32 1.5, %v5687
  %v5689 = vmul.f32 %v5684, %v5688
  %vm5690 = vweird.f32 %v5620
  %vm5691 = vweird.f32 %v5684
  %vm5692 = vmor %vm5690, %vm5691
  %v5693 = vsel %vm5692, %v5684, %v5689
  %v5694 = vrsqrt.pop %v5621
  %v5695 = vmul.f32 %v5694, %v5621
  %v5696 = vmul.f32 %v5695, %v5694
  %v5697 = vmul.f32 0.5, %v5696
  %v5698 = vsub.f32 1.5, %v5697
  %v5699 = vmul.f32 %v5694, %v5698
  %vm5700 = vweird.f32 %v5621
  %vm5701 = vweird.f32 %v5694
  %vm5702 = vmor %vm5700, %vm5701
  %v5703 = vsel %vm5702, %v5694, %v5699
  %v5704 = vrsqrt.pop %v5622
  %v5705 = vmul.f32 %v5704, %v5622
  %v5706 = vmul.f32 %v5705, %v5704
  %v5707 = vmul.f32 0.5, %v5706
  %v5708 = vsub.f32 1.5, %v5707
  %v5709 = vmul.f32 %v5704, %v5708
  %vm5710 = vweird.f32 %v5622
  %vm5711 = vweird.f32 %v5704
  %vm5712 = vmor %vm5710, %vm5711
  %v5713 = vsel %vm5712, %v5704, %v5709
  %v5714 = vrsqrt.pop %v5623
  %v5715 = vmul.f32 %v5714, %v5623
  %v5716 = vmul.f32 %v5715, %v5714
  %v5717 = vmul.f32 0.5, %v5716
  %v5718 = vsub.f32 1.5, %v5717
  %v5719 = vmul.f32 %v5714, %v5718
  %vm5720 = vweird.f32 %v5623
  %vm5721 = vweird.f32 %v5714
  %vm5722 = vmor %vm5720, %vm5721
  %v5723 = vsel %vm5722, %v5714, %v5719
  %v5724 = vrsqrt.pop %v5624
  %v5725 = vmul.f32 %v5724, %v5624
  %v5726 = vmul.f32 %v5725, %v5724
  %v5727 = vmul.f32 0.5, %v5726
  %v5728 = vsub.f32 1.5, %v5727
  %v5729 = vmul.f32 %v5724, %v5728
  %vm5730 = vweird.f32 %v5624
  %vm5731 = vweird.f32 %v5724
  %vm5732 = vmor %vm5730, %vm5731
  %v5733 = vsel %vm5732, %v5724, %v5729
  %v5734 = vrsqrt.pop %v5625
  %v5735 = vmul.f32 %v5734, %v5625
  %v5736 = vmul.f32 %v5735, %v5734
  %v5737 = vmul.f32 0.5, %v5736
  %v5738 = vsub.f32 1.5, %v5737
  %v5739 = vmul.f32 %v5734, %v5738
  %vm5740 = vweird.f32 %v5625
  %vm5741 = vweird.f32 %v5734
  %vm5742 = vmor %vm5740, %vm5741
  %v5743 = vsel %vm5742, %v5734, %v5739
  %v5744 = vrsqrt.pop %v5626
  %v5745 = vmul.f32 %v5744, %v5626
  %v5746 = vmul.f32 %v5745, %v5744
  %v5747 = vmul.f32 0.5, %v5746
  %v5748 = vsub.f32 1.5, %v5747
  %v5749 = vmul.f32 %v5744, %v5748
  %vm5750 = vweird.f32 %v5626
  %vm5751 = vweird.f32 %v5744
  %vm5752 = vmor %vm5750, %vm5751
  %v5753 = vsel %vm5752, %v5744, %v5749
  %v5754 = vrsqrt.pop %v5627
  %v5755 = vmul.f32 %v5754, %v5627
  %v5756 = vmul.f32 %v5755, %v5754
  %v5757 = vmul.f32 0.5, %v5756
  %v5758 = vsub.f32 1.5, %v5757
  %v5759 = vmul.f32 %v5754, %v5758
  %vm5760 = vweird.f32 %v5627
  %vm5761 = vweird.f32 %v5754
  %vm5762 = vmor %vm5760, %vm5761
  %v5763 = vsel %vm5762, %v5754, %v5759
  %v5764 = vrsqrt.pop %v5628
  %v5765 = vmul.f32 %v5764, %v5628
  %v5766 = vmul.f32 %v5765, %v5764
  %v5767 = vmul.f32 0.5, %v5766
  %v5768 = vsub.f32 1.5, %v5767
  %v5769 = vmul.f32 %v5764, %v5768
  %vm5770 = vweird.f32 %v5628
  %vm5771 = vweird.f32 %v5764
  %vm5772 = vmor %vm5770, %vm5771
  %v5773 = vsel %vm5772, %v5764, %v5769
  %v5774 = vrsqrt.pop %v5629
  %v5775 = vmul.f32 %v5774, %v5629
  %v5776 = vmul.f32 %v5775, %v5774
  %v5777 = vmul.f32 0.5, %v5776
  %v5778 = vsub.f32 1.5, %v5777
  %v5779 = vmul.f32 %v5774, %v5778
  %vm5780 = vweird.f32 %v5629
  %vm5781 = vweird.f32 %v5774
  %vm5782 = vmor %vm5780, %vm5781
  %v5783 = vsel %vm5782, %v5774, %v5779
  %v5784 = vrsqrt.pop %v5630
  %v5785 = vmul.f32 %v5784, %v5630
  %v5786 = vmul.f32 %v5785, %v5784
  %v5787 = vmul.f32 0.5, %v5786
  %v5788 = vsub.f32 1.5, %v5787
  %v5789 = vmul.f32 %v5784, %v5788
  %vm5790 = vweird.f32 %v5630
  %vm5791 = vweird.f32 %v5784
  %vm5792 = vmor %vm5790, %vm5791
  %v5793 = vsel %vm5792, %v5784, %v5789
  %v5794 = vrsqrt.pop %v5631
  %v5795 = vmul.f32 %v5794, %v5631
  %v5796 = vmul.f32 %v5795, %v5794
  %v5797 = vmul.f32 0.5, %v5796
  %v5798 = vsub.f32 1.5, %v5797
  %v5799 = vmul.f32 %v5794, %v5798
  %vm5800 = vweird.f32 %v5631
  %vm5801 = vweird.f32 %v5794
  %vm5802 = vmor %vm5800, %vm5801
  %v5803 = vsel %vm5802, %v5794, %v5799
  %v5804 = vrsqrt.pop %v5632
  %v5805 = vmul.f32 %v5804, %v5632
  %v5806 = vmul.f32 %v5805, %v5804
  %v5807 = vmul.f32 0.5, %v5806
  %v5808 = vsub.f32 1.5, %v5807
  %v5809 = vmul.f32 %v5804, %v5808
  %vm5810 = vweird.f32 %v5632
  %vm5811 = vweird.f32 %v5804
  %vm5812 = vmor %vm5810, %vm5811
  %v5813 = vsel %vm5812, %v5804, %v5809
  %v5814 = vrsqrt.pop %v5633
  %v5815 = vmul.f32 %v5814, %v5633
  %v5816 = vmul.f32 %v5815, %v5814
  %v5817 = vmul.f32 0.5, %v5816
  %v5818 = vsub.f32 1.5, %v5817
  %v5819 = vmul.f32 %v5814, %v5818
  %vm5820 = vweird.f32 %v5633
  %vm5821 = vweird.f32 %v5814
  %vm5822 = vmor %vm5820, %vm5821
  %v5823 = vsel %vm5822, %v5814, %v5819
  %v5824 = vrsqrt.pop %v5634
  %v5825 = vmul.f32 %v5824, %v5634
  %v5826 = vmul.f32 %v5825, %v5824
  %v5827 = vmul.f32 0.5, %v5826
  %v5828 = vsub.f32 1.5, %v5827
  %v5829 = vmul.f32 %v5824, %v5828
  %vm5830 = vweird.f32 %v5634
  %vm5831 = vweird.f32 %v5824
  %vm5832 = vmor %vm5830, %vm5831
  %v5833 = vsel %vm5832, %v5824, %v5829
  %v5834 = vrsqrt.pop %v5635
  %v5835 = vmul.f32 %v5834, %v5635
  %v5836 = vmul.f32 %v5835, %v5834
  %v5837 = vmul.f32 0.5, %v5836
  %v5838 = vsub.f32 1.5, %v5837
  %v5839 = vmul.f32 %v5834, %v5838
  %vm5840 = vweird.f32 %v5635
  %vm5841 = vweird.f32 %v5834
  %vm5842 = vmor %vm5840, %vm5841
  %v5843 = vsel %vm5842, %v5834, %v5839
  %v5844 = vrsqrt.pop %v5636
  %v5845 = vmul.f32 %v5844, %v5636
  %v5846 = vmul.f32 %v5845, %v5844
  %v5847 = vmul.f32 0.5, %v5846
  %v5848 = vsub.f32 1.5, %v5847
  %v5849 = vmul.f32 %v5844, %v5848
  %vm5850 = vweird.f32 %v5636
  %vm5851 = vweird.f32 %v5844
  %vm5852 = vmor %vm5850, %vm5851
  %v5853 = vsel %vm5852, %v5844, %v5849
  %v5854 = vrsqrt.pop %v5637
  %v5855 = vmul.f32 %v5854, %v5637
  %v5856 = vmul.f32 %v5855, %v5854
  %v5857 = vmul.f32 0.5, %v5856
  %v5858 = vsub.f32 1.5, %v5857
  %v5859 = vmul.f32 %v5854, %v5858
  %vm5860 = vweird.f32 %v5637
  %vm5861 = vweird.f32 %v5854
  %vm5862 = vmor %vm5860, %vm5861
  %v5863 = vsel %vm5862, %v5854, %v5859
  %v5864 = vrsqrt.pop %v5638
  %v5865 = vmul.f32 %v5864, %v5638
  %v5866 = vmul.f32 %v5865, %v5864
  %v5867 = vmul.f32 0.5, %v5866
  %v5868 = vsub.f32 1.5, %v5867
  %v5869 = vmul.f32 %v5864, %v5868
  %vm5870 = vweird.f32 %v5638
  %vm5871 = vweird.f32 %v5864
  %vm5872 = vmor %vm5870, %vm5871
  %v5873 = vsel %vm5872, %v5864, %v5869
  %v5874 = vrsqrt.pop %v5639
  %v5875 = vmul.f32 %v5874, %v5639
  %v5876 = vmul.f32 %v5875, %v5874
  %v5877 = vmul.f32 0.5, %v5876
  %v5878 = vsub.f32 1.5, %v5877
  %v5879 = vmul.f32 %v5874, %v5878
  %vm5880 = vweird.f32 %v5639
  %vm5881 = vweird.f32 %v5874
  %vm5882 = vmor %vm5880, %vm5881
  %v5883 = vsel %vm5882, %v5874, %v5879
  %v5884 = vrsqrt.pop %v5640
  %v5885 = vmul.f32 %v5884, %v5640
  %v5886 = vmul.f32 %v5885, %v5884
  %v5887 = vmul.f32 0.5, %v5886
  %v5888 = vsub.f32 1.5, %v5887
  %v5889 = vmul.f32 %v5884, %v5888
  %vm5890 = vweird.f32 %v5640
  %vm5891 = vweird.f32 %v5884
  %vm5892 = vmor %vm5890, %vm5891
  %v5893 = vsel %vm5892, %v5884, %v5889
  %v5894 = vrsqrt.pop %v5641
  %v5895 = vmul.f32 %v5894, %v5641
  %v5896 = vmul.f32 %v5895, %v5894
  %v5897 = vmul.f32 0.5, %v5896
  %v5898 = vsub.f32 1.5, %v5897
  %v5899 = vmul.f32 %v5894, %v5898
  %vm5900 = vweird.f32 %v5641
  %vm5901 = vweird.f32 %v5894
  %vm5902 = vmor %vm5900, %vm5901
  %v5903 = vsel %vm5902, %v5894, %v5899
  %v5904 = vrsqrt.pop %v5642
  %v5905 = vmul.f32 %v5904, %v5642
  %v5906 = vmul.f32 %v5905, %v5904
  %v5907 = vmul.f32 0.5, %v5906
  %v5908 = vsub.f32 1.5, %v5907
  %v5909 = vmul.f32 %v5904, %v5908
  %vm5910 = vweird.f32 %v5642
  %vm5911 = vweird.f32 %v5904
  %vm5912 = vmor %vm5910, %vm5911
  %v5913 = vsel %vm5912, %v5904, %v5909
  %v5914 = vrsqrt.pop %v5643
  %v5915 = vmul.f32 %v5914, %v5643
  %v5916 = vmul.f32 %v5915, %v5914
  %v5917 = vmul.f32 0.5, %v5916
  %v5918 = vsub.f32 1.5, %v5917
  %v5919 = vmul.f32 %v5914, %v5918
  %vm5920 = vweird.f32 %v5643
  %vm5921 = vweird.f32 %v5914
  %vm5922 = vmor %vm5920, %vm5921
  %v5923 = vsel %vm5922, %v5914, %v5919
  %v5924 = vrsqrt.pop %v5644
  %v5925 = vmul.f32 %v5924, %v5644
  %v5926 = vmul.f32 %v5925, %v5924
  %v5927 = vmul.f32 0.5, %v5926
  %v5928 = vsub.f32 1.5, %v5927
  %v5929 = vmul.f32 %v5924, %v5928
  %vm5930 = vweird.f32 %v5644
  %vm5931 = vweird.f32 %v5924
  %vm5932 = vmor %vm5930, %vm5931
  %v5933 = vsel %vm5932, %v5924, %v5929
  %v5934 = vrsqrt.pop %v5645
  %v5935 = vmul.f32 %v5934, %v5645
  %v5936 = vmul.f32 %v5935, %v5934
  %v5937 = vmul.f32 0.5, %v5936
  %v5938 = vsub.f32 1.5, %v5937
  %v5939 = vmul.f32 %v5934, %v5938
  %vm5940 = vweird.f32 %v5645
  %vm5941 = vweird.f32 %v5934
  %vm5942 = vmor %vm5940, %vm5941
  %v5943 = vsel %vm5942, %v5934, %v5939
  %v5944 = vrsqrt.pop %v5646
  %v5945 = vmul.f32 %v5944, %v5646
  %v5946 = vmul.f32 %v5945, %v5944
  %v5947 = vmul.f32 0.5, %v5946
  %v5948 = vsub.f32 1.5, %v5947
  %v5949 = vmul.f32 %v5944, %v5948
  %vm5950 = vweird.f32 %v5646
  %vm5951 = vweird.f32 %v5944
  %vm5952 = vmor %vm5950, %vm5951
  %v5953 = vsel %vm5952, %v5944, %v5949
  %v5954 = vrsqrt.pop %v5647
  %v5955 = vmul.f32 %v5954, %v5647
  %v5956 = vmul.f32 %v5955, %v5954
  %v5957 = vmul.f32 0.5, %v5956
  %v5958 = vsub.f32 1.5, %v5957
  %v5959 = vmul.f32 %v5954, %v5958
  %vm5960 = vweird.f32 %v5647
  %vm5961 = vweird.f32 %v5954
  %vm5962 = vmor %vm5960, %vm5961
  %v5963 = vsel %vm5962, %v5954, %v5959
  %v5964 = vrsqrt.pop %v5648
  %v5965 = vmul.f32 %v5964, %v5648
  %v5966 = vmul.f32 %v5965, %v5964
  %v5967 = vmul.f32 0.5, %v5966
  %v5968 = vsub.f32 1.5, %v5967
  %v5969 = vmul.f32 %v5964, %v5968
  %vm5970 = vweird.f32 %v5648
  %vm5971 = vweird.f32 %v5964
  %vm5972 = vmor %vm5970, %vm5971
  %v5973 = vsel %vm5972, %v5964, %v5969
  %v5974 = vrsqrt.pop %v5649
  %v5975 = vmul.f32 %v5974, %v5649
  %v5976 = vmul.f32 %v5975, %v5974
  %v5977 = vmul.f32 0.5, %v5976
  %v5978 = vsub.f32 1.5, %v5977
  %v5979 = vmul.f32 %v5974, %v5978
  %vm5980 = vweird.f32 %v5649
  %vm5981 = vweird.f32 %v5974
  %vm5982 = vmor %vm5980, %vm5981
  %v5983 = vsel %vm5982, %v5974, %v5979
  %v5984 = vrsqrt.pop %v5650
  %v5985 = vmul.f32 %v5984, %v5650
  %v5986 = vmul.f32 %v5985, %v5984
  %v5987 = vmul.f32 0.5, %v5986
  %v5988 = vsub.f32 1.5, %v5987
  %v5989 = vmul.f32 %v5984, %v5988
  %vm5990 = vweird.f32 %v5650
  %vm5991 = vweird.f32 %v5984
  %vm5992 = vmor %vm5990, %vm5991
  %v5993 = vsel %vm5992, %v5984, %v5989
  %v5994 = vrsqrt.pop %v5651
  %v5995 = vmul.f32 %v5994, %v5651
  %v5996 = vmul.f32 %v5995, %v5994
  %v5997 = vmul.f32 0.5, %v5996
  %v5998 = vsub.f32 1.5, %v5997
  %v5999 = vmul.f32 %v5994, %v5998
  %vm6000 = vweird.f32 %v5651
  %vm6001 = vweird.f32 %v5994
  %vm6002 = vmor %vm6000, %vm6001
  %v6003 = vsel %vm6002, %v5994, %v5999
  %v6004 = vrsqrt.pop %v5652
  %v6005 = vmul.f32 %v6004, %v5652
  %v6006 = vmul.f32 %v6005, %v6004
  %v6007 = vmul.f32 0.5, %v6006
  %v6008 = vsub.f32 1.5, %v6007
  %v6009 = vmul.f32 %v6004, %v6008
  %vm6010 = vweird.f32 %v5652
  %vm6011 = vweird.f32 %v6004
  %vm6012 = vmor %vm6010, %vm6011
  %v6013 = vsel %vm6012, %v6004, %v6009
  %v6014 = vrsqrt.pop %v5653
  %v6015 = vmul.f32 %v6014, %v5653
  %v6016 = vmul.f32 %v6015, %v6014
  %v6017 = vmul.f32 0.5, %v6016
  %v6018 = vsub.f32 1.5, %v6017
  %v6019 = vmul.f32 %v6014, %v6018
  %vm6020 = vweird.f32 %v5653
  %vm6021 = vweird.f32 %v6014
  %vm6022 = vmor %vm6020, %vm6021
  %v6023 = vsel %vm6022, %v6014, %v6019
  %v6024 = vrsqrt.pop %v5654
  %v6025 = vmul.f32 %v6024, %v5654
  %v6026 = vmul.f32 %v6025, %v6024
  %v6027 = vmul.f32 0.5, %v6026
  %v6028 = vsub.f32 1.5, %v6027
  %v6029 = vmul.f32 %v6024, %v6028
  %vm6030 = vweird.f32 %v5654
  %vm6031 = vweird.f32 %v6024
  %vm6032 = vmor %vm6030, %vm6031
  %v6033 = vsel %vm6032, %v6024, %v6029
  %v6034 = vrsqrt.pop %v5655
  %v6035 = vmul.f32 %v6034, %v5655
  %v6036 = vmul.f32 %v6035, %v6034
  %v6037 = vmul.f32 0.5, %v6036
  %v6038 = vsub.f32 1.5, %v6037
  %v6039 = vmul.f32 %v6034, %v6038
  %vm6040 = vweird.f32 %v5655
  %vm6041 = vweird.f32 %v6034
  %vm6042 = vmor %vm6040, %vm6041
  %v6043 = vsel %vm6042, %v6034, %v6039
  %v6044 = vrsqrt.pop %v5656
  %v6045 = vmul.f32 %v6044, %v5656
  %v6046 = vmul.f32 %v6045, %v6044
  %v6047 = vmul.f32 0.5, %v6046
  %v6048 = vsub.f32 1.5, %v6047
  %v6049 = vmul.f32 %v6044, %v6048
  %vm6050 = vweird.f32 %v5656
  %vm6051 = vweird.f32 %v6044
  %vm6052 = vmor %vm6050, %vm6051
  %v6053 = vsel %vm6052, %v6044, %v6049
  %v6054 = vrsqrt.pop %v5657
  %v6055 = vmul.f32 %v6054, %v5657
  %v6056 = vmul.f32 %v6055, %v6054
  %v6057 = vmul.f32 0.5, %v6056
  %v6058 = vsub.f32 1.5, %v6057
  %v6059 = vmul.f32 %v6054, %v6058
  %vm6060 = vweird.f32 %v5657
  %vm6061 = vweird.f32 %v6054
  %vm6062 = vmor %vm6060, %vm6061
  %v6063 = vsel %vm6062, %v6054, %v6059
  %v6064 = vrsqrt.pop %v5658
  %v6065 = vmul.f32 %v6064, %v5658
  %v6066 = vmul.f32 %v6065, %v6064
  %v6067 = vmul.f32 0.5, %v6066
  %v6068 = vsub.f32 1.5, %v6067
  %v6069 = vmul.f32 %v6064, %v6068
  %vm6070 = vweird.f32 %v5658
  %vm6071 = vweird.f32 %v6064
  %vm6072 = vmor %vm6070, %vm6071
  %v6073 = vsel %vm6072, %v6064, %v6069
  %v6074 = vrsqrt.pop %v5659
  %v6075 = vmul.f32 %v6074, %v5659
  %v6076 = vmul.f32 %v6075, %v6074
  %v6077 = vmul.f32 0.5, %v6076
  %v6078 = vsub.f32 1.5, %v6077
  %v6079 = vmul.f32 %v6074, %v6078
  %vm6080 = vweird.f32 %v5659
  %vm6081 = vweird.f32 %v6074
  %vm6082 = vmor %vm6080, %vm6081
  %v6083 = vsel %vm6082, %v6074, %v6079
  %v6084 = vrsqrt.pop %v5660
  %v6085 = vmul.f32 %v6084, %v5660
  %v6086 = vmul.f32 %v6085, %v6084
  %v6087 = vmul.f32 0.5, %v6086
  %v6088 = vsub.f32 1.5, %v6087
  %v6089 = vmul.f32 %v6084, %v6088
  %vm6090 = vweird.f32 %v5660
  %vm6091 = vweird.f32 %v6084
  %vm6092 = vmor %vm6090, %vm6091
  %v6093 = vsel %vm6092, %v6084, %v6089
  %v6094 = vrsqrt.pop %v5661
  %v6095 = vmul.f32 %v6094, %v5661
  %v6096 = vmul.f32 %v6095, %v6094
  %v6097 = vmul.f32 0.5, %v6096
  %v6098 = vsub.f32 1.5, %v6097
  %v6099 = vmul.f32 %v6094, %v6098
  %vm6100 = vweird.f32 %v5661
  %vm6101 = vweird.f32 %v6094
  %vm6102 = vmor %vm6100, %vm6101
  %v6103 = vsel %vm6102, %v6094, %v6099
  %v6104 = vrsqrt.pop %v5662
  %v6105 = vmul.f32 %v6104, %v5662
  %v6106 = vmul.f32 %v6105, %v6104
  %v6107 = vmul.f32 0.5, %v6106
  %v6108 = vsub.f32 1.5, %v6107
  %v6109 = vmul.f32 %v6104, %v6108
  %vm6110 = vweird.f32 %v5662
  %vm6111 = vweird.f32 %v6104
  %vm6112 = vmor %vm6110, %vm6111
  %v6113 = vsel %vm6112, %v6104, %v6109
  %v6114 = vrsqrt.pop %v5663
  %v6115 = vmul.f32 %v6114, %v5663
  %v6116 = vmul.f32 %v6115, %v6114
  %v6117 = vmul.f32 0.5, %v6116
  %v6118 = vsub.f32 1.5, %v6117
  %v6119 = vmul.f32 %v6114, %v6118
  %vm6120 = vweird.f32 %v5663
  %vm6121 = vweird.f32 %v6114
  %vm6122 = vmor %vm6120, %vm6121
  %v6123 = vsel %vm6122, %v6114, %v6119
  %v6124 = vrsqrt.pop %v5664
  %v6125 = vmul.f32 %v6124, %v5664
  %v6126 = vmul.f32 %v6125, %v6124
  %v6127 = vmul.f32 0.5, %v6126
  %v6128 = vsub.f32 1.5, %v6127
  %v6129 = vmul.f32 %v6124, %v6128
  %vm6130 = vweird.f32 %v5664
  %vm6131 = vweird.f32 %v6124
  %vm6132 = vmor %vm6130, %vm6131
  %v6133 = vsel %vm6132, %v6124, %v6129
  %v6134 = vrsqrt.pop %v5665
  %v6135 = vmul.f32 %v6134, %v5665
  %v6136 = vmul.f32 %v6135, %v6134
  %v6137 = vmul.f32 0.5, %v6136
  %v6138 = vsub.f32 1.5, %v6137
  %v6139 = vmul.f32 %v6134, %v6138
  %vm6140 = vweird.f32 %v5665
  %vm6141 = vweird.f32 %v6134
  %vm6142 = vmor %vm6140, %vm6141
  %v6143 = vsel %vm6142, %v6134, %v6139
  %v6144 = vrsqrt.pop %v5666
  %v6145 = vmul.f32 %v6144, %v5666
  %v6146 = vmul.f32 %v6145, %v6144
  %v6147 = vmul.f32 0.5, %v6146
  %v6148 = vsub.f32 1.5, %v6147
  %v6149 = vmul.f32 %v6144, %v6148
  %vm6150 = vweird.f32 %v5666
  %vm6151 = vweird.f32 %v6144
  %vm6152 = vmor %vm6150, %vm6151
  %v6153 = vsel %vm6152, %v6144, %v6149
  %v6154 = vrsqrt.pop %v5667
  %v6155 = vmul.f32 %v6154, %v5667
  %v6156 = vmul.f32 %v6155, %v6154
  %v6157 = vmul.f32 0.5, %v6156
  %v6158 = vsub.f32 1.5, %v6157
  %v6159 = vmul.f32 %v6154, %v6158
  %vm6160 = vweird.f32 %v5667
  %vm6161 = vweird.f32 %v6154
  %vm6162 = vmor %vm6160, %vm6161
  %v6163 = vsel %vm6162, %v6154, %v6159
  %v6164 = vrsqrt.pop %v5668
  %v6165 = vmul.f32 %v6164, %v5668
  %v6166 = vmul.f32 %v6165, %v6164
  %v6167 = vmul.f32 0.5, %v6166
  %v6168 = vsub.f32 1.5, %v6167
  %v6169 = vmul.f32 %v6164, %v6168
  %vm6170 = vweird.f32 %v5668
  %vm6171 = vweird.f32 %v6164
  %vm6172 = vmor %vm6170, %vm6171
  %v6173 = vsel %vm6172, %v6164, %v6169
  %v6174 = vrsqrt.pop %v5669
  %v6175 = vmul.f32 %v6174, %v5669
  %v6176 = vmul.f32 %v6175, %v6174
  %v6177 = vmul.f32 0.5, %v6176
  %v6178 = vsub.f32 1.5, %v6177
  %v6179 = vmul.f32 %v6174, %v6178
  %vm6180 = vweird.f32 %v5669
  %vm6181 = vweird.f32 %v6174
  %vm6182 = vmor %vm6180, %vm6181
  %v6183 = vsel %vm6182, %v6174, %v6179
  %v6184 = vrsqrt.pop %v5670
  %v6185 = vmul.f32 %v6184, %v5670
  %v6186 = vmul.f32 %v6185, %v6184
  %v6187 = vmul.f32 0.5, %v6186
  %v6188 = vsub.f32 1.5, %v6187
  %v6189 = vmul.f32 %v6184, %v6188
  %vm6190 = vweird.f32 %v5670
  %vm6191 = vweird.f32 %v6184
  %vm6192 = vmor %vm6190, %vm6191
  %v6193 = vsel %vm6192, %v6184, %v6189
  %v6194 = vrsqrt.pop %v5671
  %v6195 = vmul.f32 %v6194, %v5671
  %v6196 = vmul.f32 %v6195, %v6194
  %v6197 = vmul.f32 0.5, %v6196
  %v6198 = vsub.f32 1.5, %v6197
  %v6199 = vmul.f32 %v6194, %v6198
  %vm6200 = vweird.f32 %v5671
  %vm6201 = vweird.f32 %v6194
  %vm6202 = vmor %vm6200, %vm6201
  %v6203 = vsel %vm6202, %v6194, %v6199
  %v6204 = vrsqrt.pop %v5672
  %v6205 = vmul.f32 %v6204, %v5672
  %v6206 = vmul.f32 %v6205, %v6204
  %v6207 = vmul.f32 0.5, %v6206
  %v6208 = vsub.f32 1.5, %v6207
  %v6209 = vmul.f32 %v6204, %v6208
  %vm6210 = vweird.f32 %v5672
  %vm6211 = vweird.f32 %v6204
  %vm6212 = vmor %vm6210, %vm6211
  %v6213 = vsel %vm6212, %v6204, %v6209
  %v6214 = vrsqrt.pop %v5673
  %v6215 = vmul.f32 %v6214, %v5673
  %v6216 = vmul.f32 %v6215, %v6214
  %v6217 = vmul.f32 0.5, %v6216
  %v6218 = vsub.f32 1.5, %v6217
  %v6219 = vmul.f32 %v6214, %v6218
  %vm6220 = vweird.f32 %v5673
  %vm6221 = vweird.f32 %v6214
  %vm6222 = vmor %vm6220, %vm6221
  %v6223 = vsel %vm6222, %v6214, %v6219
  %v6224 = vrsqrt.pop %v5674
  %v6225 = vmul.f32 %v6224, %v5674
  %v6226 = vmul.f32 %v6225, %v6224
  %v6227 = vmul.f32 0.5, %v6226
  %v6228 = vsub.f32 1.5, %v6227
  %v6229 = vmul.f32 %v6224, %v6228
  %vm6230 = vweird.f32 %v5674
  %vm6231 = vweird.f32 %v6224
  %vm6232 = vmor %vm6230, %vm6231
  %v6233 = vsel %vm6232, %v6224, %v6229
  %v6234 = vrsqrt.pop %v5675
  %v6235 = vmul.f32 %v6234, %v5675
  %v6236 = vmul.f32 %v6235, %v6234
  %v6237 = vmul.f32 0.5, %v6236
  %v6238 = vsub.f32 1.5, %v6237
  %v6239 = vmul.f32 %v6234, %v6238
  %vm6240 = vweird.f32 %v5675
  %vm6241 = vweird.f32 %v6234
  %vm6242 = vmor %vm6240, %vm6241
  %v6243 = vsel %vm6242, %v6234, %v6239
  %v6244 = vrsqrt.pop %v5676
  %v6245 = vmul.f32 %v6244, %v5676
  %v6246 = vmul.f32 %v6245, %v6244
  %v6247 = vmul.f32 0.5, %v6246
  %v6248 = vsub.f32 1.5, %v6247
  %v6249 = vmul.f32 %v6244, %v6248
  %vm6250 = vweird.f32 %v5676
  %vm6251 = vweird.f32 %v6244
  %vm6252 = vmor %vm6250, %vm6251
  %v6253 = vsel %vm6252, %v6244, %v6249
  %v6254 = vrsqrt.pop %v5677
  %v6255 = vmul.f32 %v6254, %v5677
  %v6256 = vmul.f32 %v6255, %v6254
  %v6257 = vmul.f32 0.5, %v6256
  %v6258 = vsub.f32 1.5, %v6257
  %v6259 = vmul.f32 %v6254, %v6258
  %vm6260 = vweird.f32 %v5677
  %vm6261 = vweird.f32 %v6254
  %vm6262 = vmor %vm6260, %vm6261
  %v6263 = vsel %vm6262, %v6254, %v6259
  %v6264 = vrsqrt.pop %v5678
  %v6265 = vmul.f32 %v6264, %v5678
  %v6266 = vmul.f32 %v6265, %v6264
  %v6267 = vmul.f32 0.5, %v6266
  %v6268 = vsub.f32 1.5, %v6267
  %v6269 = vmul.f32 %v6264, %v6268
  %vm6270 = vweird.f32 %v5678
  %vm6271 = vweird.f32 %v6264
  %vm6272 = vmor %vm6270, %vm6271
  %v6273 = vsel %vm6272, %v6264, %v6269
  %v6274 = vrsqrt.pop %v5679
  %v6275 = vmul.f32 %v6274, %v5679
  %v6276 = vmul.f32 %v6275, %v6274
  %v6277 = vmul.f32 0.5, %v6276
  %v6278 = vsub.f32 1.5, %v6277
  %v6279 = vmul.f32 %v6274, %v6278
  %vm6280 = vweird.f32 %v5679
  %vm6281 = vweird.f32 %v6274
  %vm6282 = vmor %vm6280, %vm6281
  %v6283 = vsel %vm6282, %v6274, %v6279
  %v6284 = vrsqrt.pop %v5680
  %v6285 = vmul.f32 %v6284, %v5680
  %v6286 = vmul.f32 %v6285, %v6284
  %v6287 = vmul.f32 0.5, %v6286
  %v6288 = vsub.f32 1.5, %v6287
  %v6289 = vmul.f32 %v6284, %v6288
  %vm6290 = vweird.f32 %v5680
  %vm6291 = vweird.f32 %v6284
  %vm6292 = vmor %vm6290, %vm6291
  %v6293 = vsel %vm6292, %v6284, %v6289
  %v6294 = vrsqrt.pop %v5681
  %v6295 = vmul.f32 %v6294, %v5681
  %v6296 = vmul.f32 %v6295, %v6294
  %v6297 = vmul.f32 0.5, %v6296
  %v6298 = vsub.f32 1.5, %v6297
  %v6299 = vmul.f32 %v6294, %v6298
  %vm6300 = vweird.f32 %v5681
  %vm6301 = vweird.f32 %v6294
  %vm6302 = vmor %vm6300, %vm6301
  %v6303 = vsel %vm6302, %v6294, %v6299
  %v6304 = vrsqrt.pop %v5682
  %v6305 = vmul.f32 %v6304, %v5682
  %v6306 = vmul.f32 %v6305, %v6304
  %v6307 = vmul.f32 0.5, %v6306
  %v6308 = vsub.f32 1.5, %v6307
  %v6309 = vmul.f32 %v6304, %v6308
  %vm6310 = vweird.f32 %v5682
  %vm6311 = vweird.f32 %v6304
  %vm6312 = vmor %vm6310, %vm6311
  %v6313 = vsel %vm6312, %v6304, %v6309
  %v6314 = vrsqrt.pop %v5683
  %v6315 = vmul.f32 %v6314, %v5683
  %v6316 = vmul.f32 %v6315, %v6314
  %v6317 = vmul.f32 0.5, %v6316
  %v6318 = vsub.f32 1.5, %v6317
  %v6319 = vmul.f32 %v6314, %v6318
  %vm6320 = vweird.f32 %v5683
  %vm6321 = vweird.f32 %v6314
  %vm6322 = vmor %vm6320, %vm6321
  %v6323 = vsel %vm6322, %v6314, %v6319
  %6388 = vrot.lane.b32.xlu0 %v5693, 4
  %v6389 = vpop.permute.xlu0 %6388
  %6390 = vrot.lane.b32.xlu0 %v5703, 4
  %v6391 = vpop.permute.xlu0 %6390
  %6392 = vrot.lane.b32.xlu0 %v5713, 4
  %v6393 = vpop.permute.xlu0 %6392
  %6394 = vrot.lane.b32.xlu0 %v5723, 4
  %v6395 = vpop.permute.xlu0 %6394
  %6396 = vrot.lane.b32.xlu0 %v5733, 4
  %v6397 = vpop.permute.xlu0 %6396
  %6398 = vrot.lane.b32.xlu0 %v5743, 4
  %v6399 = vpop.permute.xlu0 %6398
  %6400 = vrot.lane.b32.xlu0 %v5753, 4
  %v6401 = vpop.permute.xlu0 %6400
  %6402 = vrot.lane.b32.xlu0 %v5763, 4
  %v6403 = vpop.permute.xlu0 %6402
  %6404 = vrot.lane.b32.xlu0 %v5773, 4
  %v6405 = vpop.permute.xlu0 %6404
  %6406 = vrot.lane.b32.xlu0 %v5783, 4
  %v6407 = vpop.permute.xlu0 %6406
  %6408 = vrot.lane.b32.xlu0 %v5793, 4
  %v6409 = vpop.permute.xlu0 %6408
  %6410 = vrot.lane.b32.xlu0 %v5803, 4
  %v6411 = vpop.permute.xlu0 %6410
  %6412 = vrot.lane.b32.xlu0 %v5813, 4
  %v6413 = vpop.permute.xlu0 %6412
  %6414 = vrot.lane.b32.xlu0 %v5823, 4
  %v6415 = vpop.permute.xlu0 %6414
  %6416 = vrot.lane.b32.xlu0 %v5833, 4
  %v6417 = vpop.permute.xlu0 %6416
  %6418 = vrot.lane.b32.xlu0 %v5843, 4
  %v6419 = vpop.permute.xlu0 %6418
  %6420 = vrot.lane.b32.xlu0 %v5853, 4
  %v6421 = vpop.permute.xlu0 %6420
  %6422 = vrot.lane.b32.xlu0 %v5863, 4
  %v6423 = vpop.permute.xlu0 %6422
  %6424 = vrot.lane.b32.xlu0 %v5873, 4
  %v6425 = vpop.permute.xlu0 %6424
  %6426 = vrot.lane.b32.xlu0 %v5883, 4
  %v6427 = vpop.permute.xlu0 %6426
  %6428 = vrot.lane.b32.xlu0 %v5893, 4
  %v6429 = vpop.permute.xlu0 %6428
  %6430 = vrot.lane.b32.xlu0 %v5903, 4
  %v6431 = vpop.permute.xlu0 %6430
  %6432 = vrot.lane.b32.xlu0 %v5913, 4
  %v6433 = vpop.permute.xlu0 %6432
  %6434 = vrot.lane.b32.xlu0 %v5923, 4
  %v6435 = vpop.permute.xlu0 %6434
  %6436 = vrot.lane.b32.xlu0 %v5933, 4
  %v6437 = vpop.permute.xlu0 %6436
  %6438 = vrot.lane.b32.xlu0 %v5943, 4
  %v6439 = vpop.permute.xlu0 %6438
  %6440 = vrot.lane.b32.xlu0 %v5953, 4
  %v6441 = vpop.permute.xlu0 %6440
  %6442 = vrot.lane.b32.xlu0 %v5963, 4
  %v6443 = vpop.permute.xlu0 %6442
  %6444 = vrot.lane.b32.xlu0 %v5973, 4
  %v6445 = vpop.permute.xlu0 %6444
  %6446 = vrot.lane.b32.xlu0 %v5983, 4
  %v6447 = vpop.permute.xlu0 %6446
  %6448 = vrot.lane.b32.xlu0 %v5993, 4
  %v6449 = vpop.permute.xlu0 %6448
  %6450 = vrot.lane.b32.xlu0 %v6003, 4
  %v6451 = vpop.permute.xlu0 %6450
  %6452 = vrot.lane.b32.xlu0 %v6013, 4
  %v6453 = vpop.permute.xlu0 %6452
  %6454 = vrot.lane.b32.xlu0 %v6023, 4
  %v6455 = vpop.permute.xlu0 %6454
  %6456 = vrot.lane.b32.xlu0 %v6033, 4
  %v6457 = vpop.permute.xlu0 %6456
  %6458 = vrot.lane.b32.xlu0 %v6043, 4
  %v6459 = vpop.permute.xlu0 %6458
  %6460 = vrot.lane.b32.xlu0 %v6053, 4
  %v6461 = vpop.permute.xlu0 %6460
  %6462 = vrot.lane.b32.xlu0 %v6063, 4
  %v6463 = vpop.permute.xlu0 %6462
  %6464 = vrot.lane.b32.xlu0 %v6073, 4
  %v6465 = vpop.permute.xlu0 %6464
  %6466 = vrot.lane.b32.xlu0 %v6083, 4
  %v6467 = vpop.permute.xlu0 %6466
  %6468 = vrot.lane.b32.xlu0 %v6093, 4
  %v6469 = vpop.permute.xlu0 %6468
  %6470 = vrot.lane.b32.xlu0 %v6103, 4
  %v6471 = vpop.permute.xlu0 %6470
  %6472 = vrot.lane.b32.xlu0 %v6113, 4
  %v6473 = vpop.permute.xlu0 %6472
  %6474 = vrot.lane.b32.xlu0 %v6123, 4
  %v6475 = vpop.permute.xlu0 %6474
  %6476 = vrot.lane.b32.xlu0 %v6133, 4
  %v6477 = vpop.permute.xlu0 %6476
  %6478 = vrot.lane.b32.xlu0 %v6143, 4
  %v6479 = vpop.permute.xlu0 %6478
  %6480 = vrot.lane.b32.xlu0 %v6153, 4
  %v6481 = vpop.permute.xlu0 %6480
  %6482 = vrot.lane.b32.xlu0 %v6163, 4
  %v6483 = vpop.permute.xlu0 %6482
  %6484 = vrot.lane.b32.xlu0 %v6173, 4
  %v6485 = vpop.permute.xlu0 %6484
  %6486 = vrot.lane.b32.xlu0 %v6183, 4
  %v6487 = vpop.permute.xlu0 %6486
  %6488 = vrot.lane.b32.xlu0 %v6193, 4
  %v6489 = vpop.permute.xlu0 %6488
  %6490 = vrot.lane.b32.xlu0 %v6203, 4
  %v6491 = vpop.permute.xlu0 %6490
  %6492 = vrot.lane.b32.xlu0 %v6213, 4
  %v6493 = vpop.permute.xlu0 %6492
  %6494 = vrot.lane.b32.xlu0 %v6223, 4
  %v6495 = vpop.permute.xlu0 %6494
  %6496 = vrot.lane.b32.xlu0 %v6233, 4
  %v6497 = vpop.permute.xlu0 %6496
  %6498 = vrot.lane.b32.xlu0 %v6243, 4
  %v6499 = vpop.permute.xlu0 %6498
  %6500 = vrot.lane.b32.xlu0 %v6253, 4
  %v6501 = vpop.permute.xlu0 %6500
  %6502 = vrot.lane.b32.xlu0 %v6263, 4
  %v6503 = vpop.permute.xlu0 %6502
  %6504 = vrot.lane.b32.xlu0 %v6273, 4
  %v6505 = vpop.permute.xlu0 %6504
  %6506 = vrot.lane.b32.xlu0 %v6283, 4
  %v6507 = vpop.permute.xlu0 %6506
  %6508 = vrot.lane.b32.xlu0 %v6293, 4
  %v6509 = vpop.permute.xlu0 %6508
  %6510 = vrot.lane.b32.xlu0 %v6303, 4
  %v6511 = vpop.permute.xlu0 %6510
  %6512 = vrot.lane.b32.xlu0 %v6313, 4
  %v6513 = vpop.permute.xlu0 %6512
  %6514 = vrot.lane.b32.xlu0 %v6323, 4
  %v6515 = vpop.permute.xlu0 %6514
  %v6580 = vmul.f32 %v4468, %v6389
  %v6581 = vmul.f32 %v4469, %v6391
  %v6582 = vmul.f32 %v4470, %v6393
  %v6583 = vmul.f32 %v4471, %v6395
  %v6584 = vmul.f32 %v4472, %v6397
  %v6585 = vmul.f32 %v4473, %v6399
  %v6586 = vmul.f32 %v4474, %v6401
  %v6587 = vmul.f32 %v4475, %v6403
  %v6588 = vmul.f32 %v4476, %v6405
  %v6589 = vmul.f32 %v4477, %v6407
  %v6590 = vmul.f32 %v4478, %v6409
  %v6591 = vmul.f32 %v4479, %v6411
  %v6592 = vmul.f32 %v4480, %v6413
  %v6593 = vmul.f32 %v4481, %v6415
  %v6594 = vmul.f32 %v4482, %v6417
  %v6595 = vmul.f32 %v4483, %v6419
  %v6596 = vmul.f32 %v4484, %v6421
  %v6597 = vmul.f32 %v4485, %v6423
  %v6598 = vmul.f32 %v4486, %v6425
  %v6599 = vmul.f32 %v4487, %v6427
  %v6600 = vmul.f32 %v4488, %v6429
  %v6601 = vmul.f32 %v4489, %v6431
  %v6602 = vmul.f32 %v4490, %v6433
  %v6603 = vmul.f32 %v4491, %v6435
  %v6604 = vmul.f32 %v4492, %v6437
  %v6605 = vmul.f32 %v4493, %v6439
  %v6606 = vmul.f32 %v4494, %v6441
  %v6607 = vmul.f32 %v4495, %v6443
  %v6608 = vmul.f32 %v4496, %v6445
  %v6609 = vmul.f32 %v4497, %v6447
  %v6610 = vmul.f32 %v4498, %v6449
  %v6611 = vmul.f32 %v4499, %v6451
  %v6612 = vmul.f32 %v4500, %v6453
  %v6613 = vmul.f32 %v4501, %v6455
  %v6614 = vmul.f32 %v4502, %v6457
  %v6615 = vmul.f32 %v4503, %v6459
  %v6616 = vmul.f32 %v4504, %v6461
  %v6617 = vmul.f32 %v4505, %v6463
  %v6618 = vmul.f32 %v4506, %v6465
  %v6619 = vmul.f32 %v4507, %v6467
  %v6620 = vmul.f32 %v4508, %v6469
  %v6621 = vmul.f32 %v4509, %v6471
  %v6622 = vmul.f32 %v4510, %v6473
  %v6623 = vmul.f32 %v4511, %v6475
  %v6624 = vmul.f32 %v4512, %v6477
  %v6625 = vmul.f32 %v4513, %v6479
  %v6626 = vmul.f32 %v4514, %v6481
  %v6627 = vmul.f32 %v4515, %v6483
  %v6628 = vmul.f32 %v4516, %v6485
  %v6629 = vmul.f32 %v4517, %v6487
  %v6630 = vmul.f32 %v4518, %v6489
  %v6631 = vmul.f32 %v4519, %v6491
  %v6632 = vmul.f32 %v4520, %v6493
  %v6633 = vmul.f32 %v4521, %v6495
  %v6634 = vmul.f32 %v4522, %v6497
  %v6635 = vmul.f32 %v4523, %v6499
  %v6636 = vmul.f32 %v4524, %v6501
  %v6637 = vmul.f32 %v4525, %v6503
  %v6638 = vmul.f32 %v4526, %v6505
  %v6639 = vmul.f32 %v4527, %v6507
  %v6640 = vmul.f32 %v4528, %v6509
  %v6641 = vmul.f32 %v4529, %v6511
  %v6642 = vmul.f32 %v4530, %v6513
  %v6643 = vmul.f32 %v4531, %v6515
  %v6644 = vld [vmem:[%s2] sm:$0x1]
  %v6646 = vperm.slane %v6644, 0
  %6647 = vrot.lane.b32.xlu0 %v6646, 4
  %v6648 = vpop.permute.xlu0 %6647
  %v6650 = vmul.f32 %v6580, %v6648
  %v6651 = vmul.f32 %v6581, %v6648
  %v6652 = vmul.f32 %v6582, %v6648
  %v6653 = vmul.f32 %v6583, %v6648
  %v6654 = vmul.f32 %v6584, %v6648
  %v6655 = vmul.f32 %v6585, %v6648
  %v6656 = vmul.f32 %v6586, %v6648
  %v6657 = vmul.f32 %v6587, %v6648
  %v6658 = vmul.f32 %v6588, %v6648
  %v6659 = vmul.f32 %v6589, %v6648
  %v6660 = vmul.f32 %v6590, %v6648
  %v6661 = vmul.f32 %v6591, %v6648
  %v6662 = vmul.f32 %v6592, %v6648
  %v6663 = vmul.f32 %v6593, %v6648
  %v6664 = vmul.f32 %v6594, %v6648
  %v6665 = vmul.f32 %v6595, %v6648
  %v6666 = vmul.f32 %v6596, %v6648
  %v6667 = vmul.f32 %v6597, %v6648
  %v6668 = vmul.f32 %v6598, %v6648
  %v6669 = vmul.f32 %v6599, %v6648
  %v6670 = vmul.f32 %v6600, %v6648
  %v6671 = vmul.f32 %v6601, %v6648
  %v6672 = vmul.f32 %v6602, %v6648
  %v6673 = vmul.f32 %v6603, %v6648
  %v6674 = vmul.f32 %v6604, %v6648
  %v6675 = vmul.f32 %v6605, %v6648
  %v6676 = vmul.f32 %v6606, %v6648
  %v6677 = vmul.f32 %v6607, %v6648
  %v6678 = vmul.f32 %v6608, %v6648
  %v6679 = vmul.f32 %v6609, %v6648
  %v6680 = vmul.f32 %v6610, %v6648
  %v6681 = vmul.f32 %v6611, %v6648
  %v6682 = vmul.f32 %v6612, %v6648
  %v6683 = vmul.f32 %v6613, %v6648
  %v6684 = vmul.f32 %v6614, %v6648
  %v6685 = vmul.f32 %v6615, %v6648
  %v6686 = vmul.f32 %v6616, %v6648
  %v6687 = vmul.f32 %v6617, %v6648
  %v6688 = vmul.f32 %v6618, %v6648
  %v6689 = vmul.f32 %v6619, %v6648
  %v6690 = vmul.f32 %v6620, %v6648
  %v6691 = vmul.f32 %v6621, %v6648
  %v6692 = vmul.f32 %v6622, %v6648
  %v6693 = vmul.f32 %v6623, %v6648
  %v6694 = vmul.f32 %v6624, %v6648
  %v6695 = vmul.f32 %v6625, %v6648
  %v6696 = vmul.f32 %v6626, %v6648
  %v6697 = vmul.f32 %v6627, %v6648
  %v6698 = vmul.f32 %v6628, %v6648
  %v6699 = vmul.f32 %v6629, %v6648
  %v6700 = vmul.f32 %v6630, %v6648
  %v6701 = vmul.f32 %v6631, %v6648
  %v6702 = vmul.f32 %v6632, %v6648
  %v6703 = vmul.f32 %v6633, %v6648
  %v6704 = vmul.f32 %v6634, %v6648
  %v6705 = vmul.f32 %v6635, %v6648
  %v6706 = vmul.f32 %v6636, %v6648
  %v6707 = vmul.f32 %v6637, %v6648
  %v6708 = vmul.f32 %v6638, %v6648
  %v6709 = vmul.f32 %v6639, %v6648
  %v6710 = vmul.f32 %v6640, %v6648
  %v6711 = vmul.f32 %v6641, %v6648
  %v6712 = vmul.f32 %v6642, %v6648
  %v6713 = vmul.f32 %v6643, %v6648
  %v6714 = vld [vmem:[%s3] sm:$0x1]
  %v6716 = vperm.slane %v6714, 0
  %6717 = vrot.lane.b32.xlu0 %v6716, 4
  %v6718 = vpop.permute.xlu0 %6717
  %v6720 = vadd.f32 %v6650, %v6718
  %v6721 = vadd.f32 %v6651, %v6718
  %v6722 = vadd.f32 %v6652, %v6718
  %v6723 = vadd.f32 %v6653, %v6718
  %v6724 = vadd.f32 %v6654, %v6718
  %v6725 = vadd.f32 %v6655, %v6718
  %v6726 = vadd.f32 %v6656, %v6718
  %v6727 = vadd.f32 %v6657, %v6718
  %v6728 = vadd.f32 %v6658, %v6718
  %v6729 = vadd.f32 %v6659, %v6718
  %v6730 = vadd.f32 %v6660, %v6718
  %v6731 = vadd.f32 %v6661, %v6718
  %v6732 = vadd.f32 %v6662, %v6718
  %v6733 = vadd.f32 %v6663, %v6718
  %v6734 = vadd.f32 %v6664, %v6718
  %v6735 = vadd.f32 %v6665, %v6718
  %v6736 = vadd.f32 %v6666, %v6718
  %v6737 = vadd.f32 %v6667, %v6718
  %v6738 = vadd.f32 %v6668, %v6718
  %v6739 = vadd.f32 %v6669, %v6718
  %v6740 = vadd.f32 %v6670, %v6718
  %v6741 = vadd.f32 %v6671, %v6718
  %v6742 = vadd.f32 %v6672, %v6718
  %v6743 = vadd.f32 %v6673, %v6718
  %v6744 = vadd.f32 %v6674, %v6718
  %v6745 = vadd.f32 %v6675, %v6718
  %v6746 = vadd.f32 %v6676, %v6718
  %v6747 = vadd.f32 %v6677, %v6718
  %v6748 = vadd.f32 %v6678, %v6718
  %v6749 = vadd.f32 %v6679, %v6718
  %v6750 = vadd.f32 %v6680, %v6718
  %v6751 = vadd.f32 %v6681, %v6718
  %v6752 = vadd.f32 %v6682, %v6718
  %v6753 = vadd.f32 %v6683, %v6718
  %v6754 = vadd.f32 %v6684, %v6718
  %v6755 = vadd.f32 %v6685, %v6718
  %v6756 = vadd.f32 %v6686, %v6718
  %v6757 = vadd.f32 %v6687, %v6718
  %v6758 = vadd.f32 %v6688, %v6718
  %v6759 = vadd.f32 %v6689, %v6718
  %v6760 = vadd.f32 %v6690, %v6718
  %v6761 = vadd.f32 %v6691, %v6718
  %v6762 = vadd.f32 %v6692, %v6718
  %v6763 = vadd.f32 %v6693, %v6718
  %v6764 = vadd.f32 %v6694, %v6718
  %v6765 = vadd.f32 %v6695, %v6718
  %v6766 = vadd.f32 %v6696, %v6718
  %v6767 = vadd.f32 %v6697, %v6718
  %v6768 = vadd.f32 %v6698, %v6718
  %v6769 = vadd.f32 %v6699, %v6718
  %v6770 = vadd.f32 %v6700, %v6718
  %v6771 = vadd.f32 %v6701, %v6718
  %v6772 = vadd.f32 %v6702, %v6718
  %v6773 = vadd.f32 %v6703, %v6718
  %v6774 = vadd.f32 %v6704, %v6718
  %v6775 = vadd.f32 %v6705, %v6718
  %v6776 = vadd.f32 %v6706, %v6718
  %v6777 = vadd.f32 %v6707, %v6718
  %v6778 = vadd.f32 %v6708, %v6718
  %v6779 = vadd.f32 %v6709, %v6718
  %v6780 = vadd.f32 %v6710, %v6718
  %v6781 = vadd.f32 %v6711, %v6718
  %v6782 = vadd.f32 %v6712, %v6718
  %v6783 = vadd.f32 %v6713, %v6718
  %6848 = vrot.lane.b32.xlu0 %v6720, 124
  %v6849 = vpop.permute.xlu0 %6848
  %6850 = vrot.lane.b32.xlu0 %v6721, 124
  %v6851 = vpop.permute.xlu0 %6850
  %6852 = vrot.lane.b32.xlu0 %v6722, 124
  %v6853 = vpop.permute.xlu0 %6852
  %6854 = vrot.lane.b32.xlu0 %v6723, 124
  %v6855 = vpop.permute.xlu0 %6854
  %6856 = vrot.lane.b32.xlu0 %v6724, 124
  %v6857 = vpop.permute.xlu0 %6856
  %6858 = vrot.lane.b32.xlu0 %v6725, 124
  %v6859 = vpop.permute.xlu0 %6858
  %6860 = vrot.lane.b32.xlu0 %v6726, 124
  %v6861 = vpop.permute.xlu0 %6860
  %6862 = vrot.lane.b32.xlu0 %v6727, 124
  %v6863 = vpop.permute.xlu0 %6862
  %6864 = vrot.lane.b32.xlu0 %v6728, 124
  %v6865 = vpop.permute.xlu0 %6864
  %6866 = vrot.lane.b32.xlu0 %v6729, 124
  %v6867 = vpop.permute.xlu0 %6866
  %6868 = vrot.lane.b32.xlu0 %v6730, 124
  %v6869 = vpop.permute.xlu0 %6868
  %6870 = vrot.lane.b32.xlu0 %v6731, 124
  %v6871 = vpop.permute.xlu0 %6870
  %6872 = vrot.lane.b32.xlu0 %v6732, 124
  %v6873 = vpop.permute.xlu0 %6872
  %6874 = vrot.lane.b32.xlu0 %v6733, 124
  %v6875 = vpop.permute.xlu0 %6874
  %6876 = vrot.lane.b32.xlu0 %v6734, 124
  %v6877 = vpop.permute.xlu0 %6876
  %6878 = vrot.lane.b32.xlu0 %v6735, 124
  %v6879 = vpop.permute.xlu0 %6878
  %6880 = vrot.lane.b32.xlu0 %v6736, 124
  %v6881 = vpop.permute.xlu0 %6880
  %6882 = vrot.lane.b32.xlu0 %v6737, 124
  %v6883 = vpop.permute.xlu0 %6882
  %6884 = vrot.lane.b32.xlu0 %v6738, 124
  %v6885 = vpop.permute.xlu0 %6884
  %6886 = vrot.lane.b32.xlu0 %v6739, 124
  %v6887 = vpop.permute.xlu0 %6886
  %6888 = vrot.lane.b32.xlu0 %v6740, 124
  %v6889 = vpop.permute.xlu0 %6888
  %6890 = vrot.lane.b32.xlu0 %v6741, 124
  %v6891 = vpop.permute.xlu0 %6890
  %6892 = vrot.lane.b32.xlu0 %v6742, 124
  %v6893 = vpop.permute.xlu0 %6892
  %6894 = vrot.lane.b32.xlu0 %v6743, 124
  %v6895 = vpop.permute.xlu0 %6894
  %6896 = vrot.lane.b32.xlu0 %v6744, 124
  %v6897 = vpop.permute.xlu0 %6896
  %6898 = vrot.lane.b32.xlu0 %v6745, 124
  %v6899 = vpop.permute.xlu0 %6898
  %6900 = vrot.lane.b32.xlu0 %v6746, 124
  %v6901 = vpop.permute.xlu0 %6900
  %6902 = vrot.lane.b32.xlu0 %v6747, 124
  %v6903 = vpop.permute.xlu0 %6902
  %6904 = vrot.lane.b32.xlu0 %v6748, 124
  %v6905 = vpop.permute.xlu0 %6904
  %6906 = vrot.lane.b32.xlu0 %v6749, 124
  %v6907 = vpop.permute.xlu0 %6906
  %6908 = vrot.lane.b32.xlu0 %v6750, 124
  %v6909 = vpop.permute.xlu0 %6908
  %6910 = vrot.lane.b32.xlu0 %v6751, 124
  %v6911 = vpop.permute.xlu0 %6910
  %6912 = vrot.lane.b32.xlu0 %v6752, 124
  %v6913 = vpop.permute.xlu0 %6912
  %6914 = vrot.lane.b32.xlu0 %v6753, 124
  %v6915 = vpop.permute.xlu0 %6914
  %6916 = vrot.lane.b32.xlu0 %v6754, 124
  %v6917 = vpop.permute.xlu0 %6916
  %6918 = vrot.lane.b32.xlu0 %v6755, 124
  %v6919 = vpop.permute.xlu0 %6918
  %6920 = vrot.lane.b32.xlu0 %v6756, 124
  %v6921 = vpop.permute.xlu0 %6920
  %6922 = vrot.lane.b32.xlu0 %v6757, 124
  %v6923 = vpop.permute.xlu0 %6922
  %6924 = vrot.lane.b32.xlu0 %v6758, 124
  %v6925 = vpop.permute.xlu0 %6924
  %6926 = vrot.lane.b32.xlu0 %v6759, 124
  %v6927 = vpop.permute.xlu0 %6926
  %6928 = vrot.lane.b32.xlu0 %v6760, 124
  %v6929 = vpop.permute.xlu0 %6928
  %6930 = vrot.lane.b32.xlu0 %v6761, 124
  %v6931 = vpop.permute.xlu0 %6930
  %6932 = vrot.lane.b32.xlu0 %v6762, 124
  %v6933 = vpop.permute.xlu0 %6932
  %6934 = vrot.lane.b32.xlu0 %v6763, 124
  %v6935 = vpop.permute.xlu0 %6934
  %6936 = vrot.lane.b32.xlu0 %v6764, 124
  %v6937 = vpop.permute.xlu0 %6936
  %6938 = vrot.lane.b32.xlu0 %v6765, 124
  %v6939 = vpop.permute.xlu0 %6938
  %6940 = vrot.lane.b32.xlu0 %v6766, 124
  %v6941 = vpop.permute.xlu0 %6940
  %6942 = vrot.lane.b32.xlu0 %v6767, 124
  %v6943 = vpop.permute.xlu0 %6942
  %6944 = vrot.lane.b32.xlu0 %v6768, 124
  %v6945 = vpop.permute.xlu0 %6944
  %6946 = vrot.lane.b32.xlu0 %v6769, 124
  %v6947 = vpop.permute.xlu0 %6946
  %6948 = vrot.lane.b32.xlu0 %v6770, 124
  %v6949 = vpop.permute.xlu0 %6948
  %6950 = vrot.lane.b32.xlu0 %v6771, 124
  %v6951 = vpop.permute.xlu0 %6950
  %6952 = vrot.lane.b32.xlu0 %v6772, 124
  %v6953 = vpop.permute.xlu0 %6952
  %6954 = vrot.lane.b32.xlu0 %v6773, 124
  %v6955 = vpop.permute.xlu0 %6954
  %6956 = vrot.lane.b32.xlu0 %v6774, 124
  %v6957 = vpop.permute.xlu0 %6956
  %6958 = vrot.lane.b32.xlu0 %v6775, 124
  %v6959 = vpop.permute.xlu0 %6958
  %6960 = vrot.lane.b32.xlu0 %v6776, 124
  %v6961 = vpop.permute.xlu0 %6960
  %6962 = vrot.lane.b32.xlu0 %v6777, 124
  %v6963 = vpop.permute.xlu0 %6962
  %6964 = vrot.lane.b32.xlu0 %v6778, 124
  %v6965 = vpop.permute.xlu0 %6964
  %6966 = vrot.lane.b32.xlu0 %v6779, 124
  %v6967 = vpop.permute.xlu0 %6966
  %6968 = vrot.lane.b32.xlu0 %v6780, 124
  %v6969 = vpop.permute.xlu0 %6968
  %6970 = vrot.lane.b32.xlu0 %v6781, 124
  %v6971 = vpop.permute.xlu0 %6970
  %6972 = vrot.lane.b32.xlu0 %v6782, 124
  %v6973 = vpop.permute.xlu0 %6972
  %6974 = vrot.lane.b32.xlu0 %v6783, 124
  %v6975 = vpop.permute.xlu0 %6974
  %s7040 = scalar_lea.vmem %s4, 16
  %7041 = vst.msk [vmem:[%s7040] sm:$0xff] %vm82, %v6849
  %7042 = vst.msk [vmem:[%s7040 + $0x8] sm:$0xff] %vm82, %v6851
  %7043 = vst.msk [vmem:[%s7040 + $0x20] sm:$0xff] %vm82, %v6853
  %7044 = vst.msk [vmem:[%s7040 + $0x28] sm:$0xff] %vm82, %v6855
  %7045 = vst.msk [vmem:[%s7040 + $0x40] sm:$0xff] %vm82, %v6857
  %7046 = vst.msk [vmem:[%s7040 + $0x48] sm:$0xff] %vm82, %v6859
  %7047 = vst.msk [vmem:[%s7040 + $0x60] sm:$0xff] %vm82, %v6861
  %7048 = vst.msk [vmem:[%s7040 + $0x68] sm:$0xff] %vm82, %v6863
  %7049 = vst.msk [vmem:[%s7040 + $0x80] sm:$0xff] %vm82, %v6865
  %7050 = vst.msk [vmem:[%s7040 + $0x88] sm:$0xff] %vm82, %v6867
  %7051 = vst.msk [vmem:[%s7040 + $0xa0] sm:$0xff] %vm82, %v6869
  %7052 = vst.msk [vmem:[%s7040 + $0xa8] sm:$0xff] %vm82, %v6871
  %7053 = vst.msk [vmem:[%s7040 + $0xc0] sm:$0xff] %vm82, %v6873
  %7054 = vst.msk [vmem:[%s7040 + $0xc8] sm:$0xff] %vm82, %v6875
  %7055 = vst.msk [vmem:[%s7040 + $0xe0] sm:$0xff] %vm82, %v6877
  %7056 = vst.msk [vmem:[%s7040 + $0xe8] sm:$0xff] %vm82, %v6879
  %7057 = vst.msk [vmem:[%s7040 + $0x100] sm:$0xff] %vm82, %v6881
  %7058 = vst.msk [vmem:[%s7040 + $0x108] sm:$0xff] %vm82, %v6883
  %7059 = vst.msk [vmem:[%s7040 + $0x120] sm:$0xff] %vm82, %v6885
  %7060 = vst.msk [vmem:[%s7040 + $0x128] sm:$0xff] %vm82, %v6887
  %7061 = vst.msk [vmem:[%s7040 + $0x140] sm:$0xff] %vm82, %v6889
  %7062 = vst.msk [vmem:[%s7040 + $0x148] sm:$0xff] %vm82, %v6891
  %7063 = vst.msk [vmem:[%s7040 + $0x160] sm:$0xff] %vm82, %v6893
  %7064 = vst.msk [vmem:[%s7040 + $0x168] sm:$0xff] %vm82, %v6895
  %7065 = vst.msk [vmem:[%s7040 + $0x180] sm:$0xff] %vm82, %v6897
  %7066 = vst.msk [vmem:[%s7040 + $0x188] sm:$0xff] %vm82, %v6899
  %7067 = vst.msk [vmem:[%s7040 + $0x1a0] sm:$0xff] %vm82, %v6901
  %7068 = vst.msk [vmem:[%s7040 + $0x1a8] sm:$0xff] %vm82, %v6903
  %7069 = vst.msk [vmem:[%s7040 + $0x1c0] sm:$0xff] %vm82, %v6905
  %7070 = vst.msk [vmem:[%s7040 + $0x1c8] sm:$0xff] %vm82, %v6907
  %7071 = vst.msk [vmem:[%s7040 + $0x1e0] sm:$0xff] %vm82, %v6909
  %7072 = vst.msk [vmem:[%s7040 + $0x1e8] sm:$0xff] %vm82, %v6911
  %7073 = vst.msk [vmem:[%s7040 + $0x200] sm:$0xff] %vm82, %v6913
  %7074 = vst.msk [vmem:[%s7040 + $0x208] sm:$0xff] %vm82, %v6915
  %7075 = vst.msk [vmem:[%s7040 + $0x220] sm:$0xff] %vm82, %v6917
  %7076 = vst.msk [vmem:[%s7040 + $0x228] sm:$0xff] %vm82, %v6919
  %7077 = vst.msk [vmem:[%s7040 + $0x240] sm:$0xff] %vm82, %v6921
  %7078 = vst.msk [vmem:[%s7040 + $0x248] sm:$0xff] %vm82, %v6923
  %7079 = vst.msk [vmem:[%s7040 + $0x260] sm:$0xff] %vm82, %v6925
  %7080 = vst.msk [vmem:[%s7040 + $0x268] sm:$0xff] %vm82, %v6927
  %7081 = vst.msk [vmem:[%s7040 + $0x280] sm:$0xff] %vm82, %v6929
  %7082 = vst.msk [vmem:[%s7040 + $0x288] sm:$0xff] %vm82, %v6931
  %7083 = vst.msk [vmem:[%s7040 + $0x2a0] sm:$0xff] %vm82, %v6933
  %7084 = vst.msk [vmem:[%s7040 + $0x2a8] sm:$0xff] %vm82, %v6935
  %7085 = vst.msk [vmem:[%s7040 + $0x2c0] sm:$0xff] %vm82, %v6937
  %7086 = vst.msk [vmem:[%s7040 + $0x2c8] sm:$0xff] %vm82, %v6939
  %7087 = vst.msk [vmem:[%s7040 + $0x2e0] sm:$0xff] %vm82, %v6941
  %7088 = vst.msk [vmem:[%s7040 + $0x2e8] sm:$0xff] %vm82, %v6943
  %7089 = vst.msk [vmem:[%s7040 + $0x300] sm:$0xff] %vm82, %v6945
  %7090 = vst.msk [vmem:[%s7040 + $0x308] sm:$0xff] %vm82, %v6947
  %7091 = vst.msk [vmem:[%s7040 + $0x320] sm:$0xff] %vm82, %v6949
  %7092 = vst.msk [vmem:[%s7040 + $0x328] sm:$0xff] %vm82, %v6951
  %7093 = vst.msk [vmem:[%s7040 + $0x340] sm:$0xff] %vm82, %v6953
  %7094 = vst.msk [vmem:[%s7040 + $0x348] sm:$0xff] %vm82, %v6955
  %7095 = vst.msk [vmem:[%s7040 + $0x360] sm:$0xff] %vm82, %v6957
  %7096 = vst.msk [vmem:[%s7040 + $0x368] sm:$0xff] %vm82, %v6959
  %7097 = vst.msk [vmem:[%s7040 + $0x380] sm:$0xff] %vm82, %v6961
  %7098 = vst.msk [vmem:[%s7040 + $0x388] sm:$0xff] %vm82, %v6963
  %7099 = vst.msk [vmem:[%s7040 + $0x3a0] sm:$0xff] %vm82, %v6965
  %7100 = vst.msk [vmem:[%s7040 + $0x3a8] sm:$0xff] %vm82, %v6967
  %7101 = vst.msk [vmem:[%s7040 + $0x3c0] sm:$0xff] %vm82, %v6969
  %7102 = vst.msk [vmem:[%s7040 + $0x3c8] sm:$0xff] %vm82, %v6971
  %7103 = vst.msk [vmem:[%s7040 + $0x3e0] sm:$0xff] %vm82, %v6973
  %7104 = vst.msk [vmem:[%s7040 + $0x3e8] sm:$0xff] %vm82, %v6975
  // Predicated region
  $region18: #{tpu_custom_call.1} parent=0 // pred_check
    _
  $region19: #{tpu_custom_call.1} parent=0 // pred_check_branch
    %7106 = sbr.rel (0) target = $region21
  $region20: #{tpu_custom_call.1} parent=0 // pred_region
    _
  $region21: #{tpu_custom_call.1} parent=0 // pred_fallthru
    _
  // Predicated region
  $region22: #{tpu_custom_call.1} parent=0 // pred_check
    _
  $region23: #{tpu_custom_call.1} parent=0 // pred_check_branch
    %7108 = sbr.rel (0) target = $region25
  $region24: #{tpu_custom_call.1} parent=0 // pred_region
    _
  $region25: #{tpu_custom_call.1} parent=0 // pred_fallthru
    _

</llo_original>
